<compile_context>
chip_gen: v7x
topology: tpu7x:2x2x1
jax: 0.10.0
libtpu: 0.0.40
codegen_flags: <defaults>
</compile_context>

<pallas_src>
import math
from functools import partial

import jax
import jax.numpy as jnp
from jax.experimental import pallas as pl
from jax.experimental.pallas import tpu as pltpu

EXPANSION = 4  # ResNet bottleneck expansion


# ---------------------------------------------------------------------------
# Generation-aware compiler params / budgets
# ---------------------------------------------------------------------------
def _round_up(x, m):
    return ((x + m - 1) // m) * m


def _detect_vmem_limit():
    try:
        info = pltpu.get_tpu_info()
        cap = getattr(info, "vmem_capacity_bytes", None) or getattr(info, "vmem_size_bytes", None)
        if cap:
            # ~70% of physical VMEM: ~45 MiB on v7x (64 MiB), ~90 MiB on v5e/v6e (128 MiB).
            return int(min(cap * 0.70, 96 * 1024 * 1024))
    except Exception:
        pass
    return 48 * 1024 * 1024  # safe fallback on every generation


_VMEM_LIMIT = _detect_vmem_limit()
_TM_BYTES = min(_VMEM_LIMIT // 4, 14 * 1024 * 1024)    # GEMM x/out tile budget
_BAND_BYTES = min(_VMEM_LIMIT // 3, 12 * 1024 * 1024)  # conv band budget


def _compiler_params(sem):
    return pltpu.CompilerParams(dimension_semantics=sem, vmem_limit_bytes=_VMEM_LIMIT)


# ---------------------------------------------------------------------------
# GEMM kernels (BN scale folded into weights; bias / residual / ReLU fused)
# ---------------------------------------------------------------------------
def _mm_bias_kernel(x_ref, w_ref, b_ref, o_ref, *, relu):
    y = jnp.dot(x_ref[...], w_ref[...], preferred_element_type=jnp.float32) + b_ref[...]
    if relu:
        y = jnp.maximum(y, 0.0)
    o_ref[...] = y.astype(o_ref.dtype)


def _mm_bias_res_relu_kernel(x_ref, w_ref, b_ref, r_ref, o_ref):
    y = jnp.dot(x_ref[...], w_ref[...], preferred_element_type=jnp.float32)
    y = y + b_ref[...] + r_ref[...].astype(jnp.float32)
    o_ref[...] = jnp.maximum(y, 0.0).astype(o_ref.dtype)


# ---------------------------------------------------------------------------
# Banded manual-DMA helper (double-buffered overlapping row bands from HBM)
# ---------------------------------------------------------------------------
def _banded_fetch(x_hbm, band, sem, row_stride):
    """Fetch rows [t*row_stride, t*row_stride + band.shape[1]) of x_hbm[b] into the
    double-buffered VMEM scratch `band`; prefetches the next grid step's band."""
    b = pl.program_id(0)
    t = pl.program_id(1)
    nb = pl.num_programs(0)
    nt = pl.num_programs(1)
    rows = band.shape[1]

    def cp(bb, tt, s):
        return pltpu.make_async_copy(
            x_hbm.at[bb, pl.ds(tt * row_stride, rows)], band.at[s], sem.at[s])

    step = b * nt + t
    slot = step % 2

    @pl.when(step == 0)
    def _():
        cp(b, t, slot).start()          # prime the very first band

    nxt = step + 1

    @pl.when(nxt < nb * nt)
    def _():
        cp(nxt // nt, nxt % nt, 1 - slot).start()   # prefetch next band

    cp(b, t, slot).wait()
    return slot


# ---------------------------------------------------------------------------
# Direct 3x3 conv kernels (stride 1 and stride 2) and max-pool kernel
# ---------------------------------------------------------------------------
def _conv3x3_s1_kernel(x_hbm, w_ref, b_ref, o_ref, band, sem, *, th, W, C, relu):
    # Band = (th+2) padded rows x (W+2) padded cols x C.  3 MXU matmuls with K=3C
    # (the 3 column shifts concatenated along lanes); value accumulation in f32.
    slot = _banded_fetch(x_hbm, band, sem, row_stride=th)
    cur = band[slot]                                          # (th+2, W+2, C)
    acc = None
    for di in range(3):
        rows = cur[di:di + th]                                # (th, W+2, C)
        lhs = jnp.concatenate(
            [rows[:, 0:W, :], rows[:, 1:W + 1, :], rows[:, 2:W + 2, :]], axis=-1)
        lhs = lhs.reshape(th * W, 3 * C)
        d = jnp.dot(lhs, w_ref[di], preferred_element_type=jnp.float32)
        acc = d if acc is None else acc + d
    y = acc + b_ref[...]
    if relu:
        y = jnp.maximum(y, 0.0)
    o_ref[...] = y.reshape(th, W, -1).astype(o_ref.dtype)


def _conv3x3_s2_kernel(x_hbm, w_ref, b_ref, o_ref, band, sem, *, tho, Wo, C, relu):
    # Input is parity-packed: (B, Hg, 2, Wg, 2C) where row-group g holds padded rows
    # (2g, 2g+1) and the 2C lanes hold (even col, odd col).  Every tap is a plain
    # shift / lane slice -> no strided reads.
    slot = _banded_fetch(x_hbm, band, sem, row_stride=tho)
    cur = band[slot]                                          # (tho+1, 2, Wo+1, 2C)
    planes = (cur[0:tho, 0], cur[0:tho, 1], cur[1:tho + 1, 0])
    acc = None
    for di in range(3):
        R = planes[di]                                        # (tho, Wo+1, 2C)
        lhs = jnp.concatenate(
            [R[:, 0:Wo, 0:C], R[:, 0:Wo, C:2 * C], R[:, 1:Wo + 1, 0:C]], axis=-1)
        lhs = lhs.reshape(tho * Wo, 3 * C)
        d = jnp.dot(lhs, w_ref[di], preferred_element_type=jnp.float32)
        acc = d if acc is None else acc + d
    y = acc + b_ref[...]
    if relu:
        y = jnp.maximum(y, 0.0)
    o_ref[...] = y.reshape(tho, Wo, -1).astype(o_ref.dtype)


def _maxpool_s2_kernel(x_hbm, o_ref, band, sem, *, tho, Wo, C):
    slot = _banded_fetch(x_hbm, band, sem, row_stride=tho)
    cur = band[slot]                                          # (tho+1, 2, Wo+1, 2C)

    def wmax(R):
        return jnp.maximum(jnp.maximum(R[:, 0:Wo, 0:C], R[:, 0:Wo, C:2 * C]),
                           R[:, 1:Wo + 1, 0:C])

    r = jnp.maximum(jnp.maximum(wmax(cur[0:tho, 0]), wmax(cur[0:tho, 1])),
                    wmax(cur[1:tho + 1, 0]))
    o_ref[...] = r.astype(o_ref.dtype)


def _conv1x1_s2_kernel(x_ref, w_ref, b_ref, o_ref, *, C, relu):
    # x_ref: (tr, Wo, 2C) = every other source row, packed column pairs.
    tr, Wo = x_ref.shape[0], x_ref.shape[1]
    lhs = x_ref[...][:, :, 0:C].reshape(tr * Wo, C)           # even columns only
    y = jnp.dot(lhs, w_ref[...], preferred_element_type=jnp.float32) + b_ref[...]
    if relu:
        y = jnp.maximum(y, 0.0)
    o_ref[...] = y.reshape(tr, Wo, -1).astype(o_ref.dtype)


def _sine_pos_kernel(y_ref, x_ref, idt_ref, o_ref):
    d = idt_ref.shape[1]
    lane = jax.lax.broadcasted_iota(jnp.int32, (1, d), 1)
    even = (lane % 2) == 0
    vy = y_ref[...] * idt_ref[...]
    vx = x_ref[...] * idt_ref[...]
    py = jnp.where(even, jnp.sin(vy), jnp.cos(vy))
    px = jnp.where(even, jnp.sin(vx), jnp.cos(vx))
    o_ref[...] = jnp.concatenate([py, px], axis=-1)


# ---------------------------------------------------------------------------
# Tiling heuristics
# ---------------------------------------------------------------------------
def _choose_tm(M, K, tn, has_res=False):
    per_row = 4 * K + 12 * tn + (4 * tn if has_res else 0)
    tm = _TM_BYTES // max(per_row, 1)
    tm = max(128, min(int(tm), 4096))
    tm = (tm // 8) * 8
    return int(min(tm, _round_up(M, 8)))


def _choose_band_rows(H_out, W_out, C_in, N_out):
    per_row = W_out * (16 * C_in + 12 * N_out) + 512
    t = _BAND_BYTES // max(per_row, 1)
    return int(max(1, min(int(t), H_out, max(1, 8192 // max(W_out, 1)))))


# ---------------------------------------------------------------------------
# Pallas wrappers
# ---------------------------------------------------------------------------
def _matmul_bias(x2d, w2d, bias, *, relu, res2d=None):
    M, K = x2d.shape
    N = w2d.shape[1]
    tn = N if N <= 512 else 512
    tm = _choose_tm(M, K, tn, has_res=res2d is not None)
    grid = (pl.cdiv(M, tm), pl.cdiv(N, tn))
    in_specs = [
        pl.BlockSpec((tm, K), lambda i, j: (i, 0)),
        pl.BlockSpec((K, tn), lambda i, j: (0, j)),
        pl.BlockSpec((1, tn), lambda i, j: (0, j)),
    ]
    args = [x2d.astype(jnp.bfloat16), w2d, bias]
    if res2d is None:
        kernel = partial(_mm_bias_kernel, relu=relu)
    else:
        in_specs.append(pl.BlockSpec((tm, tn), lambda i, j: (i, j)))
        args.append(res2d.astype(jnp.bfloat16))
        kernel = _mm_bias_res_relu_kernel
    return pl.pallas_call(
        kernel,
        out_shape=jax.ShapeDtypeStruct((M, N), jnp.bfloat16),
        grid=grid,
        in_specs=in_specs,
        out_specs=pl.BlockSpec((tm, tn), lambda i, j: (i, j)),
        compiler_params=_compiler_params(("parallel", "parallel")),
    )(*args)


@partial(jax.jit, static_argnames=("relu",))
def conv1x1_bn_act(x, w2d, bias, *, relu=True):
    B, H, W, C = x.shape
    N = w2d.shape[1]
    y = _matmul_bias(x.reshape(B * H * W, C), w2d, bias, relu=relu)
    return y.reshape(B, H, W, N)


@jax.jit
def conv1x1_bn_add_relu(x, w2d, bias, res):
    B, H, W, C = x.shape
    N = w2d.shape[1]
    y = _matmul_bias(x.reshape(B * H * W, C), w2d, bias, relu=True,
                     res2d=res.reshape(B * H * W, N))
    return y.reshape(B, H, W, N)


@jax.jit
def conv1x1_s2_bn(x, w2d, bias):
    """1x1 / stride-2 conv + frozen BN (no ReLU).  The stride is realised by block
    indexing over row pairs and a contiguous lane slice (no strided HBM copy)."""
    B, H, W, C = x.shape
    N = w2d.shape[1]
    Ho, Wo = (H + 1) // 2, (W + 1) // 2
    xp = jnp.pad(x, ((0, 0), (0, 2 * Ho - H), (0, 2 * Wo - W), (0, 0)))
    x5 = xp.reshape(B, Ho, 2, Wo, 2 * C)          # free row/col parity repack
    per_row = Wo * (8 * C + 12 * N)
    tr = int(max(1, min(Ho, _TM_BYTES // max(per_row, 1))))
    grid = (B, pl.cdiv(Ho, tr))
    return pl.pallas_call(
        partial(_conv1x1_s2_kernel, C=C, relu=False),
        out_shape=jax.ShapeDtypeStruct((B, Ho, Wo, N), jnp.bfloat16),
        grid=grid,
        in_specs=[
            pl.BlockSpec((None, tr, None, Wo, 2 * C), lambda b, i: (b, i, 0, 0, 0)),
            pl.BlockSpec((C, N), lambda b, i: (0, 0)),
            pl.BlockSpec((1, N), lambda b, i: (0, 0)),
        ],
        out_specs=pl.BlockSpec((None, tr, Wo, N), lambda b, i: (b, i, 0, 0)),
        compiler_params=_compiler_params(("parallel", "parallel")),
    )(x5, w2d, bias)


@partial(jax.jit, static_argnames=("relu",))
def conv3x3_s1_bn_act(x, w3, bias, *, relu=True):
    """Direct 3x3 / stride-1 / pad-1 conv + frozen BN (+ ReLU).  Overlapping row
    bands are DMA'd from the padded activation; no im2col / halo copy in HBM."""
    B, H, W, C = x.shape
    N = w3.shape[-1]
    th = _choose_band_rows(H, W, C, N)
    n_t = pl.cdiv(H, th)
    Hp = n_t * th + 2
    xp = jnp.pad(x, ((0, 0), (1, Hp - 1 - H), (1, 1), (0, 0)))
    return pl.pallas_call(
        partial(_conv3x3_s1_kernel, th=th, W=W, C=C, relu=relu),
        out_shape=jax.ShapeDtypeStruct((B, H, W, N), jnp.bfloat16),
        grid=(B, n_t),
        in_specs=[
            pl.BlockSpec(memory_space=pl.ANY),
            pl.BlockSpec((3, 3 * C, N), lambda b, t: (0, 0, 0)),
            pl.BlockSpec((1, N), lambda b, t: (0, 0)),
        ],
        out_specs=pl.BlockSpec((None, th, W, N), lambda b, t: (b, t, 0, 0)),
        scratch_shapes=[pltpu.VMEM((2, th + 2, W + 2, C), jnp.bfloat16),
                        pltpu.SemaphoreType.DMA((2,))],
        compiler_params=_compiler_params(("arbitrary", "arbitrary")),
    )(xp, w3, bias)


def _parity_pack(x, n_t, t_rows, Wo, pad_value):
    """Pad (+1 front in H/W) and repack (B,H,W,C)->(B,Hg,2,Wg,2C) (free reshape)."""
    B, H, W, C = x.shape
    Hg = n_t * t_rows + 1
    Wg = Wo + 1
    xp = jnp.pad(x, ((0, 0), (1, 2 * Hg - 1 - H), (1, 2 * Wg - 1 - W), (0, 0)),
                 constant_values=pad_value)
    return xp.reshape(B, Hg, 2, Wg, 2 * C)


@partial(jax.jit, static_argnames=("relu",))
def conv3x3_s2_bn_act(x, w3, bias, *, relu=True):
    """Direct 3x3 / stride-2 / pad-1 conv + frozen BN (+ ReLU) via parity-packed
    row bands (no im2col slab in HBM)."""
    B, H, W, C = x.shape
    N = w3.shape[-1]
    Ho, Wo = (H - 1) // 2 + 1, (W - 1) // 2 + 1
    tho = _choose_band_rows(Ho, Wo, 2 * C, N)
    n_t = pl.cdiv(Ho, tho)
    x6 = _parity_pack(x, n_t, tho, Wo, 0.0)
    return pl.pallas_call(
        partial(_conv3x3_s2_kernel, tho=tho, Wo=Wo, C=C, relu=relu),
        out_shape=jax.ShapeDtypeStruct((B, Ho, Wo, N), jnp.bfloat16),
        grid=(B, n_t),
        in_specs=[
            pl.BlockSpec(memory_space=pl.ANY),
            pl.BlockSpec((3, 3 * C, N), lambda b, t: (0, 0, 0)),
            pl.BlockSpec((1, N), lambda b, t: (0, 0)),
        ],
        out_specs=pl.BlockSpec((None, tho, Wo, N), lambda b, t: (b, t, 0, 0)),
        scratch_shapes=[pltpu.VMEM((2, tho + 1, 2, Wo + 1, 2 * C), jnp.bfloat16),
                        pltpu.SemaphoreType.DMA((2,))],
        compiler_params=_compiler_params(("arbitrary", "arbitrary")),
    )(x6, w3, bias)


@jax.jit
def max_pool_3x3_s2_p1(x):
    """3x3 / stride-2 / pad-1 max pool, banded; each element is read once from HBM."""
    B, H, W, C = x.shape
    Ho, Wo = (H - 1) // 2 + 1, (W - 1) // 2 + 1
    tho = _choose_band_rows(Ho, Wo, 2 * C, C)
    n_t = pl.cdiv(Ho, tho)
    neg = float(jnp.finfo(jnp.bfloat16).min)
    x6 = _parity_pack(x, n_t, tho, Wo, neg)
    return pl.pallas_call(
        partial(_maxpool_s2_kernel, tho=tho, Wo=Wo, C=C),
        out_shape=jax.ShapeDtypeStruct((B, Ho, Wo, C), x.dtype),
        grid=(B, n_t),
        in_specs=[pl.BlockSpec(memory_space=pl.ANY)],
        out_specs=pl.BlockSpec((None, tho, Wo, C), lambda b, t: (b, t, 0, 0)),
        scratch_shapes=[pltpu.VMEM((2, tho + 1, 2, Wo + 1, 2 * C), jnp.bfloat16),
                        pltpu.SemaphoreType.DMA((2,))],
        compiler_params=_compiler_params(("arbitrary", "arbitrary")),
    )(x6)


def _im2col(x, kh, kw, stride, pad):
    if pad > 0:
        x = jnp.pad(x, ((0, 0), (pad, pad), (pad, pad), (0, 0)))
    B, H, W, C = x.shape
    Ho = (H - kh) // stride + 1
    Wo = (W - kw) // stride + 1
    cols = []
    for di in range(kh):
        for dj in range(kw):
            cols.append(x[:, di:di + stride * (Ho - 1) + 1:stride,
                          dj:dj + stride * (Wo - 1) + 1:stride, :])
    pat = jnp.concatenate(cols, axis=-1)
    return pat.reshape(B * Ho * Wo, kh * kw * C), (B, Ho, Wo)


@jax.jit
def stem_conv7x7_s2_bn_relu(x, w_flat, bias):
    # TODO(synk): the 7x7/stride-2 stem still builds an im2col slab in HBM (Cin=3,
    # cheap); every other conv in the network is a direct Pallas kernel.
    x2d, (B, Ho, Wo) = _im2col(x, 7, 7, 2, 3)
    y = _matmul_bias(x2d, w_flat, bias, relu=True)
    return y.reshape(B, Ho, Wo, w_flat.shape[1])


@jax.jit
def sine_position_embedding(mask, inv_dim_t):
    """DetrSinePositionEmbedding (normalize=True, temperature=1e4, 128 feats/axis)."""
    B, h, w = mask.shape
    m = mask.astype(jnp.float32)
    y_embed = jnp.cumsum(m, axis=1)
    x_embed = jnp.cumsum(m, axis=2)
    scale = 2.0 * math.pi
    y_embed = y_embed / (y_embed[:, -1:, :] + 1e-6) * scale
    x_embed = x_embed / (x_embed[:, :, -1:] + 1e-6) * scale
    M = B * h * w
    D = inv_dim_t.shape[1]
    tm = min(_round_up(M, 8), 2048)
    out = pl.pallas_call(
        _sine_pos_kernel,
        out_shape=jax.ShapeDtypeStruct((M, 2 * D), jnp.float32),
        grid=(pl.cdiv(M, tm),),
        in_specs=[
            pl.BlockSpec((tm, 1), lambda i: (i, 0)),
            pl.BlockSpec((tm, 1), lambda i: (i, 0)),
            pl.BlockSpec((1, D), lambda i: (0, 0)),
        ],
        out_specs=pl.BlockSpec((tm, 2 * D), lambda i: (i, 0)),
        compiler_params=_compiler_params(("parallel",)),
    )(y_embed.reshape(M, 1), x_embed.reshape(M, 1), inv_dim_t)
    pos = out.reshape(B, h, w, 2 * D)
    return jnp.transpose(pos, (0, 3, 1, 2))  # NCHW like PyTorch


# ---------------------------------------------------------------------------
# Deterministic parameter initialization (synthetic, not a checkpoint)
# ---------------------------------------------------------------------------
def _init_frozen_bn(key, c):
    # DetrFrozenBatchNorm2d: scale = w * rsqrt(var + 1e-5); shift = b - mean * scale
    k1, k2, k3, k4 = jax.random.split(key, 4)
    weight = 1.0 + 0.1 * jax.random.normal(k1, (c,), jnp.float32)
    bias = 0.1 * jax.random.normal(k2, (c,), jnp.float32)
    mean = 0.1 * jax.random.normal(k3, (c,), jnp.float32)
    var = 1.0 + 0.1 * jax.random.uniform(k4, (c,), jnp.float32)
    scale = weight * jax.lax.rsqrt(var + 1e-5)
    shift = bias - mean * scale
    return scale, shift.reshape(1, -1).astype(jnp.float32)


def _conv1x1_folded(key, cin, cout, scale):
    w = jax.random.normal(key, (cin, cout), jnp.float32) / math.sqrt(cin)
    return (w * scale[None, :]).astype(jnp.bfloat16)


def _conv3x3_folded(key, cin, cout, scale):
    w = jax.random.normal(key, (3, 3, cin, cout), jnp.float32) / math.sqrt(9 * cin)
    w = w * scale                       # fold frozen-BN scale into the weights
    return w.reshape(3, 3 * cin, cout).astype(jnp.bfloat16)


def _conv7x7_folded(key, cin, cout, scale):
    w = jax.random.normal(key, (7, 7, cin, cout), jnp.float32) / math.sqrt(49 * cin)
    w = w * scale
    return w.reshape(49 * cin, cout).astype(jnp.bfloat16)


def make_bottleneck_params(key, cin, width, stride):
    ks = jax.random.split(key, 8)
    s1, b1 = _init_frozen_bn(ks[1], width)
    s2, b2 = _init_frozen_bn(ks[3], width)
    s3, b3 = _init_frozen_bn(ks[5], width * EXPANSION)
    p = {
        "conv1_w": _conv1x1_folded(ks[0], cin, width, s1), "b1": b1,
        "conv2_w": _conv3x3_folded(ks[2], width, width, s2), "b2": b2,
        "conv3_w": _conv1x1_folded(ks[4], width, width * EXPANSION, s3), "b3": b3,
        "stride": stride,
    }
    if stride != 1 or cin != width * EXPANSION:
        sd, bd = _init_frozen_bn(ks[7], width * EXPANSION)
        p["down_w"] = _conv1x1_folded(ks[6], cin, width * EXPANSION, sd)
        p["down_b"] = bd
    return p


def init_detr_conv_encoder(key, in_chans=3, stem_width=64,
                           stage_widths=(64, 128, 256, 512), depths=(3, 4, 6, 3)):
    """ResNet-50 (bottleneck, depths 3/4/6/3) with frozen BN everywhere."""
    keys = jax.random.split(key, 2 + len(depths))
    s1, b1 = _init_frozen_bn(keys[1], stem_width)
    params = {"stem_w": _conv7x7_folded(keys[0], in_chans, stem_width, s1),
              "stem_b": b1, "stages": []}
    cin = stem_width
    for si, (w_, d) in enumerate(zip(stage_widths, depths)):
        skeys = jax.random.split(keys[2 + si], d)
        blocks = []
        for bi in range(d):
            stride = 1 if (si == 0 or bi > 0) else 2
            blocks.append(make_bottleneck_params(skeys[bi], cin, w_, stride))
            cin = w_ * EXPANSION
        params["stages"].append(blocks)
    return params


def init_detr_conv_model(key):
    # TODO(synk): pretrained timm ResNet-50 weights cannot be loaded here; synthetic init.
    kb, _ = jax.random.split(key)
    i = jnp.arange(128, dtype=jnp.float32)
    dim_t = jnp.power(10000.0, 2.0 * jnp.floor(i / 2.0) / 128.0)
    return {"backbone": init_detr_conv_encoder(kb),
            "pos_inv_dim_t": (1.0 / dim_t).reshape(1, 128)}


# ---------------------------------------------------------------------------
# Forward pass
# ---------------------------------------------------------------------------
def bottleneck_forward(x, p):
    stride = p["stride"]
    if "down_w" in p:
        if stride == 1:
            shortcut = conv1x1_bn_act(x, p["down_w"], p["down_b"], relu=False)
        else:
            shortcut = conv1x1_s2_bn(x, p["down_w"], p["down_b"])
    else:
        shortcut = x
    y = conv1x1_bn_act(x, p["conv1_w"], p["b1"], relu=True)
    if stride == 1:
        y = conv3x3_s1_bn_act(y, p["conv2_w"], p["b2"], relu=True)
    else:
        y = conv3x3_s2_bn_act(y, p["conv2_w"], p["b2"], relu=True)
    return conv1x1_bn_add_relu(y, p["conv3_w"], p["b3"], shortcut)


def resize_mask_nearest(mask, out_h, out_w):
    # nn.functional.interpolate(mode='nearest'): src = floor(dst * in / out)
    B, H, W = mask.shape
    rows = (jnp.arange(out_h) * H) // out_h
    cols = (jnp.arange(out_w) * W) // out_w
    return mask[:, rows][:, :, cols]


def detr_conv_encoder_forward(params, pixel_values, pixel_mask):
    """pixel_values: (B,3,H,W) f32 NCHW; pixel_mask: (B,H,W) bool.
    Returns 4 (feature_map NCHW f32, mask bool) tuples at strides 4/8/16/32."""
    x = jnp.transpose(pixel_values, (0, 2, 3, 1)).astype(jnp.bfloat16)  # NHWC bf16
    x = stem_conv7x7_s2_bn_relu(x, params["stem_w"], params["stem_b"])
    x = max_pool_3x3_s2_p1(x)
    features = []
    for stage in params["stages"]:
        for blk in stage:
            x = bottleneck_forward(x, blk)
        features.append(x)
    out = []
    for f in features:
        mask = resize_mask_nearest(pixel_mask, f.shape[1], f.shape[2])
        out.append((jnp.transpose(f, (0, 3, 1, 2)).astype(jnp.float32), mask))
    return out


def detr_conv_model_forward(params, pixel_values, pixel_mask):
    """Mirrors DetrConvModel.forward: returns (out, pos)."""
    out = detr_conv_encoder_forward(params["backbone"], pixel_values, pixel_mask)
    pos = [sine_position_embedding(mask, params["pos_inv_dim_t"]).astype(fm.dtype)
           for fm, mask in out]
    return out, pos


# ---------------------------------------------------------------------------
if __name__ == "__main__":
    key = jax.random.PRNGKey(0)
    pkey, xkey = jax.random.split(key)

    params = init_detr_conv_model(pkey)

    B, H, W = 2, 64, 64  # small spatial size; channel structure is full ResNet-50
    pixel_values = jax.random.normal(xkey, (B, 3, H, W), jnp.float32)
    col = jnp.arange(W)[None, None, :]
    valid_w = jnp.array([W, W // 2])[:, None, None]
    pixel_mask = jnp.broadcast_to(col < valid_w, (B, H, W))

    out, pos = detr_conv_model_forward(params, pixel_values, pixel_mask)

    assert len(out) == 4 and len(pos) == 4
    expected = [(256, 16), (512, 8), (1024, 4), (2048, 2)]
    for (fm, m), pe, (c, s) in zip(out, pos, expected):
        fm = jax.block_until_ready(fm)
        m = jax.block_until_ready(m)
        pe = jax.block_until_ready(pe)
        assert fm.shape == (B, c, s, s), fm.shape
        assert m.shape == (B, s, s), m.shape
        assert m.dtype == jnp.bool_, m.dtype
        assert pe.shape == (B, 256, s, s), pe.shape
        assert bool(jnp.isfinite(fm).all())
        assert bool(jnp.isfinite(pe).all())

    print("KERNEL_OK")
</pallas_src>

<mosaic_0001>
module attributes {stable_mosaic.version = 11 : i64} {
  func.func @_mm_bias_kernel(%arg0: i32, %arg1: i32, %arg2: memref<2048x147xbf16, #tpu.memory_space<vmem>>, %arg3: memref<147x64xbf16, #tpu.memory_space<vmem>>, %arg4: memref<1x64xf32, #tpu.memory_space<vmem>>, %arg5: memref<2048x64xbf16, #tpu.memory_space<vmem>>) attributes {dimension_semantics = [#tpu.dimension_semantics<parallel>, #tpu.dimension_semantics<parallel>], iteration_bounds = array<i64: 1, 1>, scalar_prefetch = 0 : i64, scratch_operands = 0 : i64, tpu.core_type = #tpu.core_type<tc>, window_params = [{transform_indices = @transform_0, window_bounds = array<i64: 2048, 147>}, {transform_indices = @transform_1, window_bounds = array<i64: 147, 64>}, {transform_indices = @transform_2, window_bounds = array<i64: 1, 64>}, {transform_indices = @transform_3, window_bounds = array<i64: 2048, 64>}]} {
    %c0 = arith.constant 0 : index
    %c0_0 = arith.constant 0 : index
    %0 = vector.load %arg2[%c0, %c0_0] : memref<2048x147xbf16, #tpu.memory_space<vmem>>, vector<2048x147xbf16>
    %c0_1 = arith.constant 0 : index
    %c0_2 = arith.constant 0 : index
    %1 = vector.load %arg3[%c0_1, %c0_2] : memref<147x64xbf16, #tpu.memory_space<vmem>>, vector<147x64xbf16>
    %cst = arith.constant dense<0.000000e+00> : vector<2048x64xf32>
    %2 = tpu.matmul %0, %1, %cst {dimension_numbers = #tpu.dot_dimension_numbers<[1], [0], [0], [1], [0, 0, 1, 1], [], []>} : vector<2048x147xbf16>, vector<147x64xbf16>, vector<2048x64xf32> -> vector<2048x64xf32>
    %c0_3 = arith.constant 0 : index
    %c0_4 = arith.constant 0 : index
    %3 = vector.load %arg4[%c0_3, %c0_4] : memref<1x64xf32, #tpu.memory_space<vmem>>, vector<1x64xf32>
    %4 = vector.broadcast %3 : vector<1x64xf32> to vector<2048x64xf32>
    %5 = arith.addf %2, %4 : vector<2048x64xf32>
    %cst_5 = arith.constant 0.000000e+00 : f32
    %6 = vector.broadcast %cst_5 : f32 to vector<2048x64xf32>
    %7 = arith.maximumf %5, %6 : vector<2048x64xf32>
    %8 = arith.truncf %7 : vector<2048x64xf32> to vector<2048x64xbf16>
    %c0_6 = arith.constant 0 : index
    %c0_7 = arith.constant 0 : index
    %9 = vector.load %arg5[%c0_6, %c0_7] : memref<2048x64xbf16, #tpu.memory_space<vmem>>, vector<2048x64xbf16>
    tpu.vector_store %arg5[%c0_6, %c0_7], %8 {strides = array<i32>} : memref<2048x64xbf16, #tpu.memory_space<vmem>>, vector<2048x64xbf16>,
    return
  }
  func.func @transform_0(%arg0: i32, %arg1: i32) -> (i32, i32) {
    %c0_i32 = arith.constant 0 : i32
    %c0_i32_0 = arith.constant 0 : i32
    return %arg0, %c0_i32 : i32, i32
  }
  func.func @transform_1(%arg0: i32, %arg1: i32) -> (i32, i32) {
    %c0_i32 = arith.constant 0 : i32
    %c0_i32_0 = arith.constant 0 : i32
    return %c0_i32, %arg1 : i32, i32
  }
  func.func @transform_2(%arg0: i32, %arg1: i32) -> (i32, i32) {
    %c0_i32 = arith.constant 0 : i32
    %c0_i32_0 = arith.constant 0 : i32
    return %c0_i32, %arg1 : i32, i32
  }
  func.func @transform_3(%arg0: i32, %arg1: i32) -> (i32, i32) {
    %c0_i32 = arith.constant 0 : i32
    return %arg0, %arg1 : i32, i32
  }
}

</mosaic_0001>

<llo_original>
// kernel: stem_conv7x7_s2_bn_relu.1
$region0: #{stem_conv7x7_s2_bn_relu.1}
  #allocation0 [shape = 'u32[]', space=smem, size = 0x4, offset = 0x4, fixed_abs, tag = 'smem constant byte address 0x4 - core index']
  #allocation1 [shape = 'u32[144,128]{1,0:T(1,128)}', space=vmem, size = 0x12000, scoped, tag = 'internal scratch']
  %s0 = inlined_call_operand.vmem [shape: bf16[2048,147], index: 0, kind: input, shape index: {}]
  %s1 = inlined_call_operand.vmem [shape: bf16[147,64], index: 1, kind: input, shape index: {}]
  %s2 = inlined_call_operand.vmem [shape: f32[1,64], index: 2, kind: input, shape index: {}]
  %s3 = inlined_call_operand.hbm [shape: bf16[2048,64], index: 3, kind: output, shape index: {}]
  %s4 = sld [smem:[#allocation0]]
  $region22: #{stem_conv7x7_s2_bn_relu.1} parent=0
    _
  %s6 = ssub.s32 1, %s4
  %s7 = scalar_select 0, %s6, %s4
  $region1: #{stem_conv7x7_s2_bn_relu.1} parent=0
    #allocation2 [shape = 'u8[524288]{0}', space=vmem, size = 0x80000, scoped, tag = 'output window, operand 0, single buffered']
    #allocation3 [shape = 's32[1]{0}', space=sflag, size = 0x4, scoped, tag = 'scoped memory for stem_conv7x7_s2_bn_relu.1']
    %8 = vsyncpa [#allocation3], 0
    // Predicated region
    $region2: #{stem_conv7x7_s2_bn_relu.1} parent=1 // pred_check
      _
    $region3: #{stem_conv7x7_s2_bn_relu.1} parent=1 // pred_check_branch
      %10 = sbr.rel (0) target = $region5
    $region4: #{stem_conv7x7_s2_bn_relu.1} parent=1 // pred_region
      _
    $region5: #{stem_conv7x7_s2_bn_relu.1} parent=1 // pred_fallthru
      _
    // Predicated region
    $region6: #{stem_conv7x7_s2_bn_relu.1} parent=1 // pred_check
      _
    $region7: #{stem_conv7x7_s2_bn_relu.1} parent=1 // pred_check_branch
      %12 = sbr.rel (0) target = $region9
    $region8: #{stem_conv7x7_s2_bn_relu.1} parent=1 // pred_region
      _
    $region9: #{stem_conv7x7_s2_bn_relu.1} parent=1 // pred_fallthru
      _
    // Predicated region
    $region10: #{stem_conv7x7_s2_bn_relu.1} parent=1 // pred_check
      _
    $region11: #{stem_conv7x7_s2_bn_relu.1} parent=1 // pred_check_branch
      %14 = sbr.rel (0) target = $region13
    $region12: #{stem_conv7x7_s2_bn_relu.1} parent=1 // pred_region
      _
    $region13: #{stem_conv7x7_s2_bn_relu.1} parent=1 // pred_fallthru
      _
    %v16 = vld [vmem:[%s0] sm:$0xff]
    %v17 = vld [vmem:[%s0 + $0x8] sm:$0xff]
    %v18 = vld [vmem:[%s0 + $0x10] sm:$0xff]
    %v19 = vld [vmem:[%s0 + $0x18] sm:$0xff]
    %v20 = vld [vmem:[%s0 + $0x20] sm:$0xff]
    %v21 = vld [vmem:[%s0 + $0x28] sm:$0xff]
    %v22 = vld [vmem:[%s0 + $0x30] sm:$0xff]
    %v23 = vld [vmem:[%s0 + $0x38] sm:$0xff]
    %v24 = vld [vmem:[%s0 + $0x40] sm:$0xff]
    %v25 = vld [vmem:[%s0 + $0x48] sm:$0xff]
    %v26 = vld [vmem:[%s0 + $0x50] sm:$0xff]
    %v27 = vld [vmem:[%s0 + $0x58] sm:$0xff]
    %v28 = vld [vmem:[%s0 + $0x60] sm:$0xff]
    %v29 = vld [vmem:[%s0 + $0x68] sm:$0xff]
    %v30 = vld [vmem:[%s0 + $0x70] sm:$0xff]
    %v31 = vld [vmem:[%s0 + $0x78] sm:$0xff]
    %v32 = vld [vmem:[%s0 + $0x80] sm:$0xff]
    %v33 = vld [vmem:[%s0 + $0x88] sm:$0xff]
    %v34 = vld [vmem:[%s0 + $0x90] sm:$0xff]
    %v35 = vld [vmem:[%s0 + $0x98] sm:$0xff]
    %v36 = vld [vmem:[%s0 + $0xa0] sm:$0xff]
    %v37 = vld [vmem:[%s0 + $0xa8] sm:$0xff]
    %v38 = vld [vmem:[%s0 + $0xb0] sm:$0xff]
    %v39 = vld [vmem:[%s0 + $0xb8] sm:$0xff]
    %v40 = vld [vmem:[%s0 + $0xc0] sm:$0xff]
    %v41 = vld [vmem:[%s0 + $0xc8] sm:$0xff]
    %v42 = vld [vmem:[%s0 + $0xd0] sm:$0xff]
    %v43 = vld [vmem:[%s0 + $0xd8] sm:$0xff]
    %v44 = vld [vmem:[%s0 + $0xe0] sm:$0xff]
    %v45 = vld [vmem:[%s0 + $0xe8] sm:$0xff]
    %v46 = vld [vmem:[%s0 + $0xf0] sm:$0xff]
    %v47 = vld [vmem:[%s0 + $0xf8] sm:$0xff]
    %v48 = vld [vmem:[%s0 + $0x100] sm:$0xff]
    %v49 = vld [vmem:[%s0 + $0x108] sm:$0xff]
    %v50 = vld [vmem:[%s0 + $0x110] sm:$0xff]
    %v51 = vld [vmem:[%s0 + $0x118] sm:$0xff]
    %v52 = vld [vmem:[%s0 + $0x120] sm:$0xff]
    %v53 = vld [vmem:[%s0 + $0x128] sm:$0xff]
    %v54 = vld [vmem:[%s0 + $0x130] sm:$0xff]
    %v55 = vld [vmem:[%s0 + $0x138] sm:$0xff]
    %v56 = vld [vmem:[%s0 + $0x140] sm:$0xff]
    %v57 = vld [vmem:[%s0 + $0x148] sm:$0xff]
    %v58 = vld [vmem:[%s0 + $0x150] sm:$0xff]
    %v59 = vld [vmem:[%s0 + $0x158] sm:$0xff]
    %v60 = vld [vmem:[%s0 + $0x160] sm:$0xff]
    %v61 = vld [vmem:[%s0 + $0x168] sm:$0xff]
    %v62 = vld [vmem:[%s0 + $0x170] sm:$0xff]
    %v63 = vld [vmem:[%s0 + $0x178] sm:$0xff]
    %v64 = vld [vmem:[%s0 + $0x180] sm:$0xff]
    %v65 = vld [vmem:[%s0 + $0x188] sm:$0xff]
    %v66 = vld [vmem:[%s0 + $0x190] sm:$0xff]
    %v67 = vld [vmem:[%s0 + $0x198] sm:$0xff]
    %v68 = vld [vmem:[%s0 + $0x1a0] sm:$0xff]
    %v69 = vld [vmem:[%s0 + $0x1a8] sm:$0xff]
    %v70 = vld [vmem:[%s0 + $0x1b0] sm:$0xff]
    %v71 = vld [vmem:[%s0 + $0x1b8] sm:$0xff]
    %v72 = vld [vmem:[%s0 + $0x1c0] sm:$0xff]
    %v73 = vld [vmem:[%s0 + $0x1c8] sm:$0xff]
    %v74 = vld [vmem:[%s0 + $0x1d0] sm:$0xff]
    %v75 = vld [vmem:[%s0 + $0x1d8] sm:$0xff]
    %v76 = vld [vmem:[%s0 + $0x1e0] sm:$0xff]
    %v77 = vld [vmem:[%s0 + $0x1e8] sm:$0xff]
    %v78 = vld [vmem:[%s0 + $0x1f0] sm:$0xff]
    %v79 = vld [vmem:[%s0 + $0x1f8] sm:$0xff]
    %v80 = vld [vmem:[%s0 + $0x200] sm:$0xff]
    %v81 = vld [vmem:[%s0 + $0x208] sm:$0xff]
    %v82 = vld [vmem:[%s0 + $0x210] sm:$0xff]
    %v83 = vld [vmem:[%s0 + $0x218] sm:$0xff]
    %v84 = vld [vmem:[%s0 + $0x220] sm:$0xff]
    %v85 = vld [vmem:[%s0 + $0x228] sm:$0xff]
    %v86 = vld [vmem:[%s0 + $0x230] sm:$0xff]
    %v87 = vld [vmem:[%s0 + $0x238] sm:$0xff]
    %v88 = vld [vmem:[%s0 + $0x240] sm:$0xff]
    %v89 = vld [vmem:[%s0 + $0x248] sm:$0xff]
    %v90 = vld [vmem:[%s0 + $0x250] sm:$0xff]
    %v91 = vld [vmem:[%s0 + $0x258] sm:$0xff]
    %v92 = vld [vmem:[%s0 + $0x260] sm:$0xff]
    %v93 = vld [vmem:[%s0 + $0x268] sm:$0xff]
    %v94 = vld [vmem:[%s0 + $0x270] sm:$0xff]
    %v95 = vld [vmem:[%s0 + $0x278] sm:$0xff]
    %v96 = vld [vmem:[%s0 + $0x280] sm:$0xff]
    %v97 = vld [vmem:[%s0 + $0x288] sm:$0xff]
    %v98 = vld [vmem:[%s0 + $0x290] sm:$0xff]
    %v99 = vld [vmem:[%s0 + $0x298] sm:$0xff]
    %v100 = vld [vmem:[%s0 + $0x2a0] sm:$0xff]
    %v101 = vld [vmem:[%s0 + $0x2a8] sm:$0xff]
    %v102 = vld [vmem:[%s0 + $0x2b0] sm:$0xff]
    %v103 = vld [vmem:[%s0 + $0x2b8] sm:$0xff]
    %v104 = vld [vmem:[%s0 + $0x2c0] sm:$0xff]
    %v105 = vld [vmem:[%s0 + $0x2c8] sm:$0xff]
    %v106 = vld [vmem:[%s0 + $0x2d0] sm:$0xff]
    %v107 = vld [vmem:[%s0 + $0x2d8] sm:$0xff]
    %v108 = vld [vmem:[%s0 + $0x2e0] sm:$0xff]
    %v109 = vld [vmem:[%s0 + $0x2e8] sm:$0xff]
    %v110 = vld [vmem:[%s0 + $0x2f0] sm:$0xff]
    %v111 = vld [vmem:[%s0 + $0x2f8] sm:$0xff]
    %v112 = vld [vmem:[%s0 + $0x300] sm:$0xff]
    %v113 = vld [vmem:[%s0 + $0x308] sm:$0xff]
    %v114 = vld [vmem:[%s0 + $0x310] sm:$0xff]
    %v115 = vld [vmem:[%s0 + $0x318] sm:$0xff]
    %v116 = vld [vmem:[%s0 + $0x320] sm:$0xff]
    %v117 = vld [vmem:[%s0 + $0x328] sm:$0xff]
    %v118 = vld [vmem:[%s0 + $0x330] sm:$0xff]
    %v119 = vld [vmem:[%s0 + $0x338] sm:$0xff]
    %v120 = vld [vmem:[%s0 + $0x340] sm:$0xff]
    %v121 = vld [vmem:[%s0 + $0x348] sm:$0xff]
    %v122 = vld [vmem:[%s0 + $0x350] sm:$0xff]
    %v123 = vld [vmem:[%s0 + $0x358] sm:$0xff]
    %v124 = vld [vmem:[%s0 + $0x360] sm:$0xff]
    %v125 = vld [vmem:[%s0 + $0x368] sm:$0xff]
    %v126 = vld [vmem:[%s0 + $0x370] sm:$0xff]
    %v127 = vld [vmem:[%s0 + $0x378] sm:$0xff]
    %v128 = vld [vmem:[%s0 + $0x380] sm:$0xff]
    %v129 = vld [vmem:[%s0 + $0x388] sm:$0xff]
    %v130 = vld [vmem:[%s0 + $0x390] sm:$0xff]
    %v131 = vld [vmem:[%s0 + $0x398] sm:$0xff]
    %v132 = vld [vmem:[%s0 + $0x3a0] sm:$0xff]
    %v133 = vld [vmem:[%s0 + $0x3a8] sm:$0xff]
    %v134 = vld [vmem:[%s0 + $0x3b0] sm:$0xff]
    %v135 = vld [vmem:[%s0 + $0x3b8] sm:$0xff]
    %v136 = vld [vmem:[%s0 + $0x3c0] sm:$0xff]
    %v137 = vld [vmem:[%s0 + $0x3c8] sm:$0xff]
    %v138 = vld [vmem:[%s0 + $0x3d0] sm:$0xff]
    %v139 = vld [vmem:[%s0 + $0x3d8] sm:$0xff]
    %v140 = vld [vmem:[%s0 + $0x3e0] sm:$0xff]
    %v141 = vld [vmem:[%s0 + $0x3e8] sm:$0xff]
    %v142 = vld [vmem:[%s0 + $0x3f0] sm:$0xff]
    %v143 = vld [vmem:[%s0 + $0x3f8] sm:$0xff]
    %v144 = vld [vmem:[%s0 + $0x400] sm:$0xff]
    %v145 = vld [vmem:[%s0 + $0x408] sm:$0xff]
    %v146 = vld [vmem:[%s0 + $0x410] sm:$0xff]
    %v147 = vld [vmem:[%s0 + $0x418] sm:$0xff]
    %v148 = vld [vmem:[%s0 + $0x420] sm:$0xff]
    %v149 = vld [vmem:[%s0 + $0x428] sm:$0xff]
    %v150 = vld [vmem:[%s0 + $0x430] sm:$0xff]
    %v151 = vld [vmem:[%s0 + $0x438] sm:$0xff]
    %v152 = vld [vmem:[%s0 + $0x440] sm:$0xff]
    %v153 = vld [vmem:[%s0 + $0x448] sm:$0xff]
    %v154 = vld [vmem:[%s0 + $0x450] sm:$0xff]
    %v155 = vld [vmem:[%s0 + $0x458] sm:$0xff]
    %v156 = vld [vmem:[%s0 + $0x460] sm:$0xff]
    %v157 = vld [vmem:[%s0 + $0x468] sm:$0xff]
    %v158 = vld [vmem:[%s0 + $0x470] sm:$0xff]
    %v159 = vld [vmem:[%s0 + $0x478] sm:$0xff]
    %v160 = vld [vmem:[%s0 + $0x480] sm:$0xff]
    %v161 = vld [vmem:[%s0 + $0x488] sm:$0xff]
    %v162 = vld [vmem:[%s0 + $0x490] sm:$0xff]
    %v163 = vld [vmem:[%s0 + $0x498] sm:$0xff]
    %v164 = vld [vmem:[%s0 + $0x4a0] sm:$0xff]
    %v165 = vld [vmem:[%s0 + $0x4a8] sm:$0xff]
    %v166 = vld [vmem:[%s0 + $0x4b0] sm:$0xff]
    %v167 = vld [vmem:[%s0 + $0x4b8] sm:$0xff]
    %v168 = vld [vmem:[%s0 + $0x4c0] sm:$0xff]
    %v169 = vld [vmem:[%s0 + $0x4c8] sm:$0xff]
    %v170 = vld [vmem:[%s0 + $0x4d0] sm:$0xff]
    %v171 = vld [vmem:[%s0 + $0x4d8] sm:$0xff]
    %v172 = vld [vmem:[%s0 + $0x4e0] sm:$0xff]
    %v173 = vld [vmem:[%s0 + $0x4e8] sm:$0xff]
    %v174 = vld [vmem:[%s0 + $0x4f0] sm:$0xff]
    %v175 = vld [vmem:[%s0 + $0x4f8] sm:$0xff]
    %v176 = vld [vmem:[%s0 + $0x500] sm:$0xff]
    %v177 = vld [vmem:[%s0 + $0x508] sm:$0xff]
    %v178 = vld [vmem:[%s0 + $0x510] sm:$0xff]
    %v179 = vld [vmem:[%s0 + $0x518] sm:$0xff]
    %v180 = vld [vmem:[%s0 + $0x520] sm:$0xff]
    %v181 = vld [vmem:[%s0 + $0x528] sm:$0xff]
    %v182 = vld [vmem:[%s0 + $0x530] sm:$0xff]
    %v183 = vld [vmem:[%s0 + $0x538] sm:$0xff]
    %v184 = vld [vmem:[%s0 + $0x540] sm:$0xff]
    %v185 = vld [vmem:[%s0 + $0x548] sm:$0xff]
    %v186 = vld [vmem:[%s0 + $0x550] sm:$0xff]
    %v187 = vld [vmem:[%s0 + $0x558] sm:$0xff]
    %v188 = vld [vmem:[%s0 + $0x560] sm:$0xff]
    %v189 = vld [vmem:[%s0 + $0x568] sm:$0xff]
    %v190 = vld [vmem:[%s0 + $0x570] sm:$0xff]
    %v191 = vld [vmem:[%s0 + $0x578] sm:$0xff]
    %v192 = vld [vmem:[%s0 + $0x580] sm:$0xff]
    %v193 = vld [vmem:[%s0 + $0x588] sm:$0xff]
    %v194 = vld [vmem:[%s0 + $0x590] sm:$0xff]
    %v195 = vld [vmem:[%s0 + $0x598] sm:$0xff]
    %v196 = vld [vmem:[%s0 + $0x5a0] sm:$0xff]
    %v197 = vld [vmem:[%s0 + $0x5a8] sm:$0xff]
    %v198 = vld [vmem:[%s0 + $0x5b0] sm:$0xff]
    %v199 = vld [vmem:[%s0 + $0x5b8] sm:$0xff]
    %v200 = vld [vmem:[%s0 + $0x5c0] sm:$0xff]
    %v201 = vld [vmem:[%s0 + $0x5c8] sm:$0xff]
    %v202 = vld [vmem:[%s0 + $0x5d0] sm:$0xff]
    %v203 = vld [vmem:[%s0 + $0x5d8] sm:$0xff]
    %v204 = vld [vmem:[%s0 + $0x5e0] sm:$0xff]
    %v205 = vld [vmem:[%s0 + $0x5e8] sm:$0xff]
    %v206 = vld [vmem:[%s0 + $0x5f0] sm:$0xff]
    %v207 = vld [vmem:[%s0 + $0x5f8] sm:$0xff]
    %v208 = vld [vmem:[%s0 + $0x600] sm:$0xff]
    %v209 = vld [vmem:[%s0 + $0x608] sm:$0xff]
    %v210 = vld [vmem:[%s0 + $0x610] sm:$0xff]
    %v211 = vld [vmem:[%s0 + $0x618] sm:$0xff]
    %v212 = vld [vmem:[%s0 + $0x620] sm:$0xff]
    %v213 = vld [vmem:[%s0 + $0x628] sm:$0xff]
    %v214 = vld [vmem:[%s0 + $0x630] sm:$0xff]
    %v215 = vld [vmem:[%s0 + $0x638] sm:$0xff]
    %v216 = vld [vmem:[%s0 + $0x640] sm:$0xff]
    %v217 = vld [vmem:[%s0 + $0x648] sm:$0xff]
    %v218 = vld [vmem:[%s0 + $0x650] sm:$0xff]
    %v219 = vld [vmem:[%s0 + $0x658] sm:$0xff]
    %v220 = vld [vmem:[%s0 + $0x660] sm:$0xff]
    %v221 = vld [vmem:[%s0 + $0x668] sm:$0xff]
    %v222 = vld [vmem:[%s0 + $0x670] sm:$0xff]
    %v223 = vld [vmem:[%s0 + $0x678] sm:$0xff]
    %v224 = vld [vmem:[%s0 + $0x680] sm:$0xff]
    %v225 = vld [vmem:[%s0 + $0x688] sm:$0xff]
    %v226 = vld [vmem:[%s0 + $0x690] sm:$0xff]
    %v227 = vld [vmem:[%s0 + $0x698] sm:$0xff]
    %v228 = vld [vmem:[%s0 + $0x6a0] sm:$0xff]
    %v229 = vld [vmem:[%s0 + $0x6a8] sm:$0xff]
    %v230 = vld [vmem:[%s0 + $0x6b0] sm:$0xff]
    %v231 = vld [vmem:[%s0 + $0x6b8] sm:$0xff]
    %v232 = vld [vmem:[%s0 + $0x6c0] sm:$0xff]
    %v233 = vld [vmem:[%s0 + $0x6c8] sm:$0xff]
    %v234 = vld [vmem:[%s0 + $0x6d0] sm:$0xff]
    %v235 = vld [vmem:[%s0 + $0x6d8] sm:$0xff]
    %v236 = vld [vmem:[%s0 + $0x6e0] sm:$0xff]
    %v237 = vld [vmem:[%s0 + $0x6e8] sm:$0xff]
    %v238 = vld [vmem:[%s0 + $0x6f0] sm:$0xff]
    %v239 = vld [vmem:[%s0 + $0x6f8] sm:$0xff]
    %v240 = vld [vmem:[%s0 + $0x700] sm:$0xff]
    %v241 = vld [vmem:[%s0 + $0x708] sm:$0xff]
    %v242 = vld [vmem:[%s0 + $0x710] sm:$0xff]
    %v243 = vld [vmem:[%s0 + $0x718] sm:$0xff]
    %v244 = vld [vmem:[%s0 + $0x720] sm:$0xff]
    %v245 = vld [vmem:[%s0 + $0x728] sm:$0xff]
    %v246 = vld [vmem:[%s0 + $0x730] sm:$0xff]
    %v247 = vld [vmem:[%s0 + $0x738] sm:$0xff]
    %v248 = vld [vmem:[%s0 + $0x740] sm:$0xff]
    %v249 = vld [vmem:[%s0 + $0x748] sm:$0xff]
    %v250 = vld [vmem:[%s0 + $0x750] sm:$0xff]
    %v251 = vld [vmem:[%s0 + $0x758] sm:$0xff]
    %v252 = vld [vmem:[%s0 + $0x760] sm:$0xff]
    %v253 = vld [vmem:[%s0 + $0x768] sm:$0xff]
    %v254 = vld [vmem:[%s0 + $0x770] sm:$0xff]
    %v255 = vld [vmem:[%s0 + $0x778] sm:$0xff]
    %v256 = vld [vmem:[%s0 + $0x780] sm:$0xff]
    %v257 = vld [vmem:[%s0 + $0x788] sm:$0xff]
    %v258 = vld [vmem:[%s0 + $0x790] sm:$0xff]
    %v259 = vld [vmem:[%s0 + $0x798] sm:$0xff]
    %v260 = vld [vmem:[%s0 + $0x7a0] sm:$0xff]
    %v261 = vld [vmem:[%s0 + $0x7a8] sm:$0xff]
    %v262 = vld [vmem:[%s0 + $0x7b0] sm:$0xff]
    %v263 = vld [vmem:[%s0 + $0x7b8] sm:$0xff]
    %v264 = vld [vmem:[%s0 + $0x7c0] sm:$0xff]
    %v265 = vld [vmem:[%s0 + $0x7c8] sm:$0xff]
    %v266 = vld [vmem:[%s0 + $0x7d0] sm:$0xff]
    %v267 = vld [vmem:[%s0 + $0x7d8] sm:$0xff]
    %v268 = vld [vmem:[%s0 + $0x7e0] sm:$0xff]
    %v269 = vld [vmem:[%s0 + $0x7e8] sm:$0xff]
    %v270 = vld [vmem:[%s0 + $0x7f0] sm:$0xff]
    %v271 = vld [vmem:[%s0 + $0x7f8] sm:$0xff]
    %v272 = vld [vmem:[%s1] sm:$0xf]
    %v273 = vld [vmem:[%s1 + $0x4] sm:$0xf]
    %v274 = vld [vmem:[%s1 + $0x8] sm:$0xf]
    %v275 = vld [vmem:[%s1 + $0xc] sm:$0xf]
    %v276 = vld [vmem:[%s1 + $0x10] sm:$0xf]
    %v277 = vld [vmem:[%s1 + $0x14] sm:$0xf]
    %v278 = vld [vmem:[%s1 + $0x18] sm:$0xf]
    %v279 = vld [vmem:[%s1 + $0x1c] sm:$0xf]
    %v280 = vld [vmem:[%s1 + $0x20] sm:$0xf]
    %v281 = vld [vmem:[%s1 + $0x24] sm:$0xf]
    %v282 = vld [vmem:[%s1 + $0x28] sm:$0xf]
    %v283 = vld [vmem:[%s1 + $0x2c] sm:$0xf]
    %v284 = vld [vmem:[%s1 + $0x30] sm:$0xf]
    %v285 = vld [vmem:[%s1 + $0x34] sm:$0xf]
    %v286 = vld [vmem:[%s1 + $0x38] sm:$0xf]
    %v287 = vld [vmem:[%s1 + $0x3c] sm:$0xf]
    %v288 = vld [vmem:[%s1 + $0x40] sm:$0xf]
    %v289 = vld [vmem:[%s1 + $0x44] sm:$0xf]
    %v290 = vld [vmem:[%s1 + $0x48] sm:$0x3]
    %v291 = vld [vmem:[%s2] sm:$0x1]
    %v293 = vlaneseq
    %v294 = vshrl.u32 %v293, 7
    %v295 = vsub.s32 0, %v294
    %v296 = vrot.slane %v291, %v295
    %v554 = vunpack.c.l.b16 %v16
    %v555 = vunpack.c.h.b16 %v16
    %v556 = vunpack.c.l.b16 %v17
    %v557 = vunpack.c.h.b16 %v17
    %v558 = vunpack.c.l.b16 %v18
    %v559 = vunpack.c.h.b16 %v18
    %v560 = vunpack.c.l.b16 %v19
    %v561 = vunpack.c.h.b16 %v19
    %v562 = vunpack.c.l.b16 %v20
    %v563 = vunpack.c.h.b16 %v20
    %v564 = vunpack.c.l.b16 %v21
    %v565 = vunpack.c.h.b16 %v21
    %v566 = vunpack.c.l.b16 %v22
    %v567 = vunpack.c.h.b16 %v22
    %v568 = vunpack.c.l.b16 %v23
    %v569 = vunpack.c.h.b16 %v23
    %v570 = vunpack.c.l.b16 %v24
    %v571 = vunpack.c.h.b16 %v24
    %v572 = vunpack.c.l.b16 %v25
    %v573 = vunpack.c.h.b16 %v25
    %v574 = vunpack.c.l.b16 %v26
    %v575 = vunpack.c.h.b16 %v26
    %v576 = vunpack.c.l.b16 %v27
    %v577 = vunpack.c.h.b16 %v27
    %v578 = vunpack.c.l.b16 %v28
    %v579 = vunpack.c.h.b16 %v28
    %v580 = vunpack.c.l.b16 %v29
    %v581 = vunpack.c.h.b16 %v29
    %v582 = vunpack.c.l.b16 %v30
    %v583 = vunpack.c.h.b16 %v30
    %v584 = vunpack.c.l.b16 %v31
    %v585 = vunpack.c.h.b16 %v31
    %v586 = vunpack.c.l.b16 %v32
    %v587 = vunpack.c.h.b16 %v32
    %v588 = vunpack.c.l.b16 %v33
    %v589 = vunpack.c.h.b16 %v33
    %v590 = vunpack.c.l.b16 %v34
    %v591 = vunpack.c.h.b16 %v34
    %v592 = vunpack.c.l.b16 %v35
    %v593 = vunpack.c.h.b16 %v35
    %v594 = vunpack.c.l.b16 %v36
    %v595 = vunpack.c.h.b16 %v36
    %v596 = vunpack.c.l.b16 %v37
    %v597 = vunpack.c.h.b16 %v37
    %v598 = vunpack.c.l.b16 %v38
    %v599 = vunpack.c.h.b16 %v38
    %v600 = vunpack.c.l.b16 %v39
    %v601 = vunpack.c.h.b16 %v39
    %v602 = vunpack.c.l.b16 %v40
    %v603 = vunpack.c.h.b16 %v40
    %v604 = vunpack.c.l.b16 %v41
    %v605 = vunpack.c.h.b16 %v41
    %v606 = vunpack.c.l.b16 %v42
    %v607 = vunpack.c.h.b16 %v42
    %v608 = vunpack.c.l.b16 %v43
    %v609 = vunpack.c.h.b16 %v43
    %v610 = vunpack.c.l.b16 %v44
    %v611 = vunpack.c.h.b16 %v44
    %v612 = vunpack.c.l.b16 %v45
    %v613 = vunpack.c.h.b16 %v45
    %v614 = vunpack.c.l.b16 %v46
    %v615 = vunpack.c.h.b16 %v46
    %v616 = vunpack.c.l.b16 %v47
    %v617 = vunpack.c.h.b16 %v47
    %v618 = vunpack.c.l.b16 %v48
    %v619 = vunpack.c.h.b16 %v48
    %v620 = vunpack.c.l.b16 %v49
    %v621 = vunpack.c.h.b16 %v49
    %v622 = vunpack.c.l.b16 %v50
    %v623 = vunpack.c.h.b16 %v50
    %v624 = vunpack.c.l.b16 %v51
    %v625 = vunpack.c.h.b16 %v51
    %v626 = vunpack.c.l.b16 %v52
    %v627 = vunpack.c.h.b16 %v52
    %v628 = vunpack.c.l.b16 %v53
    %v629 = vunpack.c.h.b16 %v53
    %v630 = vunpack.c.l.b16 %v54
    %v631 = vunpack.c.h.b16 %v54
    %v632 = vunpack.c.l.b16 %v55
    %v633 = vunpack.c.h.b16 %v55
    %v634 = vunpack.c.l.b16 %v56
    %v635 = vunpack.c.h.b16 %v56
    %v636 = vunpack.c.l.b16 %v57
    %v637 = vunpack.c.h.b16 %v57
    %v638 = vunpack.c.l.b16 %v58
    %v639 = vunpack.c.h.b16 %v58
    %v640 = vunpack.c.l.b16 %v59
    %v641 = vunpack.c.h.b16 %v59
    %v642 = vunpack.c.l.b16 %v60
    %v643 = vunpack.c.h.b16 %v60
    %v644 = vunpack.c.l.b16 %v61
    %v645 = vunpack.c.h.b16 %v61
    %v646 = vunpack.c.l.b16 %v62
    %v647 = vunpack.c.h.b16 %v62
    %v648 = vunpack.c.l.b16 %v63
    %v649 = vunpack.c.h.b16 %v63
    %v650 = vunpack.c.l.b16 %v64
    %v651 = vunpack.c.h.b16 %v64
    %v652 = vunpack.c.l.b16 %v65
    %v653 = vunpack.c.h.b16 %v65
    %v654 = vunpack.c.l.b16 %v66
    %v655 = vunpack.c.h.b16 %v66
    %v656 = vunpack.c.l.b16 %v67
    %v657 = vunpack.c.h.b16 %v67
    %v658 = vunpack.c.l.b16 %v68
    %v659 = vunpack.c.h.b16 %v68
    %v660 = vunpack.c.l.b16 %v69
    %v661 = vunpack.c.h.b16 %v69
    %v662 = vunpack.c.l.b16 %v70
    %v663 = vunpack.c.h.b16 %v70
    %v664 = vunpack.c.l.b16 %v71
    %v665 = vunpack.c.h.b16 %v71
    %v666 = vunpack.c.l.b16 %v72
    %v667 = vunpack.c.h.b16 %v72
    %v668 = vunpack.c.l.b16 %v73
    %v669 = vunpack.c.h.b16 %v73
    %v670 = vunpack.c.l.b16 %v74
    %v671 = vunpack.c.h.b16 %v74
    %v672 = vunpack.c.l.b16 %v75
    %v673 = vunpack.c.h.b16 %v75
    %v674 = vunpack.c.l.b16 %v76
    %v675 = vunpack.c.h.b16 %v76
    %v676 = vunpack.c.l.b16 %v77
    %v677 = vunpack.c.h.b16 %v77
    %v678 = vunpack.c.l.b16 %v78
    %v679 = vunpack.c.h.b16 %v78
    %v680 = vunpack.c.l.b16 %v79
    %v681 = vunpack.c.h.b16 %v79
    %v682 = vunpack.c.l.b16 %v80
    %v683 = vunpack.c.h.b16 %v80
    %v684 = vunpack.c.l.b16 %v81
    %v685 = vunpack.c.h.b16 %v81
    %v686 = vunpack.c.l.b16 %v82
    %v687 = vunpack.c.h.b16 %v82
    %v688 = vunpack.c.l.b16 %v83
    %v689 = vunpack.c.h.b16 %v83
    %v690 = vunpack.c.l.b16 %v84
    %v691 = vunpack.c.h.b16 %v84
    %v692 = vunpack.c.l.b16 %v85
    %v693 = vunpack.c.h.b16 %v85
    %v694 = vunpack.c.l.b16 %v86
    %v695 = vunpack.c.h.b16 %v86
    %v696 = vunpack.c.l.b16 %v87
    %v697 = vunpack.c.h.b16 %v87
    %v698 = vunpack.c.l.b16 %v88
    %v699 = vunpack.c.h.b16 %v88
    %v700 = vunpack.c.l.b16 %v89
    %v701 = vunpack.c.h.b16 %v89
    %v702 = vunpack.c.l.b16 %v90
    %v703 = vunpack.c.h.b16 %v90
    %v704 = vunpack.c.l.b16 %v91
    %v705 = vunpack.c.h.b16 %v91
    %v706 = vunpack.c.l.b16 %v92
    %v707 = vunpack.c.h.b16 %v92
    %v708 = vunpack.c.l.b16 %v93
    %v709 = vunpack.c.h.b16 %v93
    %v710 = vunpack.c.l.b16 %v94
    %v711 = vunpack.c.h.b16 %v94
    %v712 = vunpack.c.l.b16 %v95
    %v713 = vunpack.c.h.b16 %v95
    %v714 = vunpack.c.l.b16 %v96
    %v715 = vunpack.c.h.b16 %v96
    %v716 = vunpack.c.l.b16 %v97
    %v717 = vunpack.c.h.b16 %v97
    %v718 = vunpack.c.l.b16 %v98
    %v719 = vunpack.c.h.b16 %v98
    %v720 = vunpack.c.l.b16 %v99
    %v721 = vunpack.c.h.b16 %v99
    %v722 = vunpack.c.l.b16 %v100
    %v723 = vunpack.c.h.b16 %v100
    %v724 = vunpack.c.l.b16 %v101
    %v725 = vunpack.c.h.b16 %v101
    %v726 = vunpack.c.l.b16 %v102
    %v727 = vunpack.c.h.b16 %v102
    %v728 = vunpack.c.l.b16 %v103
    %v729 = vunpack.c.h.b16 %v103
    %v730 = vunpack.c.l.b16 %v104
    %v731 = vunpack.c.h.b16 %v104
    %v732 = vunpack.c.l.b16 %v105
    %v733 = vunpack.c.h.b16 %v105
    %v734 = vunpack.c.l.b16 %v106
    %v735 = vunpack.c.h.b16 %v106
    %v736 = vunpack.c.l.b16 %v107
    %v737 = vunpack.c.h.b16 %v107
    %v738 = vunpack.c.l.b16 %v108
    %v739 = vunpack.c.h.b16 %v108
    %v740 = vunpack.c.l.b16 %v109
    %v741 = vunpack.c.h.b16 %v109
    %v742 = vunpack.c.l.b16 %v110
    %v743 = vunpack.c.h.b16 %v110
    %v744 = vunpack.c.l.b16 %v111
    %v745 = vunpack.c.h.b16 %v111
    %v746 = vunpack.c.l.b16 %v112
    %v747 = vunpack.c.h.b16 %v112
    %v748 = vunpack.c.l.b16 %v113
    %v749 = vunpack.c.h.b16 %v113
    %v750 = vunpack.c.l.b16 %v114
    %v751 = vunpack.c.h.b16 %v114
    %v752 = vunpack.c.l.b16 %v115
    %v753 = vunpack.c.h.b16 %v115
    %v754 = vunpack.c.l.b16 %v116
    %v755 = vunpack.c.h.b16 %v116
    %v756 = vunpack.c.l.b16 %v117
    %v757 = vunpack.c.h.b16 %v117
    %v758 = vunpack.c.l.b16 %v118
    %v759 = vunpack.c.h.b16 %v118
    %v760 = vunpack.c.l.b16 %v119
    %v761 = vunpack.c.h.b16 %v119
    %v762 = vunpack.c.l.b16 %v120
    %v763 = vunpack.c.h.b16 %v120
    %v764 = vunpack.c.l.b16 %v121
    %v765 = vunpack.c.h.b16 %v121
    %v766 = vunpack.c.l.b16 %v122
    %v767 = vunpack.c.h.b16 %v122
    %v768 = vunpack.c.l.b16 %v123
    %v769 = vunpack.c.h.b16 %v123
    %v770 = vunpack.c.l.b16 %v124
    %v771 = vunpack.c.h.b16 %v124
    %v772 = vunpack.c.l.b16 %v125
    %v773 = vunpack.c.h.b16 %v125
    %v774 = vunpack.c.l.b16 %v126
    %v775 = vunpack.c.h.b16 %v126
    %v776 = vunpack.c.l.b16 %v127
    %v777 = vunpack.c.h.b16 %v127
    %v778 = vunpack.c.l.b16 %v128
    %v779 = vunpack.c.h.b16 %v128
    %v780 = vunpack.c.l.b16 %v129
    %v781 = vunpack.c.h.b16 %v129
    %v782 = vunpack.c.l.b16 %v130
    %v783 = vunpack.c.h.b16 %v130
    %v784 = vunpack.c.l.b16 %v131
    %v785 = vunpack.c.h.b16 %v131
    %v786 = vunpack.c.l.b16 %v132
    %v787 = vunpack.c.h.b16 %v132
    %v788 = vunpack.c.l.b16 %v133
    %v789 = vunpack.c.h.b16 %v133
    %v790 = vunpack.c.l.b16 %v134
    %v791 = vunpack.c.h.b16 %v134
    %v792 = vunpack.c.l.b16 %v135
    %v793 = vunpack.c.h.b16 %v135
    %v794 = vunpack.c.l.b16 %v136
    %v795 = vunpack.c.h.b16 %v136
    %v796 = vunpack.c.l.b16 %v137
    %v797 = vunpack.c.h.b16 %v137
    %v798 = vunpack.c.l.b16 %v138
    %v799 = vunpack.c.h.b16 %v138
    %v800 = vunpack.c.l.b16 %v139
    %v801 = vunpack.c.h.b16 %v139
    %v802 = vunpack.c.l.b16 %v140
    %v803 = vunpack.c.h.b16 %v140
    %v804 = vunpack.c.l.b16 %v141
    %v805 = vunpack.c.h.b16 %v141
    %v806 = vunpack.c.l.b16 %v142
    %v807 = vunpack.c.h.b16 %v142
    %v808 = vunpack.c.l.b16 %v143
    %v809 = vunpack.c.h.b16 %v143
    %v810 = vunpack.c.l.b16 %v144
    %v811 = vunpack.c.h.b16 %v144
    %v812 = vunpack.c.l.b16 %v145
    %v813 = vunpack.c.h.b16 %v145
    %v814 = vunpack.c.l.b16 %v146
    %v815 = vunpack.c.h.b16 %v146
    %v816 = vunpack.c.l.b16 %v147
    %v817 = vunpack.c.h.b16 %v147
    %v818 = vunpack.c.l.b16 %v148
    %v819 = vunpack.c.h.b16 %v148
    %v820 = vunpack.c.l.b16 %v149
    %v821 = vunpack.c.h.b16 %v149
    %v822 = vunpack.c.l.b16 %v150
    %v823 = vunpack.c.h.b16 %v150
    %v824 = vunpack.c.l.b16 %v151
    %v825 = vunpack.c.h.b16 %v151
    %v826 = vunpack.c.l.b16 %v152
    %v827 = vunpack.c.h.b16 %v152
    %v828 = vunpack.c.l.b16 %v153
    %v829 = vunpack.c.h.b16 %v153
    %v830 = vunpack.c.l.b16 %v154
    %v831 = vunpack.c.h.b16 %v154
    %v832 = vunpack.c.l.b16 %v155
    %v833 = vunpack.c.h.b16 %v155
    %v834 = vunpack.c.l.b16 %v156
    %v835 = vunpack.c.h.b16 %v156
    %v836 = vunpack.c.l.b16 %v157
    %v837 = vunpack.c.h.b16 %v157
    %v838 = vunpack.c.l.b16 %v158
    %v839 = vunpack.c.h.b16 %v158
    %v840 = vunpack.c.l.b16 %v159
    %v841 = vunpack.c.h.b16 %v159
    %v842 = vunpack.c.l.b16 %v160
    %v843 = vunpack.c.h.b16 %v160
    %v844 = vunpack.c.l.b16 %v161
    %v845 = vunpack.c.h.b16 %v161
    %v846 = vunpack.c.l.b16 %v162
    %v847 = vunpack.c.h.b16 %v162
    %v848 = vunpack.c.l.b16 %v163
    %v849 = vunpack.c.h.b16 %v163
    %v850 = vunpack.c.l.b16 %v164
    %v851 = vunpack.c.h.b16 %v164
    %v852 = vunpack.c.l.b16 %v165
    %v853 = vunpack.c.h.b16 %v165
    %v854 = vunpack.c.l.b16 %v166
    %v855 = vunpack.c.h.b16 %v166
    %v856 = vunpack.c.l.b16 %v167
    %v857 = vunpack.c.h.b16 %v167
    %v858 = vunpack.c.l.b16 %v168
    %v859 = vunpack.c.h.b16 %v168
    %v860 = vunpack.c.l.b16 %v169
    %v861 = vunpack.c.h.b16 %v169
    %v862 = vunpack.c.l.b16 %v170
    %v863 = vunpack.c.h.b16 %v170
    %v864 = vunpack.c.l.b16 %v171
    %v865 = vunpack.c.h.b16 %v171
    %v866 = vunpack.c.l.b16 %v172
    %v867 = vunpack.c.h.b16 %v172
    %v868 = vunpack.c.l.b16 %v173
    %v869 = vunpack.c.h.b16 %v173
    %v870 = vunpack.c.l.b16 %v174
    %v871 = vunpack.c.h.b16 %v174
    %v872 = vunpack.c.l.b16 %v175
    %v873 = vunpack.c.h.b16 %v175
    %v874 = vunpack.c.l.b16 %v176
    %v875 = vunpack.c.h.b16 %v176
    %v876 = vunpack.c.l.b16 %v177
    %v877 = vunpack.c.h.b16 %v177
    %v878 = vunpack.c.l.b16 %v178
    %v879 = vunpack.c.h.b16 %v178
    %v880 = vunpack.c.l.b16 %v179
    %v881 = vunpack.c.h.b16 %v179
    %v882 = vunpack.c.l.b16 %v180
    %v883 = vunpack.c.h.b16 %v180
    %v884 = vunpack.c.l.b16 %v181
    %v885 = vunpack.c.h.b16 %v181
    %v886 = vunpack.c.l.b16 %v182
    %v887 = vunpack.c.h.b16 %v182
    %v888 = vunpack.c.l.b16 %v183
    %v889 = vunpack.c.h.b16 %v183
    %v890 = vunpack.c.l.b16 %v184
    %v891 = vunpack.c.h.b16 %v184
    %v892 = vunpack.c.l.b16 %v185
    %v893 = vunpack.c.h.b16 %v185
    %v894 = vunpack.c.l.b16 %v186
    %v895 = vunpack.c.h.b16 %v186
    %v896 = vunpack.c.l.b16 %v187
    %v897 = vunpack.c.h.b16 %v187
    %v898 = vunpack.c.l.b16 %v188
    %v899 = vunpack.c.h.b16 %v188
    %v900 = vunpack.c.l.b16 %v189
    %v901 = vunpack.c.h.b16 %v189
    %v902 = vunpack.c.l.b16 %v190
    %v903 = vunpack.c.h.b16 %v190
    %v904 = vunpack.c.l.b16 %v191
    %v905 = vunpack.c.h.b16 %v191
    %v906 = vunpack.c.l.b16 %v192
    %v907 = vunpack.c.h.b16 %v192
    %v908 = vunpack.c.l.b16 %v193
    %v909 = vunpack.c.h.b16 %v193
    %v910 = vunpack.c.l.b16 %v194
    %v911 = vunpack.c.h.b16 %v194
    %v912 = vunpack.c.l.b16 %v195
    %v913 = vunpack.c.h.b16 %v195
    %v914 = vunpack.c.l.b16 %v196
    %v915 = vunpack.c.h.b16 %v196
    %v916 = vunpack.c.l.b16 %v197
    %v917 = vunpack.c.h.b16 %v197
    %v918 = vunpack.c.l.b16 %v198
    %v919 = vunpack.c.h.b16 %v198
    %v920 = vunpack.c.l.b16 %v199
    %v921 = vunpack.c.h.b16 %v199
    %v922 = vunpack.c.l.b16 %v200
    %v923 = vunpack.c.h.b16 %v200
    %v924 = vunpack.c.l.b16 %v201
    %v925 = vunpack.c.h.b16 %v201
    %v926 = vunpack.c.l.b16 %v202
    %v927 = vunpack.c.h.b16 %v202
    %v928 = vunpack.c.l.b16 %v203
    %v929 = vunpack.c.h.b16 %v203
    %v930 = vunpack.c.l.b16 %v204
    %v931 = vunpack.c.h.b16 %v204
    %v932 = vunpack.c.l.b16 %v205
    %v933 = vunpack.c.h.b16 %v205
    %v934 = vunpack.c.l.b16 %v206
    %v935 = vunpack.c.h.b16 %v206
    %v936 = vunpack.c.l.b16 %v207
    %v937 = vunpack.c.h.b16 %v207
    %v938 = vunpack.c.l.b16 %v208
    %v939 = vunpack.c.h.b16 %v208
    %v940 = vunpack.c.l.b16 %v209
    %v941 = vunpack.c.h.b16 %v209
    %v942 = vunpack.c.l.b16 %v210
    %v943 = vunpack.c.h.b16 %v210
    %v944 = vunpack.c.l.b16 %v211
    %v945 = vunpack.c.h.b16 %v211
    %v946 = vunpack.c.l.b16 %v212
    %v947 = vunpack.c.h.b16 %v212
    %v948 = vunpack.c.l.b16 %v213
    %v949 = vunpack.c.h.b16 %v213
    %v950 = vunpack.c.l.b16 %v214
    %v951 = vunpack.c.h.b16 %v214
    %v952 = vunpack.c.l.b16 %v215
    %v953 = vunpack.c.h.b16 %v215
    %v954 = vunpack.c.l.b16 %v216
    %v955 = vunpack.c.h.b16 %v216
    %v956 = vunpack.c.l.b16 %v217
    %v957 = vunpack.c.h.b16 %v217
    %v958 = vunpack.c.l.b16 %v218
    %v959 = vunpack.c.h.b16 %v218
    %v960 = vunpack.c.l.b16 %v219
    %v961 = vunpack.c.h.b16 %v219
    %v962 = vunpack.c.l.b16 %v220
    %v963 = vunpack.c.h.b16 %v220
    %v964 = vunpack.c.l.b16 %v221
    %v965 = vunpack.c.h.b16 %v221
    %v966 = vunpack.c.l.b16 %v222
    %v967 = vunpack.c.h.b16 %v222
    %v968 = vunpack.c.l.b16 %v223
    %v969 = vunpack.c.h.b16 %v223
    %v970 = vunpack.c.l.b16 %v224
    %v971 = vunpack.c.h.b16 %v224
    %v972 = vunpack.c.l.b16 %v225
    %v973 = vunpack.c.h.b16 %v225
    %v974 = vunpack.c.l.b16 %v226
    %v975 = vunpack.c.h.b16 %v226
    %v976 = vunpack.c.l.b16 %v227
    %v977 = vunpack.c.h.b16 %v227
    %v978 = vunpack.c.l.b16 %v228
    %v979 = vunpack.c.h.b16 %v228
    %v980 = vunpack.c.l.b16 %v229
    %v981 = vunpack.c.h.b16 %v229
    %v982 = vunpack.c.l.b16 %v230
    %v983 = vunpack.c.h.b16 %v230
    %v984 = vunpack.c.l.b16 %v231
    %v985 = vunpack.c.h.b16 %v231
    %v986 = vunpack.c.l.b16 %v232
    %v987 = vunpack.c.h.b16 %v232
    %v988 = vunpack.c.l.b16 %v233
    %v989 = vunpack.c.h.b16 %v233
    %v990 = vunpack.c.l.b16 %v234
    %v991 = vunpack.c.h.b16 %v234
    %v992 = vunpack.c.l.b16 %v235
    %v993 = vunpack.c.h.b16 %v235
    %v994 = vunpack.c.l.b16 %v236
    %v995 = vunpack.c.h.b16 %v236
    %v996 = vunpack.c.l.b16 %v237
    %v997 = vunpack.c.h.b16 %v237
    %v998 = vunpack.c.l.b16 %v238
    %v999 = vunpack.c.h.b16 %v238
    %v1000 = vunpack.c.l.b16 %v239
    %v1001 = vunpack.c.h.b16 %v239
    %v1002 = vunpack.c.l.b16 %v240
    %v1003 = vunpack.c.h.b16 %v240
    %v1004 = vunpack.c.l.b16 %v241
    %v1005 = vunpack.c.h.b16 %v241
    %v1006 = vunpack.c.l.b16 %v242
    %v1007 = vunpack.c.h.b16 %v242
    %v1008 = vunpack.c.l.b16 %v243
    %v1009 = vunpack.c.h.b16 %v243
    %v1010 = vunpack.c.l.b16 %v244
    %v1011 = vunpack.c.h.b16 %v244
    %v1012 = vunpack.c.l.b16 %v245
    %v1013 = vunpack.c.h.b16 %v245
    %v1014 = vunpack.c.l.b16 %v246
    %v1015 = vunpack.c.h.b16 %v246
    %v1016 = vunpack.c.l.b16 %v247
    %v1017 = vunpack.c.h.b16 %v247
    %v1018 = vunpack.c.l.b16 %v248
    %v1019 = vunpack.c.h.b16 %v248
    %v1020 = vunpack.c.l.b16 %v249
    %v1021 = vunpack.c.h.b16 %v249
    %v1022 = vunpack.c.l.b16 %v250
    %v1023 = vunpack.c.h.b16 %v250
    %v1024 = vunpack.c.l.b16 %v251
    %v1025 = vunpack.c.h.b16 %v251
    %v1026 = vunpack.c.l.b16 %v252
    %v1027 = vunpack.c.h.b16 %v252
    %v1028 = vunpack.c.l.b16 %v253
    %v1029 = vunpack.c.h.b16 %v253
    %v1030 = vunpack.c.l.b16 %v254
    %v1031 = vunpack.c.h.b16 %v254
    %v1032 = vunpack.c.l.b16 %v255
    %v1033 = vunpack.c.h.b16 %v255
    %v1034 = vunpack.c.l.b16 %v256
    %v1035 = vunpack.c.h.b16 %v256
    %v1036 = vunpack.c.l.b16 %v257
    %v1037 = vunpack.c.h.b16 %v257
    %v1038 = vunpack.c.l.b16 %v258
    %v1039 = vunpack.c.h.b16 %v258
    %v1040 = vunpack.c.l.b16 %v259
    %v1041 = vunpack.c.h.b16 %v259
    %v1042 = vunpack.c.l.b16 %v260
    %v1043 = vunpack.c.h.b16 %v260
    %v1044 = vunpack.c.l.b16 %v261
    %v1045 = vunpack.c.h.b16 %v261
    %v1046 = vunpack.c.l.b16 %v262
    %v1047 = vunpack.c.h.b16 %v262
    %v1048 = vunpack.c.l.b16 %v263
    %v1049 = vunpack.c.h.b16 %v263
    %v1050 = vunpack.c.l.b16 %v264
    %v1051 = vunpack.c.h.b16 %v264
    %v1052 = vunpack.c.l.b16 %v265
    %v1053 = vunpack.c.h.b16 %v265
    %v1054 = vunpack.c.l.b16 %v266
    %v1055 = vunpack.c.h.b16 %v266
    %v1056 = vunpack.c.l.b16 %v267
    %v1057 = vunpack.c.h.b16 %v267
    %v1058 = vunpack.c.l.b16 %v268
    %v1059 = vunpack.c.h.b16 %v268
    %v1060 = vunpack.c.l.b16 %v269
    %v1061 = vunpack.c.h.b16 %v269
    %v1062 = vunpack.c.l.b16 %v270
    %v1063 = vunpack.c.h.b16 %v270
    %v1064 = vunpack.c.l.b16 %v271
    %v1065 = vunpack.c.h.b16 %v271
    %v1066 = vpack.c.b16 %v556, %v554
    %v1067 = vpack.c.b16 %v557, %v555
    %v1068 = vpack.c.b16 %v560, %v558
    %v1069 = vpack.c.b16 %v561, %v559
    %v1070 = vpack.c.b16 %v564, %v562
    %v1071 = vpack.c.b16 %v565, %v563
    %v1072 = vpack.c.b16 %v568, %v566
    %v1073 = vpack.c.b16 %v569, %v567
    %v1074 = vpack.c.b16 %v572, %v570
    %v1075 = vpack.c.b16 %v573, %v571
    %v1076 = vpack.c.b16 %v576, %v574
    %v1077 = vpack.c.b16 %v577, %v575
    %v1078 = vpack.c.b16 %v580, %v578
    %v1079 = vpack.c.b16 %v581, %v579
    %v1080 = vpack.c.b16 %v584, %v582
    %v1081 = vpack.c.b16 %v585, %v583
    %v1082 = vpack.c.b16 %v588, %v586
    %v1083 = vpack.c.b16 %v589, %v587
    %v1084 = vpack.c.b16 %v592, %v590
    %v1085 = vpack.c.b16 %v593, %v591
    %v1086 = vpack.c.b16 %v596, %v594
    %v1087 = vpack.c.b16 %v597, %v595
    %v1088 = vpack.c.b16 %v600, %v598
    %v1089 = vpack.c.b16 %v601, %v599
    %v1090 = vpack.c.b16 %v604, %v602
    %v1091 = vpack.c.b16 %v605, %v603
    %v1092 = vpack.c.b16 %v608, %v606
    %v1093 = vpack.c.b16 %v609, %v607
    %v1094 = vpack.c.b16 %v612, %v610
    %v1095 = vpack.c.b16 %v613, %v611
    %v1096 = vpack.c.b16 %v616, %v614
    %v1097 = vpack.c.b16 %v617, %v615
    %v1098 = vpack.c.b16 %v620, %v618
    %v1099 = vpack.c.b16 %v621, %v619
    %v1100 = vpack.c.b16 %v624, %v622
    %v1101 = vpack.c.b16 %v625, %v623
    %v1102 = vpack.c.b16 %v628, %v626
    %v1103 = vpack.c.b16 %v629, %v627
    %v1104 = vpack.c.b16 %v632, %v630
    %v1105 = vpack.c.b16 %v633, %v631
    %v1106 = vpack.c.b16 %v636, %v634
    %v1107 = vpack.c.b16 %v637, %v635
    %v1108 = vpack.c.b16 %v640, %v638
    %v1109 = vpack.c.b16 %v641, %v639
    %v1110 = vpack.c.b16 %v644, %v642
    %v1111 = vpack.c.b16 %v645, %v643
    %v1112 = vpack.c.b16 %v648, %v646
    %v1113 = vpack.c.b16 %v649, %v647
    %v1114 = vpack.c.b16 %v652, %v650
    %v1115 = vpack.c.b16 %v653, %v651
    %v1116 = vpack.c.b16 %v656, %v654
    %v1117 = vpack.c.b16 %v657, %v655
    %v1118 = vpack.c.b16 %v660, %v658
    %v1119 = vpack.c.b16 %v661, %v659
    %v1120 = vpack.c.b16 %v664, %v662
    %v1121 = vpack.c.b16 %v665, %v663
    %v1122 = vpack.c.b16 %v668, %v666
    %v1123 = vpack.c.b16 %v669, %v667
    %v1124 = vpack.c.b16 %v672, %v670
    %v1125 = vpack.c.b16 %v673, %v671
    %v1126 = vpack.c.b16 %v676, %v674
    %v1127 = vpack.c.b16 %v677, %v675
    %v1128 = vpack.c.b16 %v680, %v678
    %v1129 = vpack.c.b16 %v681, %v679
    %v1130 = vpack.c.b16 %v684, %v682
    %v1131 = vpack.c.b16 %v685, %v683
    %v1132 = vpack.c.b16 %v688, %v686
    %v1133 = vpack.c.b16 %v689, %v687
    %v1134 = vpack.c.b16 %v692, %v690
    %v1135 = vpack.c.b16 %v693, %v691
    %v1136 = vpack.c.b16 %v696, %v694
    %v1137 = vpack.c.b16 %v697, %v695
    %v1138 = vpack.c.b16 %v700, %v698
    %v1139 = vpack.c.b16 %v701, %v699
    %v1140 = vpack.c.b16 %v704, %v702
    %v1141 = vpack.c.b16 %v705, %v703
    %v1142 = vpack.c.b16 %v708, %v706
    %v1143 = vpack.c.b16 %v709, %v707
    %v1144 = vpack.c.b16 %v712, %v710
    %v1145 = vpack.c.b16 %v713, %v711
    %v1146 = vpack.c.b16 %v716, %v714
    %v1147 = vpack.c.b16 %v717, %v715
    %v1148 = vpack.c.b16 %v720, %v718
    %v1149 = vpack.c.b16 %v721, %v719
    %v1150 = vpack.c.b16 %v724, %v722
    %v1151 = vpack.c.b16 %v725, %v723
    %v1152 = vpack.c.b16 %v728, %v726
    %v1153 = vpack.c.b16 %v729, %v727
    %v1154 = vpack.c.b16 %v732, %v730
    %v1155 = vpack.c.b16 %v733, %v731
    %v1156 = vpack.c.b16 %v736, %v734
    %v1157 = vpack.c.b16 %v737, %v735
    %v1158 = vpack.c.b16 %v740, %v738
    %v1159 = vpack.c.b16 %v741, %v739
    %v1160 = vpack.c.b16 %v744, %v742
    %v1161 = vpack.c.b16 %v745, %v743
    %v1162 = vpack.c.b16 %v748, %v746
    %v1163 = vpack.c.b16 %v749, %v747
    %v1164 = vpack.c.b16 %v752, %v750
    %v1165 = vpack.c.b16 %v753, %v751
    %v1166 = vpack.c.b16 %v756, %v754
    %v1167 = vpack.c.b16 %v757, %v755
    %v1168 = vpack.c.b16 %v760, %v758
    %v1169 = vpack.c.b16 %v761, %v759
    %v1170 = vpack.c.b16 %v764, %v762
    %v1171 = vpack.c.b16 %v765, %v763
    %v1172 = vpack.c.b16 %v768, %v766
    %v1173 = vpack.c.b16 %v769, %v767
    %v1174 = vpack.c.b16 %v772, %v770
    %v1175 = vpack.c.b16 %v773, %v771
    %v1176 = vpack.c.b16 %v776, %v774
    %v1177 = vpack.c.b16 %v777, %v775
    %v1178 = vpack.c.b16 %v780, %v778
    %v1179 = vpack.c.b16 %v781, %v779
    %v1180 = vpack.c.b16 %v784, %v782
    %v1181 = vpack.c.b16 %v785, %v783
    %v1182 = vpack.c.b16 %v788, %v786
    %v1183 = vpack.c.b16 %v789, %v787
    %v1184 = vpack.c.b16 %v792, %v790
    %v1185 = vpack.c.b16 %v793, %v791
    %v1186 = vpack.c.b16 %v796, %v794
    %v1187 = vpack.c.b16 %v797, %v795
    %v1188 = vpack.c.b16 %v800, %v798
    %v1189 = vpack.c.b16 %v801, %v799
    %v1190 = vpack.c.b16 %v804, %v802
    %v1191 = vpack.c.b16 %v805, %v803
    %v1192 = vpack.c.b16 %v808, %v806
    %v1193 = vpack.c.b16 %v809, %v807
    %v1194 = vpack.c.b16 %v812, %v810
    %v1195 = vpack.c.b16 %v813, %v811
    %v1196 = vpack.c.b16 %v816, %v814
    %v1197 = vpack.c.b16 %v817, %v815
    %v1198 = vpack.c.b16 %v820, %v818
    %v1199 = vpack.c.b16 %v821, %v819
    %v1200 = vpack.c.b16 %v824, %v822
    %v1201 = vpack.c.b16 %v825, %v823
    %v1202 = vpack.c.b16 %v828, %v826
    %v1203 = vpack.c.b16 %v829, %v827
    %v1204 = vpack.c.b16 %v832, %v830
    %v1205 = vpack.c.b16 %v833, %v831
    %v1206 = vpack.c.b16 %v836, %v834
    %v1207 = vpack.c.b16 %v837, %v835
    %v1208 = vpack.c.b16 %v840, %v838
    %v1209 = vpack.c.b16 %v841, %v839
    %v1210 = vpack.c.b16 %v844, %v842
    %v1211 = vpack.c.b16 %v845, %v843
    %v1212 = vpack.c.b16 %v848, %v846
    %v1213 = vpack.c.b16 %v849, %v847
    %v1214 = vpack.c.b16 %v852, %v850
    %v1215 = vpack.c.b16 %v853, %v851
    %v1216 = vpack.c.b16 %v856, %v854
    %v1217 = vpack.c.b16 %v857, %v855
    %v1218 = vpack.c.b16 %v860, %v858
    %v1219 = vpack.c.b16 %v861, %v859
    %v1220 = vpack.c.b16 %v864, %v862
    %v1221 = vpack.c.b16 %v865, %v863
    %v1222 = vpack.c.b16 %v868, %v866
    %v1223 = vpack.c.b16 %v869, %v867
    %v1224 = vpack.c.b16 %v872, %v870
    %v1225 = vpack.c.b16 %v873, %v871
    %v1226 = vpack.c.b16 %v876, %v874
    %v1227 = vpack.c.b16 %v877, %v875
    %v1228 = vpack.c.b16 %v880, %v878
    %v1229 = vpack.c.b16 %v881, %v879
    %v1230 = vpack.c.b16 %v884, %v882
    %v1231 = vpack.c.b16 %v885, %v883
    %v1232 = vpack.c.b16 %v888, %v886
    %v1233 = vpack.c.b16 %v889, %v887
    %v1234 = vpack.c.b16 %v892, %v890
    %v1235 = vpack.c.b16 %v893, %v891
    %v1236 = vpack.c.b16 %v896, %v894
    %v1237 = vpack.c.b16 %v897, %v895
    %v1238 = vpack.c.b16 %v900, %v898
    %v1239 = vpack.c.b16 %v901, %v899
    %v1240 = vpack.c.b16 %v904, %v902
    %v1241 = vpack.c.b16 %v905, %v903
    %v1242 = vpack.c.b16 %v908, %v906
    %v1243 = vpack.c.b16 %v909, %v907
    %v1244 = vpack.c.b16 %v912, %v910
    %v1245 = vpack.c.b16 %v913, %v911
    %v1246 = vpack.c.b16 %v916, %v914
    %v1247 = vpack.c.b16 %v917, %v915
    %v1248 = vpack.c.b16 %v920, %v918
    %v1249 = vpack.c.b16 %v921, %v919
    %v1250 = vpack.c.b16 %v924, %v922
    %v1251 = vpack.c.b16 %v925, %v923
    %v1252 = vpack.c.b16 %v928, %v926
    %v1253 = vpack.c.b16 %v929, %v927
    %v1254 = vpack.c.b16 %v932, %v930
    %v1255 = vpack.c.b16 %v933, %v931
    %v1256 = vpack.c.b16 %v936, %v934
    %v1257 = vpack.c.b16 %v937, %v935
    %v1258 = vpack.c.b16 %v940, %v938
    %v1259 = vpack.c.b16 %v941, %v939
    %v1260 = vpack.c.b16 %v944, %v942
    %v1261 = vpack.c.b16 %v945, %v943
    %v1262 = vpack.c.b16 %v948, %v946
    %v1263 = vpack.c.b16 %v949, %v947
    %v1264 = vpack.c.b16 %v952, %v950
    %v1265 = vpack.c.b16 %v953, %v951
    %v1266 = vpack.c.b16 %v956, %v954
    %v1267 = vpack.c.b16 %v957, %v955
    %v1268 = vpack.c.b16 %v960, %v958
    %v1269 = vpack.c.b16 %v961, %v959
    %v1270 = vpack.c.b16 %v964, %v962
    %v1271 = vpack.c.b16 %v965, %v963
    %v1272 = vpack.c.b16 %v968, %v966
    %v1273 = vpack.c.b16 %v969, %v967
    %v1274 = vpack.c.b16 %v972, %v970
    %v1275 = vpack.c.b16 %v973, %v971
    %v1276 = vpack.c.b16 %v976, %v974
    %v1277 = vpack.c.b16 %v977, %v975
    %v1278 = vpack.c.b16 %v980, %v978
    %v1279 = vpack.c.b16 %v981, %v979
    %v1280 = vpack.c.b16 %v984, %v982
    %v1281 = vpack.c.b16 %v985, %v983
    %v1282 = vpack.c.b16 %v988, %v986
    %v1283 = vpack.c.b16 %v989, %v987
    %v1284 = vpack.c.b16 %v992, %v990
    %v1285 = vpack.c.b16 %v993, %v991
    %v1286 = vpack.c.b16 %v996, %v994
    %v1287 = vpack.c.b16 %v997, %v995
    %v1288 = vpack.c.b16 %v1000, %v998
    %v1289 = vpack.c.b16 %v1001, %v999
    %v1290 = vpack.c.b16 %v1004, %v1002
    %v1291 = vpack.c.b16 %v1005, %v1003
    %v1292 = vpack.c.b16 %v1008, %v1006
    %v1293 = vpack.c.b16 %v1009, %v1007
    %v1294 = vpack.c.b16 %v1012, %v1010
    %v1295 = vpack.c.b16 %v1013, %v1011
    %v1296 = vpack.c.b16 %v1016, %v1014
    %v1297 = vpack.c.b16 %v1017, %v1015
    %v1298 = vpack.c.b16 %v1020, %v1018
    %v1299 = vpack.c.b16 %v1021, %v1019
    %v1300 = vpack.c.b16 %v1024, %v1022
    %v1301 = vpack.c.b16 %v1025, %v1023
    %v1302 = vpack.c.b16 %v1028, %v1026
    %v1303 = vpack.c.b16 %v1029, %v1027
    %v1304 = vpack.c.b16 %v1032, %v1030
    %v1305 = vpack.c.b16 %v1033, %v1031
    %v1306 = vpack.c.b16 %v1036, %v1034
    %v1307 = vpack.c.b16 %v1037, %v1035
    %v1308 = vpack.c.b16 %v1040, %v1038
    %v1309 = vpack.c.b16 %v1041, %v1039
    %v1310 = vpack.c.b16 %v1044, %v1042
    %v1311 = vpack.c.b16 %v1045, %v1043
    %v1312 = vpack.c.b16 %v1048, %v1046
    %v1313 = vpack.c.b16 %v1049, %v1047
    %v1314 = vpack.c.b16 %v1052, %v1050
    %v1315 = vpack.c.b16 %v1053, %v1051
    %v1316 = vpack.c.b16 %v1056, %v1054
    %v1317 = vpack.c.b16 %v1057, %v1055
    %v1318 = vpack.c.b16 %v1060, %v1058
    %v1319 = vpack.c.b16 %v1061, %v1059
    %v1320 = vpack.c.b16 %v1064, %v1062
    %v1321 = vpack.c.b16 %v1065, %v1063
    %v1469 = vunpack.c.l.b16 %v272
    %v1470 = vunpack.c.l.b16 %v273
    %v1471 = vunpack.c.l.b16 %v274
    %v1472 = vunpack.c.l.b16 %v275
    %v1473 = vunpack.c.l.b16 %v276
    %v1474 = vunpack.c.l.b16 %v277
    %v1475 = vunpack.c.l.b16 %v278
    %v1476 = vunpack.c.l.b16 %v279
    %v1477 = vunpack.c.l.b16 %v280
    %v1478 = vunpack.c.l.b16 %v281
    %v1479 = vunpack.c.l.b16 %v282
    %v1480 = vunpack.c.l.b16 %v283
    %v1481 = vunpack.c.l.b16 %v284
    %v1482 = vunpack.c.l.b16 %v285
    %v1483 = vunpack.c.l.b16 %v286
    %v1484 = vunpack.c.l.b16 %v287
    %v1485 = vunpack.c.l.b16 %v288
    %v1486 = vunpack.c.l.b16 %v289
    %v1487 = vunpack.c.l.b16 %v290
    %v1488 = vpack.c.b16 %v1470, %v1469
    %v1489 = vpack.c.b16 %v1472, %v1471
    %v1490 = vpack.c.b16 %v1474, %v1473
    %v1491 = vpack.c.b16 %v1476, %v1475
    %v1492 = vpack.c.b16 %v1478, %v1477
    %v1493 = vpack.c.b16 %v1480, %v1479
    %v1494 = vpack.c.b16 %v1482, %v1481
    %v1495 = vpack.c.b16 %v1484, %v1483
    %v1496 = vpack.c.b16 %v1486, %v1485
    %v1497 = vpack.c.b16 %v1487, %v1487
    %vm1507 = vcmask 154624
    %v1509 = vsel %vm1507, %v1067, 0
    %v1512 = vsel %vm1507, %v1069, 0
    %v1515 = vsel %vm1507, %v1071, 0
    %v1518 = vsel %vm1507, %v1073, 0
    %v1521 = vsel %vm1507, %v1075, 0
    %v1524 = vsel %vm1507, %v1077, 0
    %v1527 = vsel %vm1507, %v1079, 0
    %v1530 = vsel %vm1507, %v1081, 0
    %v1533 = vsel %vm1507, %v1083, 0
    %v1536 = vsel %vm1507, %v1085, 0
    %v1539 = vsel %vm1507, %v1087, 0
    %v1542 = vsel %vm1507, %v1089, 0
    %v1545 = vsel %vm1507, %v1091, 0
    %v1548 = vsel %vm1507, %v1093, 0
    %v1551 = vsel %vm1507, %v1095, 0
    %v1554 = vsel %vm1507, %v1097, 0
    %v1557 = vsel %vm1507, %v1099, 0
    %v1560 = vsel %vm1507, %v1101, 0
    %v1563 = vsel %vm1507, %v1103, 0
    %v1566 = vsel %vm1507, %v1105, 0
    %v1569 = vsel %vm1507, %v1107, 0
    %v1572 = vsel %vm1507, %v1109, 0
    %v1575 = vsel %vm1507, %v1111, 0
    %v1578 = vsel %vm1507, %v1113, 0
    %v1581 = vsel %vm1507, %v1115, 0
    %v1584 = vsel %vm1507, %v1117, 0
    %v1587 = vsel %vm1507, %v1119, 0
    %v1590 = vsel %vm1507, %v1121, 0
    %v1593 = vsel %vm1507, %v1123, 0
    %v1596 = vsel %vm1507, %v1125, 0
    %v1599 = vsel %vm1507, %v1127, 0
    %v1602 = vsel %vm1507, %v1129, 0
    %v1605 = vsel %vm1507, %v1131, 0
    %v1608 = vsel %vm1507, %v1133, 0
    %v1611 = vsel %vm1507, %v1135, 0
    %v1614 = vsel %vm1507, %v1137, 0
    %v1617 = vsel %vm1507, %v1139, 0
    %v1620 = vsel %vm1507, %v1141, 0
    %v1623 = vsel %vm1507, %v1143, 0
    %v1626 = vsel %vm1507, %v1145, 0
    %v1629 = vsel %vm1507, %v1147, 0
    %v1632 = vsel %vm1507, %v1149, 0
    %v1635 = vsel %vm1507, %v1151, 0
    %v1638 = vsel %vm1507, %v1153, 0
    %v1641 = vsel %vm1507, %v1155, 0
    %v1644 = vsel %vm1507, %v1157, 0
    %v1647 = vsel %vm1507, %v1159, 0
    %v1650 = vsel %vm1507, %v1161, 0
    %v1653 = vsel %vm1507, %v1163, 0
    %v1656 = vsel %vm1507, %v1165, 0
    %v1659 = vsel %vm1507, %v1167, 0
    %v1662 = vsel %vm1507, %v1169, 0
    %v1665 = vsel %vm1507, %v1171, 0
    %v1668 = vsel %vm1507, %v1173, 0
    %v1671 = vsel %vm1507, %v1175, 0
    %v1674 = vsel %vm1507, %v1177, 0
    %v1677 = vsel %vm1507, %v1179, 0
    %v1680 = vsel %vm1507, %v1181, 0
    %v1683 = vsel %vm1507, %v1183, 0
    %v1686 = vsel %vm1507, %v1185, 0
    %v1689 = vsel %vm1507, %v1187, 0
    %v1692 = vsel %vm1507, %v1189, 0
    %v1695 = vsel %vm1507, %v1191, 0
    %v1698 = vsel %vm1507, %v1193, 0
    %v1701 = vsel %vm1507, %v1195, 0
    %v1704 = vsel %vm1507, %v1197, 0
    %v1707 = vsel %vm1507, %v1199, 0
    %v1710 = vsel %vm1507, %v1201, 0
    %v1713 = vsel %vm1507, %v1203, 0
    %v1716 = vsel %vm1507, %v1205, 0
    %v1719 = vsel %vm1507, %v1207, 0
    %v1722 = vsel %vm1507, %v1209, 0
    %v1725 = vsel %vm1507, %v1211, 0
    %v1728 = vsel %vm1507, %v1213, 0
    %v1731 = vsel %vm1507, %v1215, 0
    %v1734 = vsel %vm1507, %v1217, 0
    %v1737 = vsel %vm1507, %v1219, 0
    %v1740 = vsel %vm1507, %v1221, 0
    %v1743 = vsel %vm1507, %v1223, 0
    %v1746 = vsel %vm1507, %v1225, 0
    %v1749 = vsel %vm1507, %v1227, 0
    %v1752 = vsel %vm1507, %v1229, 0
    %v1755 = vsel %vm1507, %v1231, 0
    %v1758 = vsel %vm1507, %v1233, 0
    %v1761 = vsel %vm1507, %v1235, 0
    %v1764 = vsel %vm1507, %v1237, 0
    %v1767 = vsel %vm1507, %v1239, 0
    %v1770 = vsel %vm1507, %v1241, 0
    %v1773 = vsel %vm1507, %v1243, 0
    %v1776 = vsel %vm1507, %v1245, 0
    %v1779 = vsel %vm1507, %v1247, 0
    %v1782 = vsel %vm1507, %v1249, 0
    %v1785 = vsel %vm1507, %v1251, 0
    %v1788 = vsel %vm1507, %v1253, 0
    %v1791 = vsel %vm1507, %v1255, 0
    %v1794 = vsel %vm1507, %v1257, 0
    %v1797 = vsel %vm1507, %v1259, 0
    %v1800 = vsel %vm1507, %v1261, 0
    %v1803 = vsel %vm1507, %v1263, 0
    %v1806 = vsel %vm1507, %v1265, 0
    %v1809 = vsel %vm1507, %v1267, 0
    %v1812 = vsel %vm1507, %v1269, 0
    %v1815 = vsel %vm1507, %v1271, 0
    %v1818 = vsel %vm1507, %v1273, 0
    %v1821 = vsel %vm1507, %v1275, 0
    %v1824 = vsel %vm1507, %v1277, 0
    %v1827 = vsel %vm1507, %v1279, 0
    %v1830 = vsel %vm1507, %v1281, 0
    %v1833 = vsel %vm1507, %v1283, 0
    %v1836 = vsel %vm1507, %v1285, 0
    %v1839 = vsel %vm1507, %v1287, 0
    %v1842 = vsel %vm1507, %v1289, 0
    %v1845 = vsel %vm1507, %v1291, 0
    %v1848 = vsel %vm1507, %v1293, 0
    %v1851 = vsel %vm1507, %v1295, 0
    %v1854 = vsel %vm1507, %v1297, 0
    %v1857 = vsel %vm1507, %v1299, 0
    %v1860 = vsel %vm1507, %v1301, 0
    %v1863 = vsel %vm1507, %v1303, 0
    %v1866 = vsel %vm1507, %v1305, 0
    %v1869 = vsel %vm1507, %v1307, 0
    %v1872 = vsel %vm1507, %v1309, 0
    %v1875 = vsel %vm1507, %v1311, 0
    %v1878 = vsel %vm1507, %v1313, 0
    %v1881 = vsel %vm1507, %v1315, 0
    %v1884 = vsel %vm1507, %v1317, 0
    %v1887 = vsel %vm1507, %v1319, 0
    %v1890 = vsel %vm1507, %v1321, 0
    %vm1892 = vcmask 1040384
    %vm1893 = vcmask 1041408
    %v1894 = vsel %vm1892, 4294967295, 65535
    %v1895 = vsel %vm1893, %v1894, 0
    %v1897 = vand.u32 %v1497, %v1895
    %1899 = vmatprep.subr.bf16.mxu0 0
    %1900 = vmatpush1.bf16.msra.mxu0 %v1488
    %1901 = vmatprep.subr.bf16.mxu0 0
    %1902 = vmatpush1.bf16.msra.mxu0 %v1489
    %1903 = vmatprep.subr.bf16.mxu0 0
    %1904 = vmatpush1.bf16.msra.mxu0 %v1490
    %1905 = vmatprep.subr.bf16.mxu0 0
    %1906 = vmatpush1.bf16.msra.mxu0 %v1491
    %1907 = vmatprep.subr.bf16.mxu0 0
    %1908 = vmatpush1.bf16.msra.mxu0 %v1492
    %1909 = vmatprep.subr.bf16.mxu0 0
    %1910 = vmatpush1.bf16.msra.mxu0 %v1493
    %1911 = vmatprep.subr.bf16.mxu0 0
    %1912 = vmatpush1.bf16.msra.mxu0 %v1494
    %1913 = vmatprep.subr.bf16.mxu0 0
    %1914 = vmatpush1.bf16.msra.mxu0 %v1495
    %1915 = vmatprep.subr.bf16.mxu0 0
    %1916 = vmatpush1.bf16.msra.mxu0 %v1496
    %1917 = vmatprep.subr.bf16.mxu0 0
    %1918 = vmatpush1.bf16.msra.mxu0 %v1897
    %1919 = vmatprep.subr.bf16.mxu0 0
    %1920 = vmatpush1.bf16.msra.mxu0 0
    %1921 = vmatprep.subr.bf16.mxu0 0
    %1922 = vmatpush1.bf16.msra.mxu0 0
    %1923 = vmatprep.subr.bf16.mxu0 0
    %1924 = vmatpush1.bf16.msra.mxu0 0
    %1925 = vmatprep.subr.bf16.mxu0 0
    %1926 = vmatpush1.bf16.msra.mxu0 0
    %1927 = vmatprep.subr.bf16.mxu0 0
    %1928 = vmatpush1.bf16.msra.mxu0 0
    %1929 = vmatprep.subr.bf16.mxu0 0
    %1930 = vmatpush1.bf16.msra.mxu0 0
    %1931 = vmatprep.mubr.bf16.mxu0 %v1509
    %1932 = vmatmul.mubr.bf16.gmra.mrb[0].mxu0 %v1066
    %v1933 = vpop.f32.mrb[0].mxu0
    %v1934 = vadd.f32 %v296, %v1933
    %v1935 = vpop.f32.mrb[0].mxu0
    %v1936 = vpop.f32.mrb[0].mxu0
    %v1937 = vadd.f32 %v296, %v1936
    %v1938 = vpop.f32.mrb[0].mxu0
    %1939 = vmatprep.mubr.bf16.mxu0 %v1512
    %1940 = vmatmul.mubr.bf16.gmra.mrb[0].mxu0 %v1068
    %v1941 = vpop.f32.mrb[0].mxu0
    %v1942 = vadd.f32 %v296, %v1941
    %v1943 = vpop.f32.mrb[0].mxu0
    %v1944 = vpop.f32.mrb[0].mxu0
    %v1945 = vadd.f32 %v296, %v1944
    %v1946 = vpop.f32.mrb[0].mxu0
    %1947 = vmatprep.mubr.bf16.mxu0 %v1515
    %1948 = vmatmul.mubr.bf16.gmra.mrb[0].mxu0 %v1070
    %v1949 = vpop.f32.mrb[0].mxu0
    %v1950 = vadd.f32 %v296, %v1949
    %v1951 = vpop.f32.mrb[0].mxu0
    %v1952 = vpop.f32.mrb[0].mxu0
    %v1953 = vadd.f32 %v296, %v1952
    %v1954 = vpop.f32.mrb[0].mxu0
    %1955 = vmatprep.mubr.bf16.mxu0 %v1518
    %1956 = vmatmul.mubr.bf16.gmra.mrb[0].mxu0 %v1072
    %v1957 = vpop.f32.mrb[0].mxu0
    %v1958 = vadd.f32 %v296, %v1957
    %v1959 = vpop.f32.mrb[0].mxu0
    %v1960 = vpop.f32.mrb[0].mxu0
    %v1961 = vadd.f32 %v296, %v1960
    %v1962 = vpop.f32.mrb[0].mxu0
    %1963 = vmatprep.mubr.bf16.mxu0 %v1521
    %1964 = vmatmul.mubr.bf16.gmra.mrb[0].mxu0 %v1074
    %v1965 = vpop.f32.mrb[0].mxu0
    %v1966 = vadd.f32 %v296, %v1965
    %v1967 = vpop.f32.mrb[0].mxu0
    %v1968 = vpop.f32.mrb[0].mxu0
    %v1969 = vadd.f32 %v296, %v1968
    %v1970 = vpop.f32.mrb[0].mxu0
    %1971 = vmatprep.mubr.bf16.mxu0 %v1524
    %1972 = vmatmul.mubr.bf16.gmra.mrb[0].mxu0 %v1076
    %v1973 = vpop.f32.mrb[0].mxu0
    %v1974 = vadd.f32 %v296, %v1973
    %v1975 = vpop.f32.mrb[0].mxu0
    %v1976 = vpop.f32.mrb[0].mxu0
    %v1977 = vadd.f32 %v296, %v1976
    %v1978 = vpop.f32.mrb[0].mxu0
    %1979 = vmatprep.mubr.bf16.mxu0 %v1527
    %1980 = vmatmul.mubr.bf16.gmra.mrb[0].mxu0 %v1078
    %v1981 = vpop.f32.mrb[0].mxu0
    %v1982 = vadd.f32 %v296, %v1981
    %v1983 = vpop.f32.mrb[0].mxu0
    %v1984 = vpop.f32.mrb[0].mxu0
    %v1985 = vadd.f32 %v296, %v1984
    %v1986 = vpop.f32.mrb[0].mxu0
    %1987 = vmatprep.mubr.bf16.mxu0 %v1530
    %1988 = vmatmul.mubr.bf16.gmra.mrb[0].mxu0 %v1080
    %v1989 = vpop.f32.mrb[0].mxu0
    %v1990 = vadd.f32 %v296, %v1989
    %v1991 = vpop.f32.mrb[0].mxu0
    %v1992 = vpop.f32.mrb[0].mxu0
    %v1993 = vadd.f32 %v296, %v1992
    %v1994 = vpop.f32.mrb[0].mxu0
    %1995 = vmatprep.mubr.bf16.mxu0 %v1533
    %1996 = vmatmul.mubr.bf16.gmra.mrb[0].mxu0 %v1082
    %v1997 = vpop.f32.mrb[0].mxu0
    %v1998 = vadd.f32 %v296, %v1997
    %v1999 = vpop.f32.mrb[0].mxu0
    %v2000 = vpop.f32.mrb[0].mxu0
    %v2001 = vadd.f32 %v296, %v2000
    %v2002 = vpop.f32.mrb[0].mxu0
    %2003 = vmatprep.mubr.bf16.mxu0 %v1536
    %2004 = vmatmul.mubr.bf16.gmra.mrb[0].mxu0 %v1084
    %v2005 = vpop.f32.mrb[0].mxu0
    %v2006 = vadd.f32 %v296, %v2005
    %v2007 = vpop.f32.mrb[0].mxu0
    %v2008 = vpop.f32.mrb[0].mxu0
    %v2009 = vadd.f32 %v296, %v2008
    %v2010 = vpop.f32.mrb[0].mxu0
    %2011 = vmatprep.mubr.bf16.mxu0 %v1539
    %2012 = vmatmul.mubr.bf16.gmra.mrb[0].mxu0 %v1086
    %v2013 = vpop.f32.mrb[0].mxu0
    %v2014 = vadd.f32 %v296, %v2013
    %v2015 = vpop.f32.mrb[0].mxu0
    %v2016 = vpop.f32.mrb[0].mxu0
    %v2017 = vadd.f32 %v296, %v2016
    %v2018 = vpop.f32.mrb[0].mxu0
    %2019 = vmatprep.mubr.bf16.mxu0 %v1542
    %2020 = vmatmul.mubr.bf16.gmra.mrb[0].mxu0 %v1088
    %v2021 = vpop.f32.mrb[0].mxu0
    %v2022 = vadd.f32 %v296, %v2021
    %v2023 = vpop.f32.mrb[0].mxu0
    %v2024 = vpop.f32.mrb[0].mxu0
    %v2025 = vadd.f32 %v296, %v2024
    %v2026 = vpop.f32.mrb[0].mxu0
    %2027 = vmatprep.mubr.bf16.mxu0 %v1545
    %2028 = vmatmul.mubr.bf16.gmra.mrb[0].mxu0 %v1090
    %v2029 = vpop.f32.mrb[0].mxu0
    %v2030 = vadd.f32 %v296, %v2029
    %v2031 = vpop.f32.mrb[0].mxu0
    %v2032 = vpop.f32.mrb[0].mxu0
    %v2033 = vadd.f32 %v296, %v2032
    %v2034 = vpop.f32.mrb[0].mxu0
    %2035 = vmatprep.mubr.bf16.mxu0 %v1548
    %2036 = vmatmul.mubr.bf16.gmra.mrb[0].mxu0 %v1092
    %v2037 = vpop.f32.mrb[0].mxu0
    %v2038 = vadd.f32 %v296, %v2037
    %v2039 = vpop.f32.mrb[0].mxu0
    %v2040 = vpop.f32.mrb[0].mxu0
    %v2041 = vadd.f32 %v296, %v2040
    %v2042 = vpop.f32.mrb[0].mxu0
    %2043 = vmatprep.mubr.bf16.mxu0 %v1551
    %2044 = vmatmul.mubr.bf16.gmra.mrb[0].mxu0 %v1094
    %v2045 = vpop.f32.mrb[0].mxu0
    %v2046 = vadd.f32 %v296, %v2045
    %v2047 = vpop.f32.mrb[0].mxu0
    %v2048 = vpop.f32.mrb[0].mxu0
    %v2049 = vadd.f32 %v296, %v2048
    %v2050 = vpop.f32.mrb[0].mxu0
    %2051 = vmatprep.mubr.bf16.mxu0 %v1554
    %2052 = vmatmul.mubr.bf16.gmra.mrb[0].mxu0 %v1096
    %v2053 = vpop.f32.mrb[0].mxu0
    %v2054 = vadd.f32 %v296, %v2053
    %v2055 = vpop.f32.mrb[0].mxu0
    %v2056 = vpop.f32.mrb[0].mxu0
    %v2057 = vadd.f32 %v296, %v2056
    %v2058 = vpop.f32.mrb[0].mxu0
    %2059 = vmatprep.mubr.bf16.mxu0 %v1557
    %2060 = vmatmul.mubr.bf16.gmra.mrb[0].mxu0 %v1098
    %v2061 = vpop.f32.mrb[0].mxu0
    %v2062 = vadd.f32 %v296, %v2061
    %v2063 = vpop.f32.mrb[0].mxu0
    %v2064 = vpop.f32.mrb[0].mxu0
    %v2065 = vadd.f32 %v296, %v2064
    %v2066 = vpop.f32.mrb[0].mxu0
    %2067 = vmatprep.mubr.bf16.mxu0 %v1560
    %2068 = vmatmul.mubr.bf16.gmra.mrb[0].mxu0 %v1100
    %v2069 = vpop.f32.mrb[0].mxu0
    %v2070 = vadd.f32 %v296, %v2069
    %v2071 = vpop.f32.mrb[0].mxu0
    %v2072 = vpop.f32.mrb[0].mxu0
    %v2073 = vadd.f32 %v296, %v2072
    %v2074 = vpop.f32.mrb[0].mxu0
    %2075 = vmatprep.mubr.bf16.mxu0 %v1563
    %2076 = vmatmul.mubr.bf16.gmra.mrb[0].mxu0 %v1102
    %v2077 = vpop.f32.mrb[0].mxu0
    %v2078 = vadd.f32 %v296, %v2077
    %v2079 = vpop.f32.mrb[0].mxu0
    %v2080 = vpop.f32.mrb[0].mxu0
    %v2081 = vadd.f32 %v296, %v2080
    %v2082 = vpop.f32.mrb[0].mxu0
    %2083 = vmatprep.mubr.bf16.mxu0 %v1566
    %2084 = vmatmul.mubr.bf16.gmra.mrb[0].mxu0 %v1104
    %v2085 = vpop.f32.mrb[0].mxu0
    %v2086 = vadd.f32 %v296, %v2085
    %v2087 = vpop.f32.mrb[0].mxu0
    %v2088 = vpop.f32.mrb[0].mxu0
    %v2089 = vadd.f32 %v296, %v2088
    %v2090 = vpop.f32.mrb[0].mxu0
    %2091 = vmatprep.mubr.bf16.mxu0 %v1569
    %2092 = vmatmul.mubr.bf16.gmra.mrb[0].mxu0 %v1106
    %v2093 = vpop.f32.mrb[0].mxu0
    %v2094 = vadd.f32 %v296, %v2093
    %v2095 = vpop.f32.mrb[0].mxu0
    %v2096 = vpop.f32.mrb[0].mxu0
    %v2097 = vadd.f32 %v296, %v2096
    %v2098 = vpop.f32.mrb[0].mxu0
    %2099 = vmatprep.mubr.bf16.mxu0 %v1572
    %2100 = vmatmul.mubr.bf16.gmra.mrb[0].mxu0 %v1108
    %v2101 = vpop.f32.mrb[0].mxu0
    %v2102 = vadd.f32 %v296, %v2101
    %v2103 = vpop.f32.mrb[0].mxu0
    %v2104 = vpop.f32.mrb[0].mxu0
    %v2105 = vadd.f32 %v296, %v2104
    %v2106 = vpop.f32.mrb[0].mxu0
    %2107 = vmatprep.mubr.bf16.mxu0 %v1575
    %2108 = vmatmul.mubr.bf16.gmra.mrb[0].mxu0 %v1110
    %v2109 = vpop.f32.mrb[0].mxu0
    %v2110 = vadd.f32 %v296, %v2109
    %v2111 = vpop.f32.mrb[0].mxu0
    %v2112 = vpop.f32.mrb[0].mxu0
    %v2113 = vadd.f32 %v296, %v2112
    %v2114 = vpop.f32.mrb[0].mxu0
    %2115 = vmatprep.mubr.bf16.mxu0 %v1578
    %2116 = vmatmul.mubr.bf16.gmra.mrb[0].mxu0 %v1112
    %v2117 = vpop.f32.mrb[0].mxu0
    %v2118 = vadd.f32 %v296, %v2117
    %v2119 = vpop.f32.mrb[0].mxu0
    %v2120 = vpop.f32.mrb[0].mxu0
    %v2121 = vadd.f32 %v296, %v2120
    %v2122 = vpop.f32.mrb[0].mxu0
    %2123 = vmatprep.mubr.bf16.mxu0 %v1581
    %2124 = vmatmul.mubr.bf16.gmra.mrb[0].mxu0 %v1114
    %v2125 = vpop.f32.mrb[0].mxu0
    %v2126 = vadd.f32 %v296, %v2125
    %v2127 = vpop.f32.mrb[0].mxu0
    %v2128 = vpop.f32.mrb[0].mxu0
    %v2129 = vadd.f32 %v296, %v2128
    %v2130 = vpop.f32.mrb[0].mxu0
    %2131 = vmatprep.mubr.bf16.mxu0 %v1584
    %2132 = vmatmul.mubr.bf16.gmra.mrb[0].mxu0 %v1116
    %v2133 = vpop.f32.mrb[0].mxu0
    %v2134 = vadd.f32 %v296, %v2133
    %v2135 = vpop.f32.mrb[0].mxu0
    %v2136 = vpop.f32.mrb[0].mxu0
    %v2137 = vadd.f32 %v296, %v2136
    %v2138 = vpop.f32.mrb[0].mxu0
    %2139 = vmatprep.mubr.bf16.mxu0 %v1587
    %2140 = vmatmul.mubr.bf16.gmra.mrb[0].mxu0 %v1118
    %v2141 = vpop.f32.mrb[0].mxu0
    %v2142 = vadd.f32 %v296, %v2141
    %v2143 = vpop.f32.mrb[0].mxu0
    %v2144 = vpop.f32.mrb[0].mxu0
    %v2145 = vadd.f32 %v296, %v2144
    %v2146 = vpop.f32.mrb[0].mxu0
    %2147 = vmatprep.mubr.bf16.mxu0 %v1590
    %2148 = vmatmul.mubr.bf16.gmra.mrb[0].mxu0 %v1120
    %v2149 = vpop.f32.mrb[0].mxu0
    %v2150 = vadd.f32 %v296, %v2149
    %v2151 = vpop.f32.mrb[0].mxu0
    %v2152 = vpop.f32.mrb[0].mxu0
    %v2153 = vadd.f32 %v296, %v2152
    %v2154 = vpop.f32.mrb[0].mxu0
    %2155 = vmatprep.mubr.bf16.mxu0 %v1593
    %2156 = vmatmul.mubr.bf16.gmra.mrb[0].mxu0 %v1122
    %v2157 = vpop.f32.mrb[0].mxu0
    %v2158 = vadd.f32 %v296, %v2157
    %v2159 = vpop.f32.mrb[0].mxu0
    %v2160 = vpop.f32.mrb[0].mxu0
    %v2161 = vadd.f32 %v296, %v2160
    %v2162 = vpop.f32.mrb[0].mxu0
    %2163 = vmatprep.mubr.bf16.mxu0 %v1596
    %2164 = vmatmul.mubr.bf16.gmra.mrb[0].mxu0 %v1124
    %v2165 = vpop.f32.mrb[0].mxu0
    %v2166 = vadd.f32 %v296, %v2165
    %v2167 = vpop.f32.mrb[0].mxu0
    %v2168 = vpop.f32.mrb[0].mxu0
    %v2169 = vadd.f32 %v296, %v2168
    %v2170 = vpop.f32.mrb[0].mxu0
    %2171 = vmatprep.mubr.bf16.mxu0 %v1599
    %2172 = vmatmul.mubr.bf16.gmra.mrb[0].mxu0 %v1126
    %v2173 = vpop.f32.mrb[0].mxu0
    %v2174 = vadd.f32 %v296, %v2173
    %v2175 = vpop.f32.mrb[0].mxu0
    %v2176 = vpop.f32.mrb[0].mxu0
    %v2177 = vadd.f32 %v296, %v2176
    %v2178 = vpop.f32.mrb[0].mxu0
    %2179 = vmatprep.mubr.bf16.mxu0 %v1602
    %2180 = vmatmul.mubr.bf16.gmra.mrb[0].mxu0 %v1128
    %v2181 = vpop.f32.mrb[0].mxu0
    %v2182 = vadd.f32 %v296, %v2181
    %v2183 = vpop.f32.mrb[0].mxu0
    %v2184 = vpop.f32.mrb[0].mxu0
    %v2185 = vadd.f32 %v296, %v2184
    %v2186 = vpop.f32.mrb[0].mxu0
    %2187 = vmatprep.mubr.bf16.mxu0 %v1605
    %2188 = vmatmul.mubr.bf16.gmra.mrb[0].mxu0 %v1130
    %v2189 = vpop.f32.mrb[0].mxu0
    %v2190 = vadd.f32 %v296, %v2189
    %v2191 = vpop.f32.mrb[0].mxu0
    %v2192 = vpop.f32.mrb[0].mxu0
    %v2193 = vadd.f32 %v296, %v2192
    %v2194 = vpop.f32.mrb[0].mxu0
    %2195 = vmatprep.mubr.bf16.mxu0 %v1608
    %2196 = vmatmul.mubr.bf16.gmra.mrb[0].mxu0 %v1132
    %v2197 = vpop.f32.mrb[0].mxu0
    %v2198 = vadd.f32 %v296, %v2197
    %v2199 = vpop.f32.mrb[0].mxu0
    %v2200 = vpop.f32.mrb[0].mxu0
    %v2201 = vadd.f32 %v296, %v2200
    %v2202 = vpop.f32.mrb[0].mxu0
    %2203 = vmatprep.mubr.bf16.mxu0 %v1611
    %2204 = vmatmul.mubr.bf16.gmra.mrb[0].mxu0 %v1134
    %v2205 = vpop.f32.mrb[0].mxu0
    %v2206 = vadd.f32 %v296, %v2205
    %v2207 = vpop.f32.mrb[0].mxu0
    %v2208 = vpop.f32.mrb[0].mxu0
    %v2209 = vadd.f32 %v296, %v2208
    %v2210 = vpop.f32.mrb[0].mxu0
    %2211 = vmatprep.mubr.bf16.mxu0 %v1614
    %2212 = vmatmul.mubr.bf16.gmra.mrb[0].mxu0 %v1136
    %v2213 = vpop.f32.mrb[0].mxu0
    %v2214 = vadd.f32 %v296, %v2213
    %v2215 = vpop.f32.mrb[0].mxu0
    %v2216 = vpop.f32.mrb[0].mxu0
    %v2217 = vadd.f32 %v296, %v2216
    %v2218 = vpop.f32.mrb[0].mxu0
    %2219 = vmatprep.mubr.bf16.mxu0 %v1617
    %2220 = vmatmul.mubr.bf16.gmra.mrb[0].mxu0 %v1138
    %v2221 = vpop.f32.mrb[0].mxu0
    %v2222 = vadd.f32 %v296, %v2221
    %v2223 = vpop.f32.mrb[0].mxu0
    %v2224 = vpop.f32.mrb[0].mxu0
    %v2225 = vadd.f32 %v296, %v2224
    %v2226 = vpop.f32.mrb[0].mxu0
    %2227 = vmatprep.mubr.bf16.mxu0 %v1620
    %2228 = vmatmul.mubr.bf16.gmra.mrb[0].mxu0 %v1140
    %v2229 = vpop.f32.mrb[0].mxu0
    %v2230 = vadd.f32 %v296, %v2229
    %v2231 = vpop.f32.mrb[0].mxu0
    %v2232 = vpop.f32.mrb[0].mxu0
    %v2233 = vadd.f32 %v296, %v2232
    %v2234 = vpop.f32.mrb[0].mxu0
    %2235 = vmatprep.mubr.bf16.mxu0 %v1623
    %2236 = vmatmul.mubr.bf16.gmra.mrb[0].mxu0 %v1142
    %v2237 = vpop.f32.mrb[0].mxu0
    %v2238 = vadd.f32 %v296, %v2237
    %v2239 = vpop.f32.mrb[0].mxu0
    %v2240 = vpop.f32.mrb[0].mxu0
    %v2241 = vadd.f32 %v296, %v2240
    %v2242 = vpop.f32.mrb[0].mxu0
    %2243 = vmatprep.mubr.bf16.mxu0 %v1626
    %2244 = vmatmul.mubr.bf16.gmra.mrb[0].mxu0 %v1144
    %v2245 = vpop.f32.mrb[0].mxu0
    %v2246 = vadd.f32 %v296, %v2245
    %v2247 = vpop.f32.mrb[0].mxu0
    %v2248 = vpop.f32.mrb[0].mxu0
    %v2249 = vadd.f32 %v296, %v2248
    %v2250 = vpop.f32.mrb[0].mxu0
    %2251 = vmatprep.mubr.bf16.mxu0 %v1629
    %2252 = vmatmul.mubr.bf16.gmra.mrb[0].mxu0 %v1146
    %v2253 = vpop.f32.mrb[0].mxu0
    %v2254 = vadd.f32 %v296, %v2253
    %v2255 = vpop.f32.mrb[0].mxu0
    %v2256 = vpop.f32.mrb[0].mxu0
    %v2257 = vadd.f32 %v296, %v2256
    %v2258 = vpop.f32.mrb[0].mxu0
    %2259 = vmatprep.mubr.bf16.mxu0 %v1632
    %2260 = vmatmul.mubr.bf16.gmra.mrb[0].mxu0 %v1148
    %v2261 = vpop.f32.mrb[0].mxu0
    %v2262 = vadd.f32 %v296, %v2261
    %v2263 = vpop.f32.mrb[0].mxu0
    %v2264 = vpop.f32.mrb[0].mxu0
    %v2265 = vadd.f32 %v296, %v2264
    %v2266 = vpop.f32.mrb[0].mxu0
    %2267 = vmatprep.mubr.bf16.mxu0 %v1635
    %2268 = vmatmul.mubr.bf16.gmra.mrb[0].mxu0 %v1150
    %v2269 = vpop.f32.mrb[0].mxu0
    %v2270 = vadd.f32 %v296, %v2269
    %v2271 = vpop.f32.mrb[0].mxu0
    %v2272 = vpop.f32.mrb[0].mxu0
    %v2273 = vadd.f32 %v296, %v2272
    %v2274 = vpop.f32.mrb[0].mxu0
    %2275 = vmatprep.mubr.bf16.mxu0 %v1638
    %2276 = vmatmul.mubr.bf16.gmra.mrb[0].mxu0 %v1152
    %v2277 = vpop.f32.mrb[0].mxu0
    %v2278 = vadd.f32 %v296, %v2277
    %v2279 = vpop.f32.mrb[0].mxu0
    %v2280 = vpop.f32.mrb[0].mxu0
    %v2281 = vadd.f32 %v296, %v2280
    %v2282 = vpop.f32.mrb[0].mxu0
    %2283 = vmatprep.mubr.bf16.mxu0 %v1641
    %2284 = vmatmul.mubr.bf16.gmra.mrb[0].mxu0 %v1154
    %v2285 = vpop.f32.mrb[0].mxu0
    %v2286 = vadd.f32 %v296, %v2285
    %v2287 = vpop.f32.mrb[0].mxu0
    %v2288 = vpop.f32.mrb[0].mxu0
    %v2289 = vadd.f32 %v296, %v2288
    %v2290 = vpop.f32.mrb[0].mxu0
    %2291 = vmatprep.mubr.bf16.mxu0 %v1644
    %2292 = vmatmul.mubr.bf16.gmra.mrb[0].mxu0 %v1156
    %v2293 = vpop.f32.mrb[0].mxu0
    %v2294 = vadd.f32 %v296, %v2293
    %v2295 = vpop.f32.mrb[0].mxu0
    %v2296 = vpop.f32.mrb[0].mxu0
    %v2297 = vadd.f32 %v296, %v2296
    %v2298 = vpop.f32.mrb[0].mxu0
    %2299 = vmatprep.mubr.bf16.mxu0 %v1647
    %2300 = vmatmul.mubr.bf16.gmra.mrb[0].mxu0 %v1158
    %v2301 = vpop.f32.mrb[0].mxu0
    %v2302 = vadd.f32 %v296, %v2301
    %v2303 = vpop.f32.mrb[0].mxu0
    %v2304 = vpop.f32.mrb[0].mxu0
    %v2305 = vadd.f32 %v296, %v2304
    %v2306 = vpop.f32.mrb[0].mxu0
    %2307 = vmatprep.mubr.bf16.mxu0 %v1650
    %2308 = vmatmul.mubr.bf16.gmra.mrb[0].mxu0 %v1160
    %v2309 = vpop.f32.mrb[0].mxu0
    %v2310 = vadd.f32 %v296, %v2309
    %v2311 = vpop.f32.mrb[0].mxu0
    %v2312 = vpop.f32.mrb[0].mxu0
    %v2313 = vadd.f32 %v296, %v2312
    %v2314 = vpop.f32.mrb[0].mxu0
    %2315 = vmatprep.mubr.bf16.mxu0 %v1653
    %2316 = vmatmul.mubr.bf16.gmra.mrb[0].mxu0 %v1162
    %v2317 = vpop.f32.mrb[0].mxu0
    %v2318 = vadd.f32 %v296, %v2317
    %v2319 = vpop.f32.mrb[0].mxu0
    %v2320 = vpop.f32.mrb[0].mxu0
    %v2321 = vadd.f32 %v296, %v2320
    %v2322 = vpop.f32.mrb[0].mxu0
    %2323 = vmatprep.mubr.bf16.mxu0 %v1656
    %2324 = vmatmul.mubr.bf16.gmra.mrb[0].mxu0 %v1164
    %v2325 = vpop.f32.mrb[0].mxu0
    %v2326 = vadd.f32 %v296, %v2325
    %v2327 = vpop.f32.mrb[0].mxu0
    %v2328 = vpop.f32.mrb[0].mxu0
    %v2329 = vadd.f32 %v296, %v2328
    %v2330 = vpop.f32.mrb[0].mxu0
    %2331 = vmatprep.mubr.bf16.mxu0 %v1659
    %2332 = vmatmul.mubr.bf16.gmra.mrb[0].mxu0 %v1166
    %v2333 = vpop.f32.mrb[0].mxu0
    %v2334 = vadd.f32 %v296, %v2333
    %v2335 = vpop.f32.mrb[0].mxu0
    %v2336 = vpop.f32.mrb[0].mxu0
    %v2337 = vadd.f32 %v296, %v2336
    %v2338 = vpop.f32.mrb[0].mxu0
    %2339 = vmatprep.mubr.bf16.mxu0 %v1662
    %2340 = vmatmul.mubr.bf16.gmra.mrb[0].mxu0 %v1168
    %v2341 = vpop.f32.mrb[0].mxu0
    %v2342 = vadd.f32 %v296, %v2341
    %v2343 = vpop.f32.mrb[0].mxu0
    %v2344 = vpop.f32.mrb[0].mxu0
    %v2345 = vadd.f32 %v296, %v2344
    %v2346 = vpop.f32.mrb[0].mxu0
    %2347 = vmatprep.mubr.bf16.mxu0 %v1665
    %2348 = vmatmul.mubr.bf16.gmra.mrb[0].mxu0 %v1170
    %v2349 = vpop.f32.mrb[0].mxu0
    %v2350 = vadd.f32 %v296, %v2349
    %v2351 = vpop.f32.mrb[0].mxu0
    %v2352 = vpop.f32.mrb[0].mxu0
    %v2353 = vadd.f32 %v296, %v2352
    %v2354 = vpop.f32.mrb[0].mxu0
    %2355 = vmatprep.mubr.bf16.mxu0 %v1668
    %2356 = vmatmul.mubr.bf16.gmra.mrb[0].mxu0 %v1172
    %v2357 = vpop.f32.mrb[0].mxu0
    %v2358 = vadd.f32 %v296, %v2357
    %v2359 = vpop.f32.mrb[0].mxu0
    %v2360 = vpop.f32.mrb[0].mxu0
    %v2361 = vadd.f32 %v296, %v2360
    %v2362 = vpop.f32.mrb[0].mxu0
    %2363 = vmatprep.mubr.bf16.mxu0 %v1671
    %2364 = vmatmul.mubr.bf16.gmra.mrb[0].mxu0 %v1174
    %v2365 = vpop.f32.mrb[0].mxu0
    %v2366 = vadd.f32 %v296, %v2365
    %v2367 = vpop.f32.mrb[0].mxu0
    %v2368 = vpop.f32.mrb[0].mxu0
    %v2369 = vadd.f32 %v296, %v2368
    %v2370 = vpop.f32.mrb[0].mxu0
    %2371 = vmatprep.mubr.bf16.mxu0 %v1674
    %2372 = vmatmul.mubr.bf16.gmra.mrb[0].mxu0 %v1176
    %v2373 = vpop.f32.mrb[0].mxu0
    %v2374 = vadd.f32 %v296, %v2373
    %v2375 = vpop.f32.mrb[0].mxu0
    %v2376 = vpop.f32.mrb[0].mxu0
    %v2377 = vadd.f32 %v296, %v2376
    %v2378 = vpop.f32.mrb[0].mxu0
    %2379 = vmatprep.mubr.bf16.mxu0 %v1677
    %2380 = vmatmul.mubr.bf16.gmra.mrb[0].mxu0 %v1178
    %v2381 = vpop.f32.mrb[0].mxu0
    %v2382 = vadd.f32 %v296, %v2381
    %v2383 = vpop.f32.mrb[0].mxu0
    %v2384 = vpop.f32.mrb[0].mxu0
    %v2385 = vadd.f32 %v296, %v2384
    %v2386 = vpop.f32.mrb[0].mxu0
    %2387 = vmatprep.mubr.bf16.mxu0 %v1680
    %2388 = vmatmul.mubr.bf16.gmra.mrb[0].mxu0 %v1180
    %v2389 = vpop.f32.mrb[0].mxu0
    %v2390 = vadd.f32 %v296, %v2389
    %v2391 = vpop.f32.mrb[0].mxu0
    %v2392 = vpop.f32.mrb[0].mxu0
    %v2393 = vadd.f32 %v296, %v2392
    %v2394 = vpop.f32.mrb[0].mxu0
    %2395 = vmatprep.mubr.bf16.mxu0 %v1683
    %2396 = vmatmul.mubr.bf16.gmra.mrb[0].mxu0 %v1182
    %v2397 = vpop.f32.mrb[0].mxu0
    %v2398 = vadd.f32 %v296, %v2397
    %v2399 = vpop.f32.mrb[0].mxu0
    %v2400 = vpop.f32.mrb[0].mxu0
    %v2401 = vadd.f32 %v296, %v2400
    %v2402 = vpop.f32.mrb[0].mxu0
    %2403 = vmatprep.mubr.bf16.mxu0 %v1686
    %2404 = vmatmul.mubr.bf16.gmra.mrb[0].mxu0 %v1184
    %v2405 = vpop.f32.mrb[0].mxu0
    %v2406 = vadd.f32 %v296, %v2405
    %v2407 = vpop.f32.mrb[0].mxu0
    %v2408 = vpop.f32.mrb[0].mxu0
    %v2409 = vadd.f32 %v296, %v2408
    %v2410 = vpop.f32.mrb[0].mxu0
    %2411 = vmatprep.mubr.bf16.mxu0 %v1689
    %2412 = vmatmul.mubr.bf16.gmra.mrb[0].mxu0 %v1186
    %v2413 = vpop.f32.mrb[0].mxu0
    %v2414 = vadd.f32 %v296, %v2413
    %v2415 = vpop.f32.mrb[0].mxu0
    %v2416 = vpop.f32.mrb[0].mxu0
    %v2417 = vadd.f32 %v296, %v2416
    %v2418 = vpop.f32.mrb[0].mxu0
    %2419 = vmatprep.mubr.bf16.mxu0 %v1692
    %2420 = vmatmul.mubr.bf16.gmra.mrb[0].mxu0 %v1188
    %v2421 = vpop.f32.mrb[0].mxu0
    %v2422 = vadd.f32 %v296, %v2421
    %v2423 = vpop.f32.mrb[0].mxu0
    %v2424 = vpop.f32.mrb[0].mxu0
    %v2425 = vadd.f32 %v296, %v2424
    %v2426 = vpop.f32.mrb[0].mxu0
    %2427 = vmatprep.mubr.bf16.mxu0 %v1695
    %2428 = vmatmul.mubr.bf16.gmra.mrb[0].mxu0 %v1190
    %v2429 = vpop.f32.mrb[0].mxu0
    %v2430 = vadd.f32 %v296, %v2429
    %v2431 = vpop.f32.mrb[0].mxu0
    %v2432 = vpop.f32.mrb[0].mxu0
    %v2433 = vadd.f32 %v296, %v2432
    %v2434 = vpop.f32.mrb[0].mxu0
    %2435 = vmatprep.mubr.bf16.mxu0 %v1698
    %2436 = vmatmul.mubr.bf16.gmra.mrb[0].mxu0 %v1192
    %v2437 = vpop.f32.mrb[0].mxu0
    %v2438 = vadd.f32 %v296, %v2437
    %v2439 = vpop.f32.mrb[0].mxu0
    %v2440 = vpop.f32.mrb[0].mxu0
    %v2441 = vadd.f32 %v296, %v2440
    %v2442 = vpop.f32.mrb[0].mxu0
    %2443 = vmatprep.mubr.bf16.mxu0 %v1701
    %2444 = vmatmul.mubr.bf16.gmra.mrb[0].mxu0 %v1194
    %v2445 = vpop.f32.mrb[0].mxu0
    %v2446 = vadd.f32 %v296, %v2445
    %v2447 = vpop.f32.mrb[0].mxu0
    %v2448 = vpop.f32.mrb[0].mxu0
    %v2449 = vadd.f32 %v296, %v2448
    %v2450 = vpop.f32.mrb[0].mxu0
    %2451 = vmatprep.mubr.bf16.mxu0 %v1704
    %2452 = vmatmul.mubr.bf16.gmra.mrb[0].mxu0 %v1196
    %v2453 = vpop.f32.mrb[0].mxu0
    %v2454 = vadd.f32 %v296, %v2453
    %v2455 = vpop.f32.mrb[0].mxu0
    %v2456 = vpop.f32.mrb[0].mxu0
    %v2457 = vadd.f32 %v296, %v2456
    %v2458 = vpop.f32.mrb[0].mxu0
    %2459 = vmatprep.mubr.bf16.mxu0 %v1707
    %2460 = vmatmul.mubr.bf16.gmra.mrb[0].mxu0 %v1198
    %v2461 = vpop.f32.mrb[0].mxu0
    %v2462 = vadd.f32 %v296, %v2461
    %v2463 = vpop.f32.mrb[0].mxu0
    %v2464 = vpop.f32.mrb[0].mxu0
    %v2465 = vadd.f32 %v296, %v2464
    %v2466 = vpop.f32.mrb[0].mxu0
    %2467 = vmatprep.mubr.bf16.mxu0 %v1710
    %2468 = vmatmul.mubr.bf16.gmra.mrb[0].mxu0 %v1200
    %v2469 = vpop.f32.mrb[0].mxu0
    %v2470 = vadd.f32 %v296, %v2469
    %v2471 = vpop.f32.mrb[0].mxu0
    %v2472 = vpop.f32.mrb[0].mxu0
    %v2473 = vadd.f32 %v296, %v2472
    %v2474 = vpop.f32.mrb[0].mxu0
    %2475 = vmatprep.mubr.bf16.mxu0 %v1713
    %2476 = vmatmul.mubr.bf16.gmra.mrb[0].mxu0 %v1202
    %v2477 = vpop.f32.mrb[0].mxu0
    %v2478 = vadd.f32 %v296, %v2477
    %v2479 = vpop.f32.mrb[0].mxu0
    %v2480 = vpop.f32.mrb[0].mxu0
    %v2481 = vadd.f32 %v296, %v2480
    %v2482 = vpop.f32.mrb[0].mxu0
    %2483 = vmatprep.mubr.bf16.mxu0 %v1716
    %2484 = vmatmul.mubr.bf16.gmra.mrb[0].mxu0 %v1204
    %v2485 = vpop.f32.mrb[0].mxu0
    %v2486 = vadd.f32 %v296, %v2485
    %v2487 = vpop.f32.mrb[0].mxu0
    %v2488 = vpop.f32.mrb[0].mxu0
    %v2489 = vadd.f32 %v296, %v2488
    %v2490 = vpop.f32.mrb[0].mxu0
    %2491 = vmatprep.mubr.bf16.mxu0 %v1719
    %2492 = vmatmul.mubr.bf16.gmra.mrb[0].mxu0 %v1206
    %v2493 = vpop.f32.mrb[0].mxu0
    %v2494 = vadd.f32 %v296, %v2493
    %v2495 = vpop.f32.mrb[0].mxu0
    %v2496 = vpop.f32.mrb[0].mxu0
    %v2497 = vadd.f32 %v296, %v2496
    %v2498 = vpop.f32.mrb[0].mxu0
    %2499 = vmatprep.mubr.bf16.mxu0 %v1722
    %2500 = vmatmul.mubr.bf16.gmra.mrb[0].mxu0 %v1208
    %v2501 = vpop.f32.mrb[0].mxu0
    %v2502 = vadd.f32 %v296, %v2501
    %v2503 = vpop.f32.mrb[0].mxu0
    %v2504 = vpop.f32.mrb[0].mxu0
    %v2505 = vadd.f32 %v296, %v2504
    %v2506 = vpop.f32.mrb[0].mxu0
    %2507 = vmatprep.mubr.bf16.mxu0 %v1725
    %2508 = vmatmul.mubr.bf16.gmra.mrb[0].mxu0 %v1210
    %v2509 = vpop.f32.mrb[0].mxu0
    %v2510 = vadd.f32 %v296, %v2509
    %v2511 = vpop.f32.mrb[0].mxu0
    %v2512 = vpop.f32.mrb[0].mxu0
    %v2513 = vadd.f32 %v296, %v2512
    %v2514 = vpop.f32.mrb[0].mxu0
    %2515 = vmatprep.mubr.bf16.mxu0 %v1728
    %2516 = vmatmul.mubr.bf16.gmra.mrb[0].mxu0 %v1212
    %v2517 = vpop.f32.mrb[0].mxu0
    %v2518 = vadd.f32 %v296, %v2517
    %v2519 = vpop.f32.mrb[0].mxu0
    %v2520 = vpop.f32.mrb[0].mxu0
    %v2521 = vadd.f32 %v296, %v2520
    %v2522 = vpop.f32.mrb[0].mxu0
    %2523 = vmatprep.mubr.bf16.mxu0 %v1731
    %2524 = vmatmul.mubr.bf16.gmra.mrb[0].mxu0 %v1214
    %v2525 = vpop.f32.mrb[0].mxu0
    %v2526 = vadd.f32 %v296, %v2525
    %v2527 = vpop.f32.mrb[0].mxu0
    %v2528 = vpop.f32.mrb[0].mxu0
    %v2529 = vadd.f32 %v296, %v2528
    %v2530 = vpop.f32.mrb[0].mxu0
    %2531 = vmatprep.mubr.bf16.mxu0 %v1734
    %2532 = vmatmul.mubr.bf16.gmra.mrb[0].mxu0 %v1216
    %v2533 = vpop.f32.mrb[0].mxu0
    %v2534 = vadd.f32 %v296, %v2533
    %v2535 = vpop.f32.mrb[0].mxu0
    %v2536 = vpop.f32.mrb[0].mxu0
    %v2537 = vadd.f32 %v296, %v2536
    %v2538 = vpop.f32.mrb[0].mxu0
    %2539 = vmatprep.mubr.bf16.mxu0 %v1737
    %2540 = vmatmul.mubr.bf16.gmra.mrb[0].mxu0 %v1218
    %v2541 = vpop.f32.mrb[0].mxu0
    %v2542 = vadd.f32 %v296, %v2541
    %v2543 = vpop.f32.mrb[0].mxu0
    %v2544 = vpop.f32.mrb[0].mxu0
    %v2545 = vadd.f32 %v296, %v2544
    %v2546 = vpop.f32.mrb[0].mxu0
    %2547 = vmatprep.mubr.bf16.mxu0 %v1740
    %2548 = vmatmul.mubr.bf16.gmra.mrb[0].mxu0 %v1220
    %v2549 = vpop.f32.mrb[0].mxu0
    %v2550 = vadd.f32 %v296, %v2549
    %v2551 = vpop.f32.mrb[0].mxu0
    %v2552 = vpop.f32.mrb[0].mxu0
    %v2553 = vadd.f32 %v296, %v2552
    %v2554 = vpop.f32.mrb[0].mxu0
    %2555 = vmatprep.mubr.bf16.mxu0 %v1743
    %2556 = vmatmul.mubr.bf16.gmra.mrb[0].mxu0 %v1222
    %v2557 = vpop.f32.mrb[0].mxu0
    %v2558 = vadd.f32 %v296, %v2557
    %v2559 = vpop.f32.mrb[0].mxu0
    %v2560 = vpop.f32.mrb[0].mxu0
    %v2561 = vadd.f32 %v296, %v2560
    %v2562 = vpop.f32.mrb[0].mxu0
    %2563 = vmatprep.mubr.bf16.mxu0 %v1746
    %2564 = vmatmul.mubr.bf16.gmra.mrb[0].mxu0 %v1224
    %v2565 = vpop.f32.mrb[0].mxu0
    %v2566 = vadd.f32 %v296, %v2565
    %v2567 = vpop.f32.mrb[0].mxu0
    %v2568 = vpop.f32.mrb[0].mxu0
    %v2569 = vadd.f32 %v296, %v2568
    %v2570 = vpop.f32.mrb[0].mxu0
    %2571 = vmatprep.mubr.bf16.mxu0 %v1749
    %2572 = vmatmul.mubr.bf16.gmra.mrb[0].mxu0 %v1226
    %v2573 = vpop.f32.mrb[0].mxu0
    %v2574 = vadd.f32 %v296, %v2573
    %v2575 = vpop.f32.mrb[0].mxu0
    %v2576 = vpop.f32.mrb[0].mxu0
    %v2577 = vadd.f32 %v296, %v2576
    %v2578 = vpop.f32.mrb[0].mxu0
    %2579 = vmatprep.mubr.bf16.mxu0 %v1752
    %2580 = vmatmul.mubr.bf16.gmra.mrb[0].mxu0 %v1228
    %v2581 = vpop.f32.mrb[0].mxu0
    %v2582 = vadd.f32 %v296, %v2581
    %v2583 = vpop.f32.mrb[0].mxu0
    %v2584 = vpop.f32.mrb[0].mxu0
    %v2585 = vadd.f32 %v296, %v2584
    %v2586 = vpop.f32.mrb[0].mxu0
    %2587 = vmatprep.mubr.bf16.mxu0 %v1755
    %2588 = vmatmul.mubr.bf16.gmra.mrb[0].mxu0 %v1230
    %v2589 = vpop.f32.mrb[0].mxu0
    %v2590 = vadd.f32 %v296, %v2589
    %v2591 = vpop.f32.mrb[0].mxu0
    %v2592 = vpop.f32.mrb[0].mxu0
    %v2593 = vadd.f32 %v296, %v2592
    %v2594 = vpop.f32.mrb[0].mxu0
    %2595 = vmatprep.mubr.bf16.mxu0 %v1758
    %2596 = vmatmul.mubr.bf16.gmra.mrb[0].mxu0 %v1232
    %v2597 = vpop.f32.mrb[0].mxu0
    %v2598 = vadd.f32 %v296, %v2597
    %v2599 = vpop.f32.mrb[0].mxu0
    %v2600 = vpop.f32.mrb[0].mxu0
    %v2601 = vadd.f32 %v296, %v2600
    %v2602 = vpop.f32.mrb[0].mxu0
    %2603 = vmatprep.mubr.bf16.mxu0 %v1761
    %2604 = vmatmul.mubr.bf16.gmra.mrb[0].mxu0 %v1234
    %v2605 = vpop.f32.mrb[0].mxu0
    %v2606 = vadd.f32 %v296, %v2605
    %v2607 = vpop.f32.mrb[0].mxu0
    %v2608 = vpop.f32.mrb[0].mxu0
    %v2609 = vadd.f32 %v296, %v2608
    %v2610 = vpop.f32.mrb[0].mxu0
    %2611 = vmatprep.mubr.bf16.mxu0 %v1764
    %2612 = vmatmul.mubr.bf16.gmra.mrb[0].mxu0 %v1236
    %v2613 = vpop.f32.mrb[0].mxu0
    %v2614 = vadd.f32 %v296, %v2613
    %v2615 = vpop.f32.mrb[0].mxu0
    %v2616 = vpop.f32.mrb[0].mxu0
    %v2617 = vadd.f32 %v296, %v2616
    %v2618 = vpop.f32.mrb[0].mxu0
    %2619 = vmatprep.mubr.bf16.mxu0 %v1767
    %2620 = vmatmul.mubr.bf16.gmra.mrb[0].mxu0 %v1238
    %v2621 = vpop.f32.mrb[0].mxu0
    %v2622 = vadd.f32 %v296, %v2621
    %v2623 = vpop.f32.mrb[0].mxu0
    %v2624 = vpop.f32.mrb[0].mxu0
    %v2625 = vadd.f32 %v296, %v2624
    %v2626 = vpop.f32.mrb[0].mxu0
    %2627 = vmatprep.mubr.bf16.mxu0 %v1770
    %2628 = vmatmul.mubr.bf16.gmra.mrb[0].mxu0 %v1240
    %v2629 = vpop.f32.mrb[0].mxu0
    %v2630 = vadd.f32 %v296, %v2629
    %v2631 = vpop.f32.mrb[0].mxu0
    %v2632 = vpop.f32.mrb[0].mxu0
    %v2633 = vadd.f32 %v296, %v2632
    %v2634 = vpop.f32.mrb[0].mxu0
    %2635 = vmatprep.mubr.bf16.mxu0 %v1773
    %2636 = vmatmul.mubr.bf16.gmra.mrb[0].mxu0 %v1242
    %v2637 = vpop.f32.mrb[0].mxu0
    %v2638 = vadd.f32 %v296, %v2637
    %v2639 = vpop.f32.mrb[0].mxu0
    %v2640 = vpop.f32.mrb[0].mxu0
    %v2641 = vadd.f32 %v296, %v2640
    %v2642 = vpop.f32.mrb[0].mxu0
    %2643 = vmatprep.mubr.bf16.mxu0 %v1776
    %2644 = vmatmul.mubr.bf16.gmra.mrb[0].mxu0 %v1244
    %v2645 = vpop.f32.mrb[0].mxu0
    %v2646 = vadd.f32 %v296, %v2645
    %v2647 = vpop.f32.mrb[0].mxu0
    %v2648 = vpop.f32.mrb[0].mxu0
    %v2649 = vadd.f32 %v296, %v2648
    %v2650 = vpop.f32.mrb[0].mxu0
    %2651 = vmatprep.mubr.bf16.mxu0 %v1779
    %2652 = vmatmul.mubr.bf16.gmra.mrb[0].mxu0 %v1246
    %v2653 = vpop.f32.mrb[0].mxu0
    %v2654 = vadd.f32 %v296, %v2653
    %v2655 = vpop.f32.mrb[0].mxu0
    %v2656 = vpop.f32.mrb[0].mxu0
    %v2657 = vadd.f32 %v296, %v2656
    %v2658 = vpop.f32.mrb[0].mxu0
    %2659 = vmatprep.mubr.bf16.mxu0 %v1782
    %2660 = vmatmul.mubr.bf16.gmra.mrb[0].mxu0 %v1248
    %v2661 = vpop.f32.mrb[0].mxu0
    %v2662 = vadd.f32 %v296, %v2661
    %v2663 = vpop.f32.mrb[0].mxu0
    %v2664 = vpop.f32.mrb[0].mxu0
    %v2665 = vadd.f32 %v296, %v2664
    %v2666 = vpop.f32.mrb[0].mxu0
    %2667 = vmatprep.mubr.bf16.mxu0 %v1785
    %2668 = vmatmul.mubr.bf16.gmra.mrb[0].mxu0 %v1250
    %v2669 = vpop.f32.mrb[0].mxu0
    %v2670 = vadd.f32 %v296, %v2669
    %v2671 = vpop.f32.mrb[0].mxu0
    %v2672 = vpop.f32.mrb[0].mxu0
    %v2673 = vadd.f32 %v296, %v2672
    %v2674 = vpop.f32.mrb[0].mxu0
    %2675 = vmatprep.mubr.bf16.mxu0 %v1788
    %2676 = vmatmul.mubr.bf16.gmra.mrb[0].mxu0 %v1252
    %v2677 = vpop.f32.mrb[0].mxu0
    %v2678 = vadd.f32 %v296, %v2677
    %v2679 = vpop.f32.mrb[0].mxu0
    %v2680 = vpop.f32.mrb[0].mxu0
    %v2681 = vadd.f32 %v296, %v2680
    %v2682 = vpop.f32.mrb[0].mxu0
    %2683 = vmatprep.mubr.bf16.mxu0 %v1791
    %2684 = vmatmul.mubr.bf16.gmra.mrb[0].mxu0 %v1254
    %v2685 = vpop.f32.mrb[0].mxu0
    %v2686 = vadd.f32 %v296, %v2685
    %v2687 = vpop.f32.mrb[0].mxu0
    %v2688 = vpop.f32.mrb[0].mxu0
    %v2689 = vadd.f32 %v296, %v2688
    %v2690 = vpop.f32.mrb[0].mxu0
    %2691 = vmatprep.mubr.bf16.mxu0 %v1794
    %2692 = vmatmul.mubr.bf16.gmra.mrb[0].mxu0 %v1256
    %v2693 = vpop.f32.mrb[0].mxu0
    %v2694 = vadd.f32 %v296, %v2693
    %v2695 = vpop.f32.mrb[0].mxu0
    %v2696 = vpop.f32.mrb[0].mxu0
    %v2697 = vadd.f32 %v296, %v2696
    %v2698 = vpop.f32.mrb[0].mxu0
    %2699 = vmatprep.mubr.bf16.mxu0 %v1797
    %2700 = vmatmul.mubr.bf16.gmra.mrb[0].mxu0 %v1258
    %v2701 = vpop.f32.mrb[0].mxu0
    %v2702 = vadd.f32 %v296, %v2701
    %v2703 = vpop.f32.mrb[0].mxu0
    %v2704 = vpop.f32.mrb[0].mxu0
    %v2705 = vadd.f32 %v296, %v2704
    %v2706 = vpop.f32.mrb[0].mxu0
    %2707 = vmatprep.mubr.bf16.mxu0 %v1800
    %2708 = vmatmul.mubr.bf16.gmra.mrb[0].mxu0 %v1260
    %v2709 = vpop.f32.mrb[0].mxu0
    %v2710 = vadd.f32 %v296, %v2709
    %v2711 = vpop.f32.mrb[0].mxu0
    %v2712 = vpop.f32.mrb[0].mxu0
    %v2713 = vadd.f32 %v296, %v2712
    %v2714 = vpop.f32.mrb[0].mxu0
    %2715 = vmatprep.mubr.bf16.mxu0 %v1803
    %2716 = vmatmul.mubr.bf16.gmra.mrb[0].mxu0 %v1262
    %v2717 = vpop.f32.mrb[0].mxu0
    %v2718 = vadd.f32 %v296, %v2717
    %v2719 = vpop.f32.mrb[0].mxu0
    %v2720 = vpop.f32.mrb[0].mxu0
    %v2721 = vadd.f32 %v296, %v2720
    %v2722 = vpop.f32.mrb[0].mxu0
    %2723 = vmatprep.mubr.bf16.mxu0 %v1806
    %2724 = vmatmul.mubr.bf16.gmra.mrb[0].mxu0 %v1264
    %v2725 = vpop.f32.mrb[0].mxu0
    %v2726 = vadd.f32 %v296, %v2725
    %v2727 = vpop.f32.mrb[0].mxu0
    %v2728 = vpop.f32.mrb[0].mxu0
    %v2729 = vadd.f32 %v296, %v2728
    %v2730 = vpop.f32.mrb[0].mxu0
    %2731 = vmatprep.mubr.bf16.mxu0 %v1809
    %2732 = vmatmul.mubr.bf16.gmra.mrb[0].mxu0 %v1266
    %v2733 = vpop.f32.mrb[0].mxu0
    %v2734 = vadd.f32 %v296, %v2733
    %v2735 = vpop.f32.mrb[0].mxu0
    %v2736 = vpop.f32.mrb[0].mxu0
    %v2737 = vadd.f32 %v296, %v2736
    %v2738 = vpop.f32.mrb[0].mxu0
    %2739 = vmatprep.mubr.bf16.mxu0 %v1812
    %2740 = vmatmul.mubr.bf16.gmra.mrb[0].mxu0 %v1268
    %v2741 = vpop.f32.mrb[0].mxu0
    %v2742 = vadd.f32 %v296, %v2741
    %v2743 = vpop.f32.mrb[0].mxu0
    %v2744 = vpop.f32.mrb[0].mxu0
    %v2745 = vadd.f32 %v296, %v2744
    %v2746 = vpop.f32.mrb[0].mxu0
    %2747 = vmatprep.mubr.bf16.mxu0 %v1815
    %2748 = vmatmul.mubr.bf16.gmra.mrb[0].mxu0 %v1270
    %v2749 = vpop.f32.mrb[0].mxu0
    %v2750 = vadd.f32 %v296, %v2749
    %v2751 = vpop.f32.mrb[0].mxu0
    %v2752 = vpop.f32.mrb[0].mxu0
    %v2753 = vadd.f32 %v296, %v2752
    %v2754 = vpop.f32.mrb[0].mxu0
    %2755 = vmatprep.mubr.bf16.mxu0 %v1818
    %2756 = vmatmul.mubr.bf16.gmra.mrb[0].mxu0 %v1272
    %v2757 = vpop.f32.mrb[0].mxu0
    %v2758 = vadd.f32 %v296, %v2757
    %v2759 = vpop.f32.mrb[0].mxu0
    %v2760 = vpop.f32.mrb[0].mxu0
    %v2761 = vadd.f32 %v296, %v2760
    %v2762 = vpop.f32.mrb[0].mxu0
    %2763 = vmatprep.mubr.bf16.mxu0 %v1821
    %2764 = vmatmul.mubr.bf16.gmra.mrb[0].mxu0 %v1274
    %v2765 = vpop.f32.mrb[0].mxu0
    %v2766 = vadd.f32 %v296, %v2765
    %v2767 = vpop.f32.mrb[0].mxu0
    %v2768 = vpop.f32.mrb[0].mxu0
    %v2769 = vadd.f32 %v296, %v2768
    %v2770 = vpop.f32.mrb[0].mxu0
    %2771 = vmatprep.mubr.bf16.mxu0 %v1824
    %2772 = vmatmul.mubr.bf16.gmra.mrb[0].mxu0 %v1276
    %v2773 = vpop.f32.mrb[0].mxu0
    %v2774 = vadd.f32 %v296, %v2773
    %v2775 = vpop.f32.mrb[0].mxu0
    %v2776 = vpop.f32.mrb[0].mxu0
    %v2777 = vadd.f32 %v296, %v2776
    %v2778 = vpop.f32.mrb[0].mxu0
    %2779 = vmatprep.mubr.bf16.mxu0 %v1827
    %2780 = vmatmul.mubr.bf16.gmra.mrb[0].mxu0 %v1278
    %v2781 = vpop.f32.mrb[0].mxu0
    %v2782 = vadd.f32 %v296, %v2781
    %v2783 = vpop.f32.mrb[0].mxu0
    %v2784 = vpop.f32.mrb[0].mxu0
    %v2785 = vadd.f32 %v296, %v2784
    %v2786 = vpop.f32.mrb[0].mxu0
    %2787 = vmatprep.mubr.bf16.mxu0 %v1830
    %2788 = vmatmul.mubr.bf16.gmra.mrb[0].mxu0 %v1280
    %v2789 = vpop.f32.mrb[0].mxu0
    %v2790 = vadd.f32 %v296, %v2789
    %v2791 = vpop.f32.mrb[0].mxu0
    %v2792 = vpop.f32.mrb[0].mxu0
    %v2793 = vadd.f32 %v296, %v2792
    %v2794 = vpop.f32.mrb[0].mxu0
    %2795 = vmatprep.mubr.bf16.mxu0 %v1833
    %2796 = vmatmul.mubr.bf16.gmra.mrb[0].mxu0 %v1282
    %v2797 = vpop.f32.mrb[0].mxu0
    %v2798 = vadd.f32 %v296, %v2797
    %v2799 = vpop.f32.mrb[0].mxu0
    %v2800 = vpop.f32.mrb[0].mxu0
    %v2801 = vadd.f32 %v296, %v2800
    %v2802 = vpop.f32.mrb[0].mxu0
    %2803 = vmatprep.mubr.bf16.mxu0 %v1836
    %2804 = vmatmul.mubr.bf16.gmra.mrb[0].mxu0 %v1284
    %v2805 = vpop.f32.mrb[0].mxu0
    %v2806 = vadd.f32 %v296, %v2805
    %v2807 = vpop.f32.mrb[0].mxu0
    %v2808 = vpop.f32.mrb[0].mxu0
    %v2809 = vadd.f32 %v296, %v2808
    %v2810 = vpop.f32.mrb[0].mxu0
    %2811 = vmatprep.mubr.bf16.mxu0 %v1839
    %2812 = vmatmul.mubr.bf16.gmra.mrb[0].mxu0 %v1286
    %v2813 = vpop.f32.mrb[0].mxu0
    %v2814 = vadd.f32 %v296, %v2813
    %v2815 = vpop.f32.mrb[0].mxu0
    %v2816 = vpop.f32.mrb[0].mxu0
    %v2817 = vadd.f32 %v296, %v2816
    %v2818 = vpop.f32.mrb[0].mxu0
    %2819 = vmatprep.mubr.bf16.mxu0 %v1842
    %2820 = vmatmul.mubr.bf16.gmra.mrb[0].mxu0 %v1288
    %v2821 = vpop.f32.mrb[0].mxu0
    %v2822 = vadd.f32 %v296, %v2821
    %v2823 = vpop.f32.mrb[0].mxu0
    %v2824 = vpop.f32.mrb[0].mxu0
    %v2825 = vadd.f32 %v296, %v2824
    %v2826 = vpop.f32.mrb[0].mxu0
    %2827 = vmatprep.mubr.bf16.mxu0 %v1845
    %2828 = vmatmul.mubr.bf16.gmra.mrb[0].mxu0 %v1290
    %v2829 = vpop.f32.mrb[0].mxu0
    %v2830 = vadd.f32 %v296, %v2829
    %v2831 = vpop.f32.mrb[0].mxu0
    %v2832 = vpop.f32.mrb[0].mxu0
    %v2833 = vadd.f32 %v296, %v2832
    %v2834 = vpop.f32.mrb[0].mxu0
    %2835 = vmatprep.mubr.bf16.mxu0 %v1848
    %2836 = vmatmul.mubr.bf16.gmra.mrb[0].mxu0 %v1292
    %v2837 = vpop.f32.mrb[0].mxu0
    %v2838 = vadd.f32 %v296, %v2837
    %v2839 = vpop.f32.mrb[0].mxu0
    %v2840 = vpop.f32.mrb[0].mxu0
    %v2841 = vadd.f32 %v296, %v2840
    %v2842 = vpop.f32.mrb[0].mxu0
    %2843 = vmatprep.mubr.bf16.mxu0 %v1851
    %2844 = vmatmul.mubr.bf16.gmra.mrb[0].mxu0 %v1294
    %v2845 = vpop.f32.mrb[0].mxu0
    %v2846 = vadd.f32 %v296, %v2845
    %v2847 = vpop.f32.mrb[0].mxu0
    %v2848 = vpop.f32.mrb[0].mxu0
    %v2849 = vadd.f32 %v296, %v2848
    %v2850 = vpop.f32.mrb[0].mxu0
    %2851 = vmatprep.mubr.bf16.mxu0 %v1854
    %2852 = vmatmul.mubr.bf16.gmra.mrb[0].mxu0 %v1296
    %v2853 = vpop.f32.mrb[0].mxu0
    %v2854 = vadd.f32 %v296, %v2853
    %v2855 = vpop.f32.mrb[0].mxu0
    %v2856 = vpop.f32.mrb[0].mxu0
    %v2857 = vadd.f32 %v296, %v2856
    %v2858 = vpop.f32.mrb[0].mxu0
    %2859 = vmatprep.mubr.bf16.mxu0 %v1857
    %2860 = vmatmul.mubr.bf16.gmra.mrb[0].mxu0 %v1298
    %v2861 = vpop.f32.mrb[0].mxu0
    %v2862 = vadd.f32 %v296, %v2861
    %v2863 = vpop.f32.mrb[0].mxu0
    %v2864 = vpop.f32.mrb[0].mxu0
    %v2865 = vadd.f32 %v296, %v2864
    %v2866 = vpop.f32.mrb[0].mxu0
    %2867 = vmatprep.mubr.bf16.mxu0 %v1860
    %2868 = vmatmul.mubr.bf16.gmra.mrb[0].mxu0 %v1300
    %v2869 = vpop.f32.mrb[0].mxu0
    %v2870 = vadd.f32 %v296, %v2869
    %v2871 = vpop.f32.mrb[0].mxu0
    %v2872 = vpop.f32.mrb[0].mxu0
    %v2873 = vadd.f32 %v296, %v2872
    %v2874 = vpop.f32.mrb[0].mxu0
    %2875 = vmatprep.mubr.bf16.mxu0 %v1863
    %2876 = vmatmul.mubr.bf16.gmra.mrb[0].mxu0 %v1302
    %v2877 = vpop.f32.mrb[0].mxu0
    %v2878 = vadd.f32 %v296, %v2877
    %v2879 = vpop.f32.mrb[0].mxu0
    %v2880 = vpop.f32.mrb[0].mxu0
    %v2881 = vadd.f32 %v296, %v2880
    %v2882 = vpop.f32.mrb[0].mxu0
    %2883 = vmatprep.mubr.bf16.mxu0 %v1866
    %2884 = vmatmul.mubr.bf16.gmra.mrb[0].mxu0 %v1304
    %v2885 = vpop.f32.mrb[0].mxu0
    %v2886 = vadd.f32 %v296, %v2885
    %v2887 = vpop.f32.mrb[0].mxu0
    %v2888 = vpop.f32.mrb[0].mxu0
    %v2889 = vadd.f32 %v296, %v2888
    %v2890 = vpop.f32.mrb[0].mxu0
    %2891 = vmatprep.mubr.bf16.mxu0 %v1869
    %2892 = vmatmul.mubr.bf16.gmra.mrb[0].mxu0 %v1306
    %v2893 = vpop.f32.mrb[0].mxu0
    %v2894 = vadd.f32 %v296, %v2893
    %v2895 = vpop.f32.mrb[0].mxu0
    %v2896 = vpop.f32.mrb[0].mxu0
    %v2897 = vadd.f32 %v296, %v2896
    %v2898 = vpop.f32.mrb[0].mxu0
    %2899 = vmatprep.mubr.bf16.mxu0 %v1872
    %2900 = vmatmul.mubr.bf16.gmra.mrb[0].mxu0 %v1308
    %v2901 = vpop.f32.mrb[0].mxu0
    %v2902 = vadd.f32 %v296, %v2901
    %v2903 = vpop.f32.mrb[0].mxu0
    %v2904 = vpop.f32.mrb[0].mxu0
    %v2905 = vadd.f32 %v296, %v2904
    %v2906 = vpop.f32.mrb[0].mxu0
    %2907 = vmatprep.mubr.bf16.mxu0 %v1875
    %2908 = vmatmul.mubr.bf16.gmra.mrb[0].mxu0 %v1310
    %v2909 = vpop.f32.mrb[0].mxu0
    %v2910 = vadd.f32 %v296, %v2909
    %v2911 = vpop.f32.mrb[0].mxu0
    %v2912 = vpop.f32.mrb[0].mxu0
    %v2913 = vadd.f32 %v296, %v2912
    %v2914 = vpop.f32.mrb[0].mxu0
    %2915 = vmatprep.mubr.bf16.mxu0 %v1878
    %2916 = vmatmul.mubr.bf16.gmra.mrb[0].mxu0 %v1312
    %v2917 = vpop.f32.mrb[0].mxu0
    %v2918 = vadd.f32 %v296, %v2917
    %v2919 = vpop.f32.mrb[0].mxu0
    %v2920 = vpop.f32.mrb[0].mxu0
    %v2921 = vadd.f32 %v296, %v2920
    %v2922 = vpop.f32.mrb[0].mxu0
    %2923 = vmatprep.mubr.bf16.mxu0 %v1881
    %2924 = vmatmul.mubr.bf16.gmra.mrb[0].mxu0 %v1314
    %v2925 = vpop.f32.mrb[0].mxu0
    %v2926 = vadd.f32 %v296, %v2925
    %v2927 = vpop.f32.mrb[0].mxu0
    %v2928 = vpop.f32.mrb[0].mxu0
    %v2929 = vadd.f32 %v296, %v2928
    %v2930 = vpop.f32.mrb[0].mxu0
    %2931 = vmatprep.mubr.bf16.mxu0 %v1884
    %2932 = vmatmul.mubr.bf16.gmra.mrb[0].mxu0 %v1316
    %v2933 = vpop.f32.mrb[0].mxu0
    %v2934 = vadd.f32 %v296, %v2933
    %v2935 = vpop.f32.mrb[0].mxu0
    %v2936 = vpop.f32.mrb[0].mxu0
    %v2937 = vadd.f32 %v296, %v2936
    %v2938 = vpop.f32.mrb[0].mxu0
    %2939 = vmatprep.mubr.bf16.mxu0 %v1887
    %2940 = vmatmul.mubr.bf16.gmra.mrb[0].mxu0 %v1318
    %v2941 = vpop.f32.mrb[0].mxu0
    %v2942 = vadd.f32 %v296, %v2941
    %v2943 = vpop.f32.mrb[0].mxu0
    %v2944 = vpop.f32.mrb[0].mxu0
    %v2945 = vadd.f32 %v296, %v2944
    %v2946 = vpop.f32.mrb[0].mxu0
    %2947 = vmatprep.mubr.bf16.mxu0 %v1890
    %2948 = vmatmul.mubr.bf16.gmra.mrb[0].mxu0 %v1320
    %v2949 = vpop.f32.mrb[0].mxu0
    %v2950 = vadd.f32 %v296, %v2949
    %v2951 = vpop.f32.mrb[0].mxu0
    %v2952 = vpop.f32.mrb[0].mxu0
    %v2953 = vadd.f32 %v296, %v2952
    %v2954 = vpop.f32.mrb[0].mxu0
    %2955 = vdwg.mxu0
    %v2956 = vmax.f32 %v1934, 0.0
    %v2957 = vmax.f32 %v1937, 0.0
    %v2958 = vmax.f32 %v1942, 0.0
    %v2959 = vmax.f32 %v1945, 0.0
    %v2960 = vmax.f32 %v1950, 0.0
    %v2961 = vmax.f32 %v1953, 0.0
    %v2962 = vmax.f32 %v1958, 0.0
    %v2963 = vmax.f32 %v1961, 0.0
    %v2964 = vmax.f32 %v1966, 0.0
    %v2965 = vmax.f32 %v1969, 0.0
    %v2966 = vmax.f32 %v1974, 0.0
    %v2967 = vmax.f32 %v1977, 0.0
    %v2968 = vmax.f32 %v1982, 0.0
    %v2969 = vmax.f32 %v1985, 0.0
    %v2970 = vmax.f32 %v1990, 0.0
    %v2971 = vmax.f32 %v1993, 0.0
    %v2972 = vmax.f32 %v1998, 0.0
    %v2973 = vmax.f32 %v2001, 0.0
    %v2974 = vmax.f32 %v2006, 0.0
    %v2975 = vmax.f32 %v2009, 0.0
    %v2976 = vmax.f32 %v2014, 0.0
    %v2977 = vmax.f32 %v2017, 0.0
    %v2978 = vmax.f32 %v2022, 0.0
    %v2979 = vmax.f32 %v2025, 0.0
    %v2980 = vmax.f32 %v2030, 0.0
    %v2981 = vmax.f32 %v2033, 0.0
    %v2982 = vmax.f32 %v2038, 0.0
    %v2983 = vmax.f32 %v2041, 0.0
    %v2984 = vmax.f32 %v2046, 0.0
    %v2985 = vmax.f32 %v2049, 0.0
    %v2986 = vmax.f32 %v2054, 0.0
    %v2987 = vmax.f32 %v2057, 0.0
    %v2988 = vmax.f32 %v2062, 0.0
    %v2989 = vmax.f32 %v2065, 0.0
    %v2990 = vmax.f32 %v2070, 0.0
    %v2991 = vmax.f32 %v2073, 0.0
    %v2992 = vmax.f32 %v2078, 0.0
    %v2993 = vmax.f32 %v2081, 0.0
    %v2994 = vmax.f32 %v2086, 0.0
    %v2995 = vmax.f32 %v2089, 0.0
    %v2996 = vmax.f32 %v2094, 0.0
    %v2997 = vmax.f32 %v2097, 0.0
    %v2998 = vmax.f32 %v2102, 0.0
    %v2999 = vmax.f32 %v2105, 0.0
    %v3000 = vmax.f32 %v2110, 0.0
    %v3001 = vmax.f32 %v2113, 0.0
    %v3002 = vmax.f32 %v2118, 0.0
    %v3003 = vmax.f32 %v2121, 0.0
    %v3004 = vmax.f32 %v2126, 0.0
    %v3005 = vmax.f32 %v2129, 0.0
    %v3006 = vmax.f32 %v2134, 0.0
    %v3007 = vmax.f32 %v2137, 0.0
    %v3008 = vmax.f32 %v2142, 0.0
    %v3009 = vmax.f32 %v2145, 0.0
    %v3010 = vmax.f32 %v2150, 0.0
    %v3011 = vmax.f32 %v2153, 0.0
    %v3012 = vmax.f32 %v2158, 0.0
    %v3013 = vmax.f32 %v2161, 0.0
    %v3014 = vmax.f32 %v2166, 0.0
    %v3015 = vmax.f32 %v2169, 0.0
    %v3016 = vmax.f32 %v2174, 0.0
    %v3017 = vmax.f32 %v2177, 0.0
    %v3018 = vmax.f32 %v2182, 0.0
    %v3019 = vmax.f32 %v2185, 0.0
    %v3020 = vmax.f32 %v2190, 0.0
    %v3021 = vmax.f32 %v2193, 0.0
    %v3022 = vmax.f32 %v2198, 0.0
    %v3023 = vmax.f32 %v2201, 0.0
    %v3024 = vmax.f32 %v2206, 0.0
    %v3025 = vmax.f32 %v2209, 0.0
    %v3026 = vmax.f32 %v2214, 0.0
    %v3027 = vmax.f32 %v2217, 0.0
    %v3028 = vmax.f32 %v2222, 0.0
    %v3029 = vmax.f32 %v2225, 0.0
    %v3030 = vmax.f32 %v2230, 0.0
    %v3031 = vmax.f32 %v2233, 0.0
    %v3032 = vmax.f32 %v2238, 0.0
    %v3033 = vmax.f32 %v2241, 0.0
    %v3034 = vmax.f32 %v2246, 0.0
    %v3035 = vmax.f32 %v2249, 0.0
    %v3036 = vmax.f32 %v2254, 0.0
    %v3037 = vmax.f32 %v2257, 0.0
    %v3038 = vmax.f32 %v2262, 0.0
    %v3039 = vmax.f32 %v2265, 0.0
    %v3040 = vmax.f32 %v2270, 0.0
    %v3041 = vmax.f32 %v2273, 0.0
    %v3042 = vmax.f32 %v2278, 0.0
    %v3043 = vmax.f32 %v2281, 0.0
    %v3044 = vmax.f32 %v2286, 0.0
    %v3045 = vmax.f32 %v2289, 0.0
    %v3046 = vmax.f32 %v2294, 0.0
    %v3047 = vmax.f32 %v2297, 0.0
    %v3048 = vmax.f32 %v2302, 0.0
    %v3049 = vmax.f32 %v2305, 0.0
    %v3050 = vmax.f32 %v2310, 0.0
    %v3051 = vmax.f32 %v2313, 0.0
    %v3052 = vmax.f32 %v2318, 0.0
    %v3053 = vmax.f32 %v2321, 0.0
    %v3054 = vmax.f32 %v2326, 0.0
    %v3055 = vmax.f32 %v2329, 0.0
    %v3056 = vmax.f32 %v2334, 0.0
    %v3057 = vmax.f32 %v2337, 0.0
    %v3058 = vmax.f32 %v2342, 0.0
    %v3059 = vmax.f32 %v2345, 0.0
    %v3060 = vmax.f32 %v2350, 0.0
    %v3061 = vmax.f32 %v2353, 0.0
    %v3062 = vmax.f32 %v2358, 0.0
    %v3063 = vmax.f32 %v2361, 0.0
    %v3064 = vmax.f32 %v2366, 0.0
    %v3065 = vmax.f32 %v2369, 0.0
    %v3066 = vmax.f32 %v2374, 0.0
    %v3067 = vmax.f32 %v2377, 0.0
    %v3068 = vmax.f32 %v2382, 0.0
    %v3069 = vmax.f32 %v2385, 0.0
    %v3070 = vmax.f32 %v2390, 0.0
    %v3071 = vmax.f32 %v2393, 0.0
    %v3072 = vmax.f32 %v2398, 0.0
    %v3073 = vmax.f32 %v2401, 0.0
    %v3074 = vmax.f32 %v2406, 0.0
    %v3075 = vmax.f32 %v2409, 0.0
    %v3076 = vmax.f32 %v2414, 0.0
    %v3077 = vmax.f32 %v2417, 0.0
    %v3078 = vmax.f32 %v2422, 0.0
    %v3079 = vmax.f32 %v2425, 0.0
    %v3080 = vmax.f32 %v2430, 0.0
    %v3081 = vmax.f32 %v2433, 0.0
    %v3082 = vmax.f32 %v2438, 0.0
    %v3083 = vmax.f32 %v2441, 0.0
    %v3084 = vmax.f32 %v2446, 0.0
    %v3085 = vmax.f32 %v2449, 0.0
    %v3086 = vmax.f32 %v2454, 0.0
    %v3087 = vmax.f32 %v2457, 0.0
    %v3088 = vmax.f32 %v2462, 0.0
    %v3089 = vmax.f32 %v2465, 0.0
    %v3090 = vmax.f32 %v2470, 0.0
    %v3091 = vmax.f32 %v2473, 0.0
    %v3092 = vmax.f32 %v2478, 0.0
    %v3093 = vmax.f32 %v2481, 0.0
    %v3094 = vmax.f32 %v2486, 0.0
    %v3095 = vmax.f32 %v2489, 0.0
    %v3096 = vmax.f32 %v2494, 0.0
    %v3097 = vmax.f32 %v2497, 0.0
    %v3098 = vmax.f32 %v2502, 0.0
    %v3099 = vmax.f32 %v2505, 0.0
    %v3100 = vmax.f32 %v2510, 0.0
    %v3101 = vmax.f32 %v2513, 0.0
    %v3102 = vmax.f32 %v2518, 0.0
    %v3103 = vmax.f32 %v2521, 0.0
    %v3104 = vmax.f32 %v2526, 0.0
    %v3105 = vmax.f32 %v2529, 0.0
    %v3106 = vmax.f32 %v2534, 0.0
    %v3107 = vmax.f32 %v2537, 0.0
    %v3108 = vmax.f32 %v2542, 0.0
    %v3109 = vmax.f32 %v2545, 0.0
    %v3110 = vmax.f32 %v2550, 0.0
    %v3111 = vmax.f32 %v2553, 0.0
    %v3112 = vmax.f32 %v2558, 0.0
    %v3113 = vmax.f32 %v2561, 0.0
    %v3114 = vmax.f32 %v2566, 0.0
    %v3115 = vmax.f32 %v2569, 0.0
    %v3116 = vmax.f32 %v2574, 0.0
    %v3117 = vmax.f32 %v2577, 0.0
    %v3118 = vmax.f32 %v2582, 0.0
    %v3119 = vmax.f32 %v2585, 0.0
    %v3120 = vmax.f32 %v2590, 0.0
    %v3121 = vmax.f32 %v2593, 0.0
    %v3122 = vmax.f32 %v2598, 0.0
    %v3123 = vmax.f32 %v2601, 0.0
    %v3124 = vmax.f32 %v2606, 0.0
    %v3125 = vmax.f32 %v2609, 0.0
    %v3126 = vmax.f32 %v2614, 0.0
    %v3127 = vmax.f32 %v2617, 0.0
    %v3128 = vmax.f32 %v2622, 0.0
    %v3129 = vmax.f32 %v2625, 0.0
    %v3130 = vmax.f32 %v2630, 0.0
    %v3131 = vmax.f32 %v2633, 0.0
    %v3132 = vmax.f32 %v2638, 0.0
    %v3133 = vmax.f32 %v2641, 0.0
    %v3134 = vmax.f32 %v2646, 0.0
    %v3135 = vmax.f32 %v2649, 0.0
    %v3136 = vmax.f32 %v2654, 0.0
    %v3137 = vmax.f32 %v2657, 0.0
    %v3138 = vmax.f32 %v2662, 0.0
    %v3139 = vmax.f32 %v2665, 0.0
    %v3140 = vmax.f32 %v2670, 0.0
    %v3141 = vmax.f32 %v2673, 0.0
    %v3142 = vmax.f32 %v2678, 0.0
    %v3143 = vmax.f32 %v2681, 0.0
    %v3144 = vmax.f32 %v2686, 0.0
    %v3145 = vmax.f32 %v2689, 0.0
    %v3146 = vmax.f32 %v2694, 0.0
    %v3147 = vmax.f32 %v2697, 0.0
    %v3148 = vmax.f32 %v2702, 0.0
    %v3149 = vmax.f32 %v2705, 0.0
    %v3150 = vmax.f32 %v2710, 0.0
    %v3151 = vmax.f32 %v2713, 0.0
    %v3152 = vmax.f32 %v2718, 0.0
    %v3153 = vmax.f32 %v2721, 0.0
    %v3154 = vmax.f32 %v2726, 0.0
    %v3155 = vmax.f32 %v2729, 0.0
    %v3156 = vmax.f32 %v2734, 0.0
    %v3157 = vmax.f32 %v2737, 0.0
    %v3158 = vmax.f32 %v2742, 0.0
    %v3159 = vmax.f32 %v2745, 0.0
    %v3160 = vmax.f32 %v2750, 0.0
    %v3161 = vmax.f32 %v2753, 0.0
    %v3162 = vmax.f32 %v2758, 0.0
    %v3163 = vmax.f32 %v2761, 0.0
    %v3164 = vmax.f32 %v2766, 0.0
    %v3165 = vmax.f32 %v2769, 0.0
    %v3166 = vmax.f32 %v2774, 0.0
    %v3167 = vmax.f32 %v2777, 0.0
    %v3168 = vmax.f32 %v2782, 0.0
    %v3169 = vmax.f32 %v2785, 0.0
    %v3170 = vmax.f32 %v2790, 0.0
    %v3171 = vmax.f32 %v2793, 0.0
    %v3172 = vmax.f32 %v2798, 0.0
    %v3173 = vmax.f32 %v2801, 0.0
    %v3174 = vmax.f32 %v2806, 0.0
    %v3175 = vmax.f32 %v2809, 0.0
    %v3176 = vmax.f32 %v2814, 0.0
    %v3177 = vmax.f32 %v2817, 0.0
    %v3178 = vmax.f32 %v2822, 0.0
    %v3179 = vmax.f32 %v2825, 0.0
    %v3180 = vmax.f32 %v2830, 0.0
    %v3181 = vmax.f32 %v2833, 0.0
    %v3182 = vmax.f32 %v2838, 0.0
    %v3183 = vmax.f32 %v2841, 0.0
    %v3184 = vmax.f32 %v2846, 0.0
    %v3185 = vmax.f32 %v2849, 0.0
    %v3186 = vmax.f32 %v2854, 0.0
    %v3187 = vmax.f32 %v2857, 0.0
    %v3188 = vmax.f32 %v2862, 0.0
    %v3189 = vmax.f32 %v2865, 0.0
    %v3190 = vmax.f32 %v2870, 0.0
    %v3191 = vmax.f32 %v2873, 0.0
    %v3192 = vmax.f32 %v2878, 0.0
    %v3193 = vmax.f32 %v2881, 0.0
    %v3194 = vmax.f32 %v2886, 0.0
    %v3195 = vmax.f32 %v2889, 0.0
    %v3196 = vmax.f32 %v2894, 0.0
    %v3197 = vmax.f32 %v2897, 0.0
    %v3198 = vmax.f32 %v2902, 0.0
    %v3199 = vmax.f32 %v2905, 0.0
    %v3200 = vmax.f32 %v2910, 0.0
    %v3201 = vmax.f32 %v2913, 0.0
    %v3202 = vmax.f32 %v2918, 0.0
    %v3203 = vmax.f32 %v2921, 0.0
    %v3204 = vmax.f32 %v2926, 0.0
    %v3205 = vmax.f32 %v2929, 0.0
    %v3206 = vmax.f32 %v2934, 0.0
    %v3207 = vmax.f32 %v2937, 0.0
    %v3208 = vmax.f32 %v2942, 0.0
    %v3209 = vmax.f32 %v2945, 0.0
    %v3210 = vmax.f32 %v2950, 0.0
    %v3211 = vmax.f32 %v2953, 0.0
    %v3212 = vpack.c.bf16 %v2957, %v2956
    %v3213 = vpack.c.bf16 %v2959, %v2958
    %v3214 = vpack.c.bf16 %v2961, %v2960
    %v3215 = vpack.c.bf16 %v2963, %v2962
    %v3216 = vpack.c.bf16 %v2965, %v2964
    %v3217 = vpack.c.bf16 %v2967, %v2966
    %v3218 = vpack.c.bf16 %v2969, %v2968
    %v3219 = vpack.c.bf16 %v2971, %v2970
    %v3220 = vpack.c.bf16 %v2973, %v2972
    %v3221 = vpack.c.bf16 %v2975, %v2974
    %v3222 = vpack.c.bf16 %v2977, %v2976
    %v3223 = vpack.c.bf16 %v2979, %v2978
    %v3224 = vpack.c.bf16 %v2981, %v2980
    %v3225 = vpack.c.bf16 %v2983, %v2982
    %v3226 = vpack.c.bf16 %v2985, %v2984
    %v3227 = vpack.c.bf16 %v2987, %v2986
    %v3228 = vpack.c.bf16 %v2989, %v2988
    %v3229 = vpack.c.bf16 %v2991, %v2990
    %v3230 = vpack.c.bf16 %v2993, %v2992
    %v3231 = vpack.c.bf16 %v2995, %v2994
    %v3232 = vpack.c.bf16 %v2997, %v2996
    %v3233 = vpack.c.bf16 %v2999, %v2998
    %v3234 = vpack.c.bf16 %v3001, %v3000
    %v3235 = vpack.c.bf16 %v3003, %v3002
    %v3236 = vpack.c.bf16 %v3005, %v3004
    %v3237 = vpack.c.bf16 %v3007, %v3006
    %v3238 = vpack.c.bf16 %v3009, %v3008
    %v3239 = vpack.c.bf16 %v3011, %v3010
    %v3240 = vpack.c.bf16 %v3013, %v3012
    %v3241 = vpack.c.bf16 %v3015, %v3014
    %v3242 = vpack.c.bf16 %v3017, %v3016
    %v3243 = vpack.c.bf16 %v3019, %v3018
    %v3244 = vpack.c.bf16 %v3021, %v3020
    %v3245 = vpack.c.bf16 %v3023, %v3022
    %v3246 = vpack.c.bf16 %v3025, %v3024
    %v3247 = vpack.c.bf16 %v3027, %v3026
    %v3248 = vpack.c.bf16 %v3029, %v3028
    %v3249 = vpack.c.bf16 %v3031, %v3030
    %v3250 = vpack.c.bf16 %v3033, %v3032
    %v3251 = vpack.c.bf16 %v3035, %v3034
    %v3252 = vpack.c.bf16 %v3037, %v3036
    %v3253 = vpack.c.bf16 %v3039, %v3038
    %v3254 = vpack.c.bf16 %v3041, %v3040
    %v3255 = vpack.c.bf16 %v3043, %v3042
    %v3256 = vpack.c.bf16 %v3045, %v3044
    %v3257 = vpack.c.bf16 %v3047, %v3046
    %v3258 = vpack.c.bf16 %v3049, %v3048
    %v3259 = vpack.c.bf16 %v3051, %v3050
    %v3260 = vpack.c.bf16 %v3053, %v3052
    %v3261 = vpack.c.bf16 %v3055, %v3054
    %v3262 = vpack.c.bf16 %v3057, %v3056
    %v3263 = vpack.c.bf16 %v3059, %v3058
    %v3264 = vpack.c.bf16 %v3061, %v3060
    %v3265 = vpack.c.bf16 %v3063, %v3062
    %v3266 = vpack.c.bf16 %v3065, %v3064
    %v3267 = vpack.c.bf16 %v3067, %v3066
    %v3268 = vpack.c.bf16 %v3069, %v3068
    %v3269 = vpack.c.bf16 %v3071, %v3070
    %v3270 = vpack.c.bf16 %v3073, %v3072
    %v3271 = vpack.c.bf16 %v3075, %v3074
    %v3272 = vpack.c.bf16 %v3077, %v3076
    %v3273 = vpack.c.bf16 %v3079, %v3078
    %v3274 = vpack.c.bf16 %v3081, %v3080
    %v3275 = vpack.c.bf16 %v3083, %v3082
    %v3276 = vpack.c.bf16 %v3085, %v3084
    %v3277 = vpack.c.bf16 %v3087, %v3086
    %v3278 = vpack.c.bf16 %v3089, %v3088
    %v3279 = vpack.c.bf16 %v3091, %v3090
    %v3280 = vpack.c.bf16 %v3093, %v3092
    %v3281 = vpack.c.bf16 %v3095, %v3094
    %v3282 = vpack.c.bf16 %v3097, %v3096
    %v3283 = vpack.c.bf16 %v3099, %v3098
    %v3284 = vpack.c.bf16 %v3101, %v3100
    %v3285 = vpack.c.bf16 %v3103, %v3102
    %v3286 = vpack.c.bf16 %v3105, %v3104
    %v3287 = vpack.c.bf16 %v3107, %v3106
    %v3288 = vpack.c.bf16 %v3109, %v3108
    %v3289 = vpack.c.bf16 %v3111, %v3110
    %v3290 = vpack.c.bf16 %v3113, %v3112
    %v3291 = vpack.c.bf16 %v3115, %v3114
    %v3292 = vpack.c.bf16 %v3117, %v3116
    %v3293 = vpack.c.bf16 %v3119, %v3118
    %v3294 = vpack.c.bf16 %v3121, %v3120
    %v3295 = vpack.c.bf16 %v3123, %v3122
    %v3296 = vpack.c.bf16 %v3125, %v3124
    %v3297 = vpack.c.bf16 %v3127, %v3126
    %v3298 = vpack.c.bf16 %v3129, %v3128
    %v3299 = vpack.c.bf16 %v3131, %v3130
    %v3300 = vpack.c.bf16 %v3133, %v3132
    %v3301 = vpack.c.bf16 %v3135, %v3134
    %v3302 = vpack.c.bf16 %v3137, %v3136
    %v3303 = vpack.c.bf16 %v3139, %v3138
    %v3304 = vpack.c.bf16 %v3141, %v3140
    %v3305 = vpack.c.bf16 %v3143, %v3142
    %v3306 = vpack.c.bf16 %v3145, %v3144
    %v3307 = vpack.c.bf16 %v3147, %v3146
    %v3308 = vpack.c.bf16 %v3149, %v3148
    %v3309 = vpack.c.bf16 %v3151, %v3150
    %v3310 = vpack.c.bf16 %v3153, %v3152
    %v3311 = vpack.c.bf16 %v3155, %v3154
    %v3312 = vpack.c.bf16 %v3157, %v3156
    %v3313 = vpack.c.bf16 %v3159, %v3158
    %v3314 = vpack.c.bf16 %v3161, %v3160
    %v3315 = vpack.c.bf16 %v3163, %v3162
    %v3316 = vpack.c.bf16 %v3165, %v3164
    %v3317 = vpack.c.bf16 %v3167, %v3166
    %v3318 = vpack.c.bf16 %v3169, %v3168
    %v3319 = vpack.c.bf16 %v3171, %v3170
    %v3320 = vpack.c.bf16 %v3173, %v3172
    %v3321 = vpack.c.bf16 %v3175, %v3174
    %v3322 = vpack.c.bf16 %v3177, %v3176
    %v3323 = vpack.c.bf16 %v3179, %v3178
    %v3324 = vpack.c.bf16 %v3181, %v3180
    %v3325 = vpack.c.bf16 %v3183, %v3182
    %v3326 = vpack.c.bf16 %v3185, %v3184
    %v3327 = vpack.c.bf16 %v3187, %v3186
    %v3328 = vpack.c.bf16 %v3189, %v3188
    %v3329 = vpack.c.bf16 %v3191, %v3190
    %v3330 = vpack.c.bf16 %v3193, %v3192
    %v3331 = vpack.c.bf16 %v3195, %v3194
    %v3332 = vpack.c.bf16 %v3197, %v3196
    %v3333 = vpack.c.bf16 %v3199, %v3198
    %v3334 = vpack.c.bf16 %v3201, %v3200
    %v3335 = vpack.c.bf16 %v3203, %v3202
    %v3336 = vpack.c.bf16 %v3205, %v3204
    %v3337 = vpack.c.bf16 %v3207, %v3206
    %v3338 = vpack.c.bf16 %v3209, %v3208
    %v3339 = vpack.c.bf16 %v3211, %v3210
    %v3468 = vunpack.c.l.b16 %v3212
    %v3469 = vunpack.c.h.b16 %v3212
    %v3470 = vunpack.c.l.b16 %v3213
    %v3471 = vunpack.c.h.b16 %v3213
    %v3472 = vunpack.c.l.b16 %v3214
    %v3473 = vunpack.c.h.b16 %v3214
    %v3474 = vunpack.c.l.b16 %v3215
    %v3475 = vunpack.c.h.b16 %v3215
    %v3476 = vunpack.c.l.b16 %v3216
    %v3477 = vunpack.c.h.b16 %v3216
    %v3478 = vunpack.c.l.b16 %v3217
    %v3479 = vunpack.c.h.b16 %v3217
    %v3480 = vunpack.c.l.b16 %v3218
    %v3481 = vunpack.c.h.b16 %v3218
    %v3482 = vunpack.c.l.b16 %v3219
    %v3483 = vunpack.c.h.b16 %v3219
    %v3484 = vunpack.c.l.b16 %v3220
    %v3485 = vunpack.c.h.b16 %v3220
    %v3486 = vunpack.c.l.b16 %v3221
    %v3487 = vunpack.c.h.b16 %v3221
    %v3488 = vunpack.c.l.b16 %v3222
    %v3489 = vunpack.c.h.b16 %v3222
    %v3490 = vunpack.c.l.b16 %v3223
    %v3491 = vunpack.c.h.b16 %v3223
    %v3492 = vunpack.c.l.b16 %v3224
    %v3493 = vunpack.c.h.b16 %v3224
    %v3494 = vunpack.c.l.b16 %v3225
    %v3495 = vunpack.c.h.b16 %v3225
    %v3496 = vunpack.c.l.b16 %v3226
    %v3497 = vunpack.c.h.b16 %v3226
    %v3498 = vunpack.c.l.b16 %v3227
    %v3499 = vunpack.c.h.b16 %v3227
    %v3500 = vunpack.c.l.b16 %v3228
    %v3501 = vunpack.c.h.b16 %v3228
    %v3502 = vunpack.c.l.b16 %v3229
    %v3503 = vunpack.c.h.b16 %v3229
    %v3504 = vunpack.c.l.b16 %v3230
    %v3505 = vunpack.c.h.b16 %v3230
    %v3506 = vunpack.c.l.b16 %v3231
    %v3507 = vunpack.c.h.b16 %v3231
    %v3508 = vunpack.c.l.b16 %v3232
    %v3509 = vunpack.c.h.b16 %v3232
    %v3510 = vunpack.c.l.b16 %v3233
    %v3511 = vunpack.c.h.b16 %v3233
    %v3512 = vunpack.c.l.b16 %v3234
    %v3513 = vunpack.c.h.b16 %v3234
    %v3514 = vunpack.c.l.b16 %v3235
    %v3515 = vunpack.c.h.b16 %v3235
    %v3516 = vunpack.c.l.b16 %v3236
    %v3517 = vunpack.c.h.b16 %v3236
    %v3518 = vunpack.c.l.b16 %v3237
    %v3519 = vunpack.c.h.b16 %v3237
    %v3520 = vunpack.c.l.b16 %v3238
    %v3521 = vunpack.c.h.b16 %v3238
    %v3522 = vunpack.c.l.b16 %v3239
    %v3523 = vunpack.c.h.b16 %v3239
    %v3524 = vunpack.c.l.b16 %v3240
    %v3525 = vunpack.c.h.b16 %v3240
    %v3526 = vunpack.c.l.b16 %v3241
    %v3527 = vunpack.c.h.b16 %v3241
    %v3528 = vunpack.c.l.b16 %v3242
    %v3529 = vunpack.c.h.b16 %v3242
    %v3530 = vunpack.c.l.b16 %v3243
    %v3531 = vunpack.c.h.b16 %v3243
    %v3532 = vunpack.c.l.b16 %v3244
    %v3533 = vunpack.c.h.b16 %v3244
    %v3534 = vunpack.c.l.b16 %v3245
    %v3535 = vunpack.c.h.b16 %v3245
    %v3536 = vunpack.c.l.b16 %v3246
    %v3537 = vunpack.c.h.b16 %v3246
    %v3538 = vunpack.c.l.b16 %v3247
    %v3539 = vunpack.c.h.b16 %v3247
    %v3540 = vunpack.c.l.b16 %v3248
    %v3541 = vunpack.c.h.b16 %v3248
    %v3542 = vunpack.c.l.b16 %v3249
    %v3543 = vunpack.c.h.b16 %v3249
    %v3544 = vunpack.c.l.b16 %v3250
    %v3545 = vunpack.c.h.b16 %v3250
    %v3546 = vunpack.c.l.b16 %v3251
    %v3547 = vunpack.c.h.b16 %v3251
    %v3548 = vunpack.c.l.b16 %v3252
    %v3549 = vunpack.c.h.b16 %v3252
    %v3550 = vunpack.c.l.b16 %v3253
    %v3551 = vunpack.c.h.b16 %v3253
    %v3552 = vunpack.c.l.b16 %v3254
    %v3553 = vunpack.c.h.b16 %v3254
    %v3554 = vunpack.c.l.b16 %v3255
    %v3555 = vunpack.c.h.b16 %v3255
    %v3556 = vunpack.c.l.b16 %v3256
    %v3557 = vunpack.c.h.b16 %v3256
    %v3558 = vunpack.c.l.b16 %v3257
    %v3559 = vunpack.c.h.b16 %v3257
    %v3560 = vunpack.c.l.b16 %v3258
    %v3561 = vunpack.c.h.b16 %v3258
    %v3562 = vunpack.c.l.b16 %v3259
    %v3563 = vunpack.c.h.b16 %v3259
    %v3564 = vunpack.c.l.b16 %v3260
    %v3565 = vunpack.c.h.b16 %v3260
    %v3566 = vunpack.c.l.b16 %v3261
    %v3567 = vunpack.c.h.b16 %v3261
    %v3568 = vunpack.c.l.b16 %v3262
    %v3569 = vunpack.c.h.b16 %v3262
    %v3570 = vunpack.c.l.b16 %v3263
    %v3571 = vunpack.c.h.b16 %v3263
    %v3572 = vunpack.c.l.b16 %v3264
    %v3573 = vunpack.c.h.b16 %v3264
    %v3574 = vunpack.c.l.b16 %v3265
    %v3575 = vunpack.c.h.b16 %v3265
    %v3576 = vunpack.c.l.b16 %v3266
    %v3577 = vunpack.c.h.b16 %v3266
    %v3578 = vunpack.c.l.b16 %v3267
    %v3579 = vunpack.c.h.b16 %v3267
    %v3580 = vunpack.c.l.b16 %v3268
    %v3581 = vunpack.c.h.b16 %v3268
    %v3582 = vunpack.c.l.b16 %v3269
    %v3583 = vunpack.c.h.b16 %v3269
    %v3584 = vunpack.c.l.b16 %v3270
    %v3585 = vunpack.c.h.b16 %v3270
    %v3586 = vunpack.c.l.b16 %v3271
    %v3587 = vunpack.c.h.b16 %v3271
    %v3588 = vunpack.c.l.b16 %v3272
    %v3589 = vunpack.c.h.b16 %v3272
    %v3590 = vunpack.c.l.b16 %v3273
    %v3591 = vunpack.c.h.b16 %v3273
    %v3592 = vunpack.c.l.b16 %v3274
    %v3593 = vunpack.c.h.b16 %v3274
    %v3594 = vunpack.c.l.b16 %v3275
    %v3595 = vunpack.c.h.b16 %v3275
    %v3596 = vunpack.c.l.b16 %v3276
    %v3597 = vunpack.c.h.b16 %v3276
    %v3598 = vunpack.c.l.b16 %v3277
    %v3599 = vunpack.c.h.b16 %v3277
    %v3600 = vunpack.c.l.b16 %v3278
    %v3601 = vunpack.c.h.b16 %v3278
    %v3602 = vunpack.c.l.b16 %v3279
    %v3603 = vunpack.c.h.b16 %v3279
    %v3604 = vunpack.c.l.b16 %v3280
    %v3605 = vunpack.c.h.b16 %v3280
    %v3606 = vunpack.c.l.b16 %v3281
    %v3607 = vunpack.c.h.b16 %v3281
    %v3608 = vunpack.c.l.b16 %v3282
    %v3609 = vunpack.c.h.b16 %v3282
    %v3610 = vunpack.c.l.b16 %v3283
    %v3611 = vunpack.c.h.b16 %v3283
    %v3612 = vunpack.c.l.b16 %v3284
    %v3613 = vunpack.c.h.b16 %v3284
    %v3614 = vunpack.c.l.b16 %v3285
    %v3615 = vunpack.c.h.b16 %v3285
    %v3616 = vunpack.c.l.b16 %v3286
    %v3617 = vunpack.c.h.b16 %v3286
    %v3618 = vunpack.c.l.b16 %v3287
    %v3619 = vunpack.c.h.b16 %v3287
    %v3620 = vunpack.c.l.b16 %v3288
    %v3621 = vunpack.c.h.b16 %v3288
    %v3622 = vunpack.c.l.b16 %v3289
    %v3623 = vunpack.c.h.b16 %v3289
    %v3624 = vunpack.c.l.b16 %v3290
    %v3625 = vunpack.c.h.b16 %v3290
    %v3626 = vunpack.c.l.b16 %v3291
    %v3627 = vunpack.c.h.b16 %v3291
    %v3628 = vunpack.c.l.b16 %v3292
    %v3629 = vunpack.c.h.b16 %v3292
    %v3630 = vunpack.c.l.b16 %v3293
    %v3631 = vunpack.c.h.b16 %v3293
    %v3632 = vunpack.c.l.b16 %v3294
    %v3633 = vunpack.c.h.b16 %v3294
    %v3634 = vunpack.c.l.b16 %v3295
    %v3635 = vunpack.c.h.b16 %v3295
    %v3636 = vunpack.c.l.b16 %v3296
    %v3637 = vunpack.c.h.b16 %v3296
    %v3638 = vunpack.c.l.b16 %v3297
    %v3639 = vunpack.c.h.b16 %v3297
    %v3640 = vunpack.c.l.b16 %v3298
    %v3641 = vunpack.c.h.b16 %v3298
    %v3642 = vunpack.c.l.b16 %v3299
    %v3643 = vunpack.c.h.b16 %v3299
    %v3644 = vunpack.c.l.b16 %v3300
    %v3645 = vunpack.c.h.b16 %v3300
    %v3646 = vunpack.c.l.b16 %v3301
    %v3647 = vunpack.c.h.b16 %v3301
    %v3648 = vunpack.c.l.b16 %v3302
    %v3649 = vunpack.c.h.b16 %v3302
    %v3650 = vunpack.c.l.b16 %v3303
    %v3651 = vunpack.c.h.b16 %v3303
    %v3652 = vunpack.c.l.b16 %v3304
    %v3653 = vunpack.c.h.b16 %v3304
    %v3654 = vunpack.c.l.b16 %v3305
    %v3655 = vunpack.c.h.b16 %v3305
    %v3656 = vunpack.c.l.b16 %v3306
    %v3657 = vunpack.c.h.b16 %v3306
    %v3658 = vunpack.c.l.b16 %v3307
    %v3659 = vunpack.c.h.b16 %v3307
    %v3660 = vunpack.c.l.b16 %v3308
    %v3661 = vunpack.c.h.b16 %v3308
    %v3662 = vunpack.c.l.b16 %v3309
    %v3663 = vunpack.c.h.b16 %v3309
    %v3664 = vunpack.c.l.b16 %v3310
    %v3665 = vunpack.c.h.b16 %v3310
    %v3666 = vunpack.c.l.b16 %v3311
    %v3667 = vunpack.c.h.b16 %v3311
    %v3668 = vunpack.c.l.b16 %v3312
    %v3669 = vunpack.c.h.b16 %v3312
    %v3670 = vunpack.c.l.b16 %v3313
    %v3671 = vunpack.c.h.b16 %v3313
    %v3672 = vunpack.c.l.b16 %v3314
    %v3673 = vunpack.c.h.b16 %v3314
    %v3674 = vunpack.c.l.b16 %v3315
    %v3675 = vunpack.c.h.b16 %v3315
    %v3676 = vunpack.c.l.b16 %v3316
    %v3677 = vunpack.c.h.b16 %v3316
    %v3678 = vunpack.c.l.b16 %v3317
    %v3679 = vunpack.c.h.b16 %v3317
    %v3680 = vunpack.c.l.b16 %v3318
    %v3681 = vunpack.c.h.b16 %v3318
    %v3682 = vunpack.c.l.b16 %v3319
    %v3683 = vunpack.c.h.b16 %v3319
    %v3684 = vunpack.c.l.b16 %v3320
    %v3685 = vunpack.c.h.b16 %v3320
    %v3686 = vunpack.c.l.b16 %v3321
    %v3687 = vunpack.c.h.b16 %v3321
    %v3688 = vunpack.c.l.b16 %v3322
    %v3689 = vunpack.c.h.b16 %v3322
    %v3690 = vunpack.c.l.b16 %v3323
    %v3691 = vunpack.c.h.b16 %v3323
    %v3692 = vunpack.c.l.b16 %v3324
    %v3693 = vunpack.c.h.b16 %v3324
    %v3694 = vunpack.c.l.b16 %v3325
    %v3695 = vunpack.c.h.b16 %v3325
    %v3696 = vunpack.c.l.b16 %v3326
    %v3697 = vunpack.c.h.b16 %v3326
    %v3698 = vunpack.c.l.b16 %v3327
    %v3699 = vunpack.c.h.b16 %v3327
    %v3700 = vunpack.c.l.b16 %v3328
    %v3701 = vunpack.c.h.b16 %v3328
    %v3702 = vunpack.c.l.b16 %v3329
    %v3703 = vunpack.c.h.b16 %v3329
    %v3704 = vunpack.c.l.b16 %v3330
    %v3705 = vunpack.c.h.b16 %v3330
    %v3706 = vunpack.c.l.b16 %v3331
    %v3707 = vunpack.c.h.b16 %v3331
    %v3708 = vunpack.c.l.b16 %v3332
    %v3709 = vunpack.c.h.b16 %v3332
    %v3710 = vunpack.c.l.b16 %v3333
    %v3711 = vunpack.c.h.b16 %v3333
    %v3712 = vunpack.c.l.b16 %v3334
    %v3713 = vunpack.c.h.b16 %v3334
    %v3714 = vunpack.c.l.b16 %v3335
    %v3715 = vunpack.c.h.b16 %v3335
    %v3716 = vunpack.c.l.b16 %v3336
    %v3717 = vunpack.c.h.b16 %v3336
    %v3718 = vunpack.c.l.b16 %v3337
    %v3719 = vunpack.c.h.b16 %v3337
    %v3720 = vunpack.c.l.b16 %v3338
    %v3721 = vunpack.c.h.b16 %v3338
    %v3722 = vunpack.c.l.b16 %v3339
    %v3723 = vunpack.c.h.b16 %v3339
    %v3724 = vpack.c.b16 %v3468, %v3468
    %v3725 = vpack.c.b16 %v3469, %v3469
    %v3726 = vpack.c.b16 %v3470, %v3470
    %v3727 = vpack.c.b16 %v3471, %v3471
    %v3728 = vpack.c.b16 %v3472, %v3472
    %v3729 = vpack.c.b16 %v3473, %v3473
    %v3730 = vpack.c.b16 %v3474, %v3474
    %v3731 = vpack.c.b16 %v3475, %v3475
    %v3732 = vpack.c.b16 %v3476, %v3476
    %v3733 = vpack.c.b16 %v3477, %v3477
    %v3734 = vpack.c.b16 %v3478, %v3478
    %v3735 = vpack.c.b16 %v3479, %v3479
    %v3736 = vpack.c.b16 %v3480, %v3480
    %v3737 = vpack.c.b16 %v3481, %v3481
    %v3738 = vpack.c.b16 %v3482, %v3482
    %v3739 = vpack.c.b16 %v3483, %v3483
    %v3740 = vpack.c.b16 %v3484, %v3484
    %v3741 = vpack.c.b16 %v3485, %v3485
    %v3742 = vpack.c.b16 %v3486, %v3486
    %v3743 = vpack.c.b16 %v3487, %v3487
    %v3744 = vpack.c.b16 %v3488, %v3488
    %v3745 = vpack.c.b16 %v3489, %v3489
    %v3746 = vpack.c.b16 %v3490, %v3490
    %v3747 = vpack.c.b16 %v3491, %v3491
    %v3748 = vpack.c.b16 %v3492, %v3492
    %v3749 = vpack.c.b16 %v3493, %v3493
    %v3750 = vpack.c.b16 %v3494, %v3494
    %v3751 = vpack.c.b16 %v3495, %v3495
    %v3752 = vpack.c.b16 %v3496, %v3496
    %v3753 = vpack.c.b16 %v3497, %v3497
    %v3754 = vpack.c.b16 %v3498, %v3498
    %v3755 = vpack.c.b16 %v3499, %v3499
    %v3756 = vpack.c.b16 %v3500, %v3500
    %v3757 = vpack.c.b16 %v3501, %v3501
    %v3758 = vpack.c.b16 %v3502, %v3502
    %v3759 = vpack.c.b16 %v3503, %v3503
    %v3760 = vpack.c.b16 %v3504, %v3504
    %v3761 = vpack.c.b16 %v3505, %v3505
    %v3762 = vpack.c.b16 %v3506, %v3506
    %v3763 = vpack.c.b16 %v3507, %v3507
    %v3764 = vpack.c.b16 %v3508, %v3508
    %v3765 = vpack.c.b16 %v3509, %v3509
    %v3766 = vpack.c.b16 %v3510, %v3510
    %v3767 = vpack.c.b16 %v3511, %v3511
    %v3768 = vpack.c.b16 %v3512, %v3512
    %v3769 = vpack.c.b16 %v3513, %v3513
    %v3770 = vpack.c.b16 %v3514, %v3514
    %v3771 = vpack.c.b16 %v3515, %v3515
    %v3772 = vpack.c.b16 %v3516, %v3516
    %v3773 = vpack.c.b16 %v3517, %v3517
    %v3774 = vpack.c.b16 %v3518, %v3518
    %v3775 = vpack.c.b16 %v3519, %v3519
    %v3776 = vpack.c.b16 %v3520, %v3520
    %v3777 = vpack.c.b16 %v3521, %v3521
    %v3778 = vpack.c.b16 %v3522, %v3522
    %v3779 = vpack.c.b16 %v3523, %v3523
    %v3780 = vpack.c.b16 %v3524, %v3524
    %v3781 = vpack.c.b16 %v3525, %v3525
    %v3782 = vpack.c.b16 %v3526, %v3526
    %v3783 = vpack.c.b16 %v3527, %v3527
    %v3784 = vpack.c.b16 %v3528, %v3528
    %v3785 = vpack.c.b16 %v3529, %v3529
    %v3786 = vpack.c.b16 %v3530, %v3530
    %v3787 = vpack.c.b16 %v3531, %v3531
    %v3788 = vpack.c.b16 %v3532, %v3532
    %v3789 = vpack.c.b16 %v3533, %v3533
    %v3790 = vpack.c.b16 %v3534, %v3534
    %v3791 = vpack.c.b16 %v3535, %v3535
    %v3792 = vpack.c.b16 %v3536, %v3536
    %v3793 = vpack.c.b16 %v3537, %v3537
    %v3794 = vpack.c.b16 %v3538, %v3538
    %v3795 = vpack.c.b16 %v3539, %v3539
    %v3796 = vpack.c.b16 %v3540, %v3540
    %v3797 = vpack.c.b16 %v3541, %v3541
    %v3798 = vpack.c.b16 %v3542, %v3542
    %v3799 = vpack.c.b16 %v3543, %v3543
    %v3800 = vpack.c.b16 %v3544, %v3544
    %v3801 = vpack.c.b16 %v3545, %v3545
    %v3802 = vpack.c.b16 %v3546, %v3546
    %v3803 = vpack.c.b16 %v3547, %v3547
    %v3804 = vpack.c.b16 %v3548, %v3548
    %v3805 = vpack.c.b16 %v3549, %v3549
    %v3806 = vpack.c.b16 %v3550, %v3550
    %v3807 = vpack.c.b16 %v3551, %v3551
    %v3808 = vpack.c.b16 %v3552, %v3552
    %v3809 = vpack.c.b16 %v3553, %v3553
    %v3810 = vpack.c.b16 %v3554, %v3554
    %v3811 = vpack.c.b16 %v3555, %v3555
    %v3812 = vpack.c.b16 %v3556, %v3556
    %v3813 = vpack.c.b16 %v3557, %v3557
    %v3814 = vpack.c.b16 %v3558, %v3558
    %v3815 = vpack.c.b16 %v3559, %v3559
    %v3816 = vpack.c.b16 %v3560, %v3560
    %v3817 = vpack.c.b16 %v3561, %v3561
    %v3818 = vpack.c.b16 %v3562, %v3562
    %v3819 = vpack.c.b16 %v3563, %v3563
    %v3820 = vpack.c.b16 %v3564, %v3564
    %v3821 = vpack.c.b16 %v3565, %v3565
    %v3822 = vpack.c.b16 %v3566, %v3566
    %v3823 = vpack.c.b16 %v3567, %v3567
    %v3824 = vpack.c.b16 %v3568, %v3568
    %v3825 = vpack.c.b16 %v3569, %v3569
    %v3826 = vpack.c.b16 %v3570, %v3570
    %v3827 = vpack.c.b16 %v3571, %v3571
    %v3828 = vpack.c.b16 %v3572, %v3572
    %v3829 = vpack.c.b16 %v3573, %v3573
    %v3830 = vpack.c.b16 %v3574, %v3574
    %v3831 = vpack.c.b16 %v3575, %v3575
    %v3832 = vpack.c.b16 %v3576, %v3576
    %v3833 = vpack.c.b16 %v3577, %v3577
    %v3834 = vpack.c.b16 %v3578, %v3578
    %v3835 = vpack.c.b16 %v3579, %v3579
    %v3836 = vpack.c.b16 %v3580, %v3580
    %v3837 = vpack.c.b16 %v3581, %v3581
    %v3838 = vpack.c.b16 %v3582, %v3582
    %v3839 = vpack.c.b16 %v3583, %v3583
    %v3840 = vpack.c.b16 %v3584, %v3584
    %v3841 = vpack.c.b16 %v3585, %v3585
    %v3842 = vpack.c.b16 %v3586, %v3586
    %v3843 = vpack.c.b16 %v3587, %v3587
    %v3844 = vpack.c.b16 %v3588, %v3588
    %v3845 = vpack.c.b16 %v3589, %v3589
    %v3846 = vpack.c.b16 %v3590, %v3590
    %v3847 = vpack.c.b16 %v3591, %v3591
    %v3848 = vpack.c.b16 %v3592, %v3592
    %v3849 = vpack.c.b16 %v3593, %v3593
    %v3850 = vpack.c.b16 %v3594, %v3594
    %v3851 = vpack.c.b16 %v3595, %v3595
    %v3852 = vpack.c.b16 %v3596, %v3596
    %v3853 = vpack.c.b16 %v3597, %v3597
    %v3854 = vpack.c.b16 %v3598, %v3598
    %v3855 = vpack.c.b16 %v3599, %v3599
    %v3856 = vpack.c.b16 %v3600, %v3600
    %v3857 = vpack.c.b16 %v3601, %v3601
    %v3858 = vpack.c.b16 %v3602, %v3602
    %v3859 = vpack.c.b16 %v3603, %v3603
    %v3860 = vpack.c.b16 %v3604, %v3604
    %v3861 = vpack.c.b16 %v3605, %v3605
    %v3862 = vpack.c.b16 %v3606, %v3606
    %v3863 = vpack.c.b16 %v3607, %v3607
    %v3864 = vpack.c.b16 %v3608, %v3608
    %v3865 = vpack.c.b16 %v3609, %v3609
    %v3866 = vpack.c.b16 %v3610, %v3610
    %v3867 = vpack.c.b16 %v3611, %v3611
    %v3868 = vpack.c.b16 %v3612, %v3612
    %v3869 = vpack.c.b16 %v3613, %v3613
    %v3870 = vpack.c.b16 %v3614, %v3614
    %v3871 = vpack.c.b16 %v3615, %v3615
    %v3872 = vpack.c.b16 %v3616, %v3616
    %v3873 = vpack.c.b16 %v3617, %v3617
    %v3874 = vpack.c.b16 %v3618, %v3618
    %v3875 = vpack.c.b16 %v3619, %v3619
    %v3876 = vpack.c.b16 %v3620, %v3620
    %v3877 = vpack.c.b16 %v3621, %v3621
    %v3878 = vpack.c.b16 %v3622, %v3622
    %v3879 = vpack.c.b16 %v3623, %v3623
    %v3880 = vpack.c.b16 %v3624, %v3624
    %v3881 = vpack.c.b16 %v3625, %v3625
    %v3882 = vpack.c.b16 %v3626, %v3626
    %v3883 = vpack.c.b16 %v3627, %v3627
    %v3884 = vpack.c.b16 %v3628, %v3628
    %v3885 = vpack.c.b16 %v3629, %v3629
    %v3886 = vpack.c.b16 %v3630, %v3630
    %v3887 = vpack.c.b16 %v3631, %v3631
    %v3888 = vpack.c.b16 %v3632, %v3632
    %v3889 = vpack.c.b16 %v3633, %v3633
    %v3890 = vpack.c.b16 %v3634, %v3634
    %v3891 = vpack.c.b16 %v3635, %v3635
    %v3892 = vpack.c.b16 %v3636, %v3636
    %v3893 = vpack.c.b16 %v3637, %v3637
    %v3894 = vpack.c.b16 %v3638, %v3638
    %v3895 = vpack.c.b16 %v3639, %v3639
    %v3896 = vpack.c.b16 %v3640, %v3640
    %v3897 = vpack.c.b16 %v3641, %v3641
    %v3898 = vpack.c.b16 %v3642, %v3642
    %v3899 = vpack.c.b16 %v3643, %v3643
    %v3900 = vpack.c.b16 %v3644, %v3644
    %v3901 = vpack.c.b16 %v3645, %v3645
    %v3902 = vpack.c.b16 %v3646, %v3646
    %v3903 = vpack.c.b16 %v3647, %v3647
    %v3904 = vpack.c.b16 %v3648, %v3648
    %v3905 = vpack.c.b16 %v3649, %v3649
    %v3906 = vpack.c.b16 %v3650, %v3650
    %v3907 = vpack.c.b16 %v3651, %v3651
    %v3908 = vpack.c.b16 %v3652, %v3652
    %v3909 = vpack.c.b16 %v3653, %v3653
    %v3910 = vpack.c.b16 %v3654, %v3654
    %v3911 = vpack.c.b16 %v3655, %v3655
    %v3912 = vpack.c.b16 %v3656, %v3656
    %v3913 = vpack.c.b16 %v3657, %v3657
    %v3914 = vpack.c.b16 %v3658, %v3658
    %v3915 = vpack.c.b16 %v3659, %v3659
    %v3916 = vpack.c.b16 %v3660, %v3660
    %v3917 = vpack.c.b16 %v3661, %v3661
    %v3918 = vpack.c.b16 %v3662, %v3662
    %v3919 = vpack.c.b16 %v3663, %v3663
    %v3920 = vpack.c.b16 %v3664, %v3664
    %v3921 = vpack.c.b16 %v3665, %v3665
    %v3922 = vpack.c.b16 %v3666, %v3666
    %v3923 = vpack.c.b16 %v3667, %v3667
    %v3924 = vpack.c.b16 %v3668, %v3668
    %v3925 = vpack.c.b16 %v3669, %v3669
    %v3926 = vpack.c.b16 %v3670, %v3670
    %v3927 = vpack.c.b16 %v3671, %v3671
    %v3928 = vpack.c.b16 %v3672, %v3672
    %v3929 = vpack.c.b16 %v3673, %v3673
    %v3930 = vpack.c.b16 %v3674, %v3674
    %v3931 = vpack.c.b16 %v3675, %v3675
    %v3932 = vpack.c.b16 %v3676, %v3676
    %v3933 = vpack.c.b16 %v3677, %v3677
    %v3934 = vpack.c.b16 %v3678, %v3678
    %v3935 = vpack.c.b16 %v3679, %v3679
    %v3936 = vpack.c.b16 %v3680, %v3680
    %v3937 = vpack.c.b16 %v3681, %v3681
    %v3938 = vpack.c.b16 %v3682, %v3682
    %v3939 = vpack.c.b16 %v3683, %v3683
    %v3940 = vpack.c.b16 %v3684, %v3684
    %v3941 = vpack.c.b16 %v3685, %v3685
    %v3942 = vpack.c.b16 %v3686, %v3686
    %v3943 = vpack.c.b16 %v3687, %v3687
    %v3944 = vpack.c.b16 %v3688, %v3688
    %v3945 = vpack.c.b16 %v3689, %v3689
    %v3946 = vpack.c.b16 %v3690, %v3690
    %v3947 = vpack.c.b16 %v3691, %v3691
    %v3948 = vpack.c.b16 %v3692, %v3692
    %v3949 = vpack.c.b16 %v3693, %v3693
    %v3950 = vpack.c.b16 %v3694, %v3694
    %v3951 = vpack.c.b16 %v3695, %v3695
    %v3952 = vpack.c.b16 %v3696, %v3696
    %v3953 = vpack.c.b16 %v3697, %v3697
    %v3954 = vpack.c.b16 %v3698, %v3698
    %v3955 = vpack.c.b16 %v3699, %v3699
    %v3956 = vpack.c.b16 %v3700, %v3700
    %v3957 = vpack.c.b16 %v3701, %v3701
    %v3958 = vpack.c.b16 %v3702, %v3702
    %v3959 = vpack.c.b16 %v3703, %v3703
    %v3960 = vpack.c.b16 %v3704, %v3704
    %v3961 = vpack.c.b16 %v3705, %v3705
    %v3962 = vpack.c.b16 %v3706, %v3706
    %v3963 = vpack.c.b16 %v3707, %v3707
    %v3964 = vpack.c.b16 %v3708, %v3708
    %v3965 = vpack.c.b16 %v3709, %v3709
    %v3966 = vpack.c.b16 %v3710, %v3710
    %v3967 = vpack.c.b16 %v3711, %v3711
    %v3968 = vpack.c.b16 %v3712, %v3712
    %v3969 = vpack.c.b16 %v3713, %v3713
    %v3970 = vpack.c.b16 %v3714, %v3714
    %v3971 = vpack.c.b16 %v3715, %v3715
    %v3972 = vpack.c.b16 %v3716, %v3716
    %v3973 = vpack.c.b16 %v3717, %v3717
    %v3974 = vpack.c.b16 %v3718, %v3718
    %v3975 = vpack.c.b16 %v3719, %v3719
    %v3976 = vpack.c.b16 %v3720, %v3720
    %v3977 = vpack.c.b16 %v3721, %v3721
    %v3978 = vpack.c.b16 %v3722, %v3722
    %v3979 = vpack.c.b16 %v3723, %v3723
    %vm4236 = vcmask 519168
    %4237 = vst.msk [vmem:[#allocation2] sm:$0xf] %vm4236, %v3724
    %4238 = vst.msk [vmem:[#allocation2 + $0x4] sm:$0xf] %vm4236, %v3725
    %4239 = vst.msk [vmem:[#allocation2 + $0x8] sm:$0xf] %vm4236, %v3726
    %4240 = vst.msk [vmem:[#allocation2 + $0xc] sm:$0xf] %vm4236, %v3727
    %4241 = vst.msk [vmem:[#allocation2 + $0x10] sm:$0xf] %vm4236, %v3728
    %4242 = vst.msk [vmem:[#allocation2 + $0x14] sm:$0xf] %vm4236, %v3729
    %4243 = vst.msk [vmem:[#allocation2 + $0x18] sm:$0xf] %vm4236, %v3730
    %4244 = vst.msk [vmem:[#allocation2 + $0x1c] sm:$0xf] %vm4236, %v3731
    %4245 = vst.msk [vmem:[#allocation2 + $0x20] sm:$0xf] %vm4236, %v3732
    %4246 = vst.msk [vmem:[#allocation2 + $0x24] sm:$0xf] %vm4236, %v3733
    %4247 = vst.msk [vmem:[#allocation2 + $0x28] sm:$0xf] %vm4236, %v3734
    %4248 = vst.msk [vmem:[#allocation2 + $0x2c] sm:$0xf] %vm4236, %v3735
    %4249 = vst.msk [vmem:[#allocation2 + $0x30] sm:$0xf] %vm4236, %v3736
    %4250 = vst.msk [vmem:[#allocation2 + $0x34] sm:$0xf] %vm4236, %v3737
    %4251 = vst.msk [vmem:[#allocation2 + $0x38] sm:$0xf] %vm4236, %v3738
    %4252 = vst.msk [vmem:[#allocation2 + $0x3c] sm:$0xf] %vm4236, %v3739
    %4253 = vst.msk [vmem:[#allocation2 + $0x40] sm:$0xf] %vm4236, %v3740
    %4254 = vst.msk [vmem:[#allocation2 + $0x44] sm:$0xf] %vm4236, %v3741
    %4255 = vst.msk [vmem:[#allocation2 + $0x48] sm:$0xf] %vm4236, %v3742
    %4256 = vst.msk [vmem:[#allocation2 + $0x4c] sm:$0xf] %vm4236, %v3743
    %4257 = vst.msk [vmem:[#allocation2 + $0x50] sm:$0xf] %vm4236, %v3744
    %4258 = vst.msk [vmem:[#allocation2 + $0x54] sm:$0xf] %vm4236, %v3745
    %4259 = vst.msk [vmem:[#allocation2 + $0x58] sm:$0xf] %vm4236, %v3746
    %4260 = vst.msk [vmem:[#allocation2 + $0x5c] sm:$0xf] %vm4236, %v3747
    %4261 = vst.msk [vmem:[#allocation2 + $0x60] sm:$0xf] %vm4236, %v3748
    %4262 = vst.msk [vmem:[#allocation2 + $0x64] sm:$0xf] %vm4236, %v3749
    %4263 = vst.msk [vmem:[#allocation2 + $0x68] sm:$0xf] %vm4236, %v3750
    %4264 = vst.msk [vmem:[#allocation2 + $0x6c] sm:$0xf] %vm4236, %v3751
    %4265 = vst.msk [vmem:[#allocation2 + $0x70] sm:$0xf] %vm4236, %v3752
    %4266 = vst.msk [vmem:[#allocation2 + $0x74] sm:$0xf] %vm4236, %v3753
    %4267 = vst.msk [vmem:[#allocation2 + $0x78] sm:$0xf] %vm4236, %v3754
    %4268 = vst.msk [vmem:[#allocation2 + $0x7c] sm:$0xf] %vm4236, %v3755
    %4269 = vst.msk [vmem:[#allocation2 + $0x80] sm:$0xf] %vm4236, %v3756
    %4270 = vst.msk [vmem:[#allocation2 + $0x84] sm:$0xf] %vm4236, %v3757
    %4271 = vst.msk [vmem:[#allocation2 + $0x88] sm:$0xf] %vm4236, %v3758
    %4272 = vst.msk [vmem:[#allocation2 + $0x8c] sm:$0xf] %vm4236, %v3759
    %4273 = vst.msk [vmem:[#allocation2 + $0x90] sm:$0xf] %vm4236, %v3760
    %4274 = vst.msk [vmem:[#allocation2 + $0x94] sm:$0xf] %vm4236, %v3761
    %4275 = vst.msk [vmem:[#allocation2 + $0x98] sm:$0xf] %vm4236, %v3762
    %4276 = vst.msk [vmem:[#allocation2 + $0x9c] sm:$0xf] %vm4236, %v3763
    %4277 = vst.msk [vmem:[#allocation2 + $0xa0] sm:$0xf] %vm4236, %v3764
    %4278 = vst.msk [vmem:[#allocation2 + $0xa4] sm:$0xf] %vm4236, %v3765
    %4279 = vst.msk [vmem:[#allocation2 + $0xa8] sm:$0xf] %vm4236, %v3766
    %4280 = vst.msk [vmem:[#allocation2 + $0xac] sm:$0xf] %vm4236, %v3767
    %4281 = vst.msk [vmem:[#allocation2 + $0xb0] sm:$0xf] %vm4236, %v3768
    %4282 = vst.msk [vmem:[#allocation2 + $0xb4] sm:$0xf] %vm4236, %v3769
    %4283 = vst.msk [vmem:[#allocation2 + $0xb8] sm:$0xf] %vm4236, %v3770
    %4284 = vst.msk [vmem:[#allocation2 + $0xbc] sm:$0xf] %vm4236, %v3771
    %4285 = vst.msk [vmem:[#allocation2 + $0xc0] sm:$0xf] %vm4236, %v3772
    %4286 = vst.msk [vmem:[#allocation2 + $0xc4] sm:$0xf] %vm4236, %v3773
    %4287 = vst.msk [vmem:[#allocation2 + $0xc8] sm:$0xf] %vm4236, %v3774
    %4288 = vst.msk [vmem:[#allocation2 + $0xcc] sm:$0xf] %vm4236, %v3775
    %4289 = vst.msk [vmem:[#allocation2 + $0xd0] sm:$0xf] %vm4236, %v3776
    %4290 = vst.msk [vmem:[#allocation2 + $0xd4] sm:$0xf] %vm4236, %v3777
    %4291 = vst.msk [vmem:[#allocation2 + $0xd8] sm:$0xf] %vm4236, %v3778
    %4292 = vst.msk [vmem:[#allocation2 + $0xdc] sm:$0xf] %vm4236, %v3779
    %4293 = vst.msk [vmem:[#allocation2 + $0xe0] sm:$0xf] %vm4236, %v3780
    %4294 = vst.msk [vmem:[#allocation2 + $0xe4] sm:$0xf] %vm4236, %v3781
    %4295 = vst.msk [vmem:[#allocation2 + $0xe8] sm:$0xf] %vm4236, %v3782
    %4296 = vst.msk [vmem:[#allocation2 + $0xec] sm:$0xf] %vm4236, %v3783
    %4297 = vst.msk [vmem:[#allocation2 + $0xf0] sm:$0xf] %vm4236, %v3784
    %4298 = vst.msk [vmem:[#allocation2 + $0xf4] sm:$0xf] %vm4236, %v3785
    %4299 = vst.msk [vmem:[#allocation2 + $0xf8] sm:$0xf] %vm4236, %v3786
    %4300 = vst.msk [vmem:[#allocation2 + $0xfc] sm:$0xf] %vm4236, %v3787
    %4301 = vst.msk [vmem:[#allocation2 + $0x100] sm:$0xf] %vm4236, %v3788
    %4302 = vst.msk [vmem:[#allocation2 + $0x104] sm:$0xf] %vm4236, %v3789
    %4303 = vst.msk [vmem:[#allocation2 + $0x108] sm:$0xf] %vm4236, %v3790
    %4304 = vst.msk [vmem:[#allocation2 + $0x10c] sm:$0xf] %vm4236, %v3791
    %4305 = vst.msk [vmem:[#allocation2 + $0x110] sm:$0xf] %vm4236, %v3792
    %4306 = vst.msk [vmem:[#allocation2 + $0x114] sm:$0xf] %vm4236, %v3793
    %4307 = vst.msk [vmem:[#allocation2 + $0x118] sm:$0xf] %vm4236, %v3794
    %4308 = vst.msk [vmem:[#allocation2 + $0x11c] sm:$0xf] %vm4236, %v3795
    %4309 = vst.msk [vmem:[#allocation2 + $0x120] sm:$0xf] %vm4236, %v3796
    %4310 = vst.msk [vmem:[#allocation2 + $0x124] sm:$0xf] %vm4236, %v3797
    %4311 = vst.msk [vmem:[#allocation2 + $0x128] sm:$0xf] %vm4236, %v3798
    %4312 = vst.msk [vmem:[#allocation2 + $0x12c] sm:$0xf] %vm4236, %v3799
    %4313 = vst.msk [vmem:[#allocation2 + $0x130] sm:$0xf] %vm4236, %v3800
    %4314 = vst.msk [vmem:[#allocation2 + $0x134] sm:$0xf] %vm4236, %v3801
    %4315 = vst.msk [vmem:[#allocation2 + $0x138] sm:$0xf] %vm4236, %v3802
    %4316 = vst.msk [vmem:[#allocation2 + $0x13c] sm:$0xf] %vm4236, %v3803
    %4317 = vst.msk [vmem:[#allocation2 + $0x140] sm:$0xf] %vm4236, %v3804
    %4318 = vst.msk [vmem:[#allocation2 + $0x144] sm:$0xf] %vm4236, %v3805
    %4319 = vst.msk [vmem:[#allocation2 + $0x148] sm:$0xf] %vm4236, %v3806
    %4320 = vst.msk [vmem:[#allocation2 + $0x14c] sm:$0xf] %vm4236, %v3807
    %4321 = vst.msk [vmem:[#allocation2 + $0x150] sm:$0xf] %vm4236, %v3808
    %4322 = vst.msk [vmem:[#allocation2 + $0x154] sm:$0xf] %vm4236, %v3809
    %4323 = vst.msk [vmem:[#allocation2 + $0x158] sm:$0xf] %vm4236, %v3810
    %4324 = vst.msk [vmem:[#allocation2 + $0x15c] sm:$0xf] %vm4236, %v3811
    %4325 = vst.msk [vmem:[#allocation2 + $0x160] sm:$0xf] %vm4236, %v3812
    %4326 = vst.msk [vmem:[#allocation2 + $0x164] sm:$0xf] %vm4236, %v3813
    %4327 = vst.msk [vmem:[#allocation2 + $0x168] sm:$0xf] %vm4236, %v3814
    %4328 = vst.msk [vmem:[#allocation2 + $0x16c] sm:$0xf] %vm4236, %v3815
    %4329 = vst.msk [vmem:[#allocation2 + $0x170] sm:$0xf] %vm4236, %v3816
    %4330 = vst.msk [vmem:[#allocation2 + $0x174] sm:$0xf] %vm4236, %v3817
    %4331 = vst.msk [vmem:[#allocation2 + $0x178] sm:$0xf] %vm4236, %v3818
    %4332 = vst.msk [vmem:[#allocation2 + $0x17c] sm:$0xf] %vm4236, %v3819
    %4333 = vst.msk [vmem:[#allocation2 + $0x180] sm:$0xf] %vm4236, %v3820
    %4334 = vst.msk [vmem:[#allocation2 + $0x184] sm:$0xf] %vm4236, %v3821
    %4335 = vst.msk [vmem:[#allocation2 + $0x188] sm:$0xf] %vm4236, %v3822
    %4336 = vst.msk [vmem:[#allocation2 + $0x18c] sm:$0xf] %vm4236, %v3823
    %4337 = vst.msk [vmem:[#allocation2 + $0x190] sm:$0xf] %vm4236, %v3824
    %4338 = vst.msk [vmem:[#allocation2 + $0x194] sm:$0xf] %vm4236, %v3825
    %4339 = vst.msk [vmem:[#allocation2 + $0x198] sm:$0xf] %vm4236, %v3826
    %4340 = vst.msk [vmem:[#allocation2 + $0x19c] sm:$0xf] %vm4236, %v3827
    %4341 = vst.msk [vmem:[#allocation2 + $0x1a0] sm:$0xf] %vm4236, %v3828
    %4342 = vst.msk [vmem:[#allocation2 + $0x1a4] sm:$0xf] %vm4236, %v3829
    %4343 = vst.msk [vmem:[#allocation2 + $0x1a8] sm:$0xf] %vm4236, %v3830
    %4344 = vst.msk [vmem:[#allocation2 + $0x1ac] sm:$0xf] %vm4236, %v3831
    %4345 = vst.msk [vmem:[#allocation2 + $0x1b0] sm:$0xf] %vm4236, %v3832
    %4346 = vst.msk [vmem:[#allocation2 + $0x1b4] sm:$0xf] %vm4236, %v3833
    %4347 = vst.msk [vmem:[#allocation2 + $0x1b8] sm:$0xf] %vm4236, %v3834
    %4348 = vst.msk [vmem:[#allocation2 + $0x1bc] sm:$0xf] %vm4236, %v3835
    %4349 = vst.msk [vmem:[#allocation2 + $0x1c0] sm:$0xf] %vm4236, %v3836
    %4350 = vst.msk [vmem:[#allocation2 + $0x1c4] sm:$0xf] %vm4236, %v3837
    %4351 = vst.msk [vmem:[#allocation2 + $0x1c8] sm:$0xf] %vm4236, %v3838
    %4352 = vst.msk [vmem:[#allocation2 + $0x1cc] sm:$0xf] %vm4236, %v3839
    %4353 = vst.msk [vmem:[#allocation2 + $0x1d0] sm:$0xf] %vm4236, %v3840
    %4354 = vst.msk [vmem:[#allocation2 + $0x1d4] sm:$0xf] %vm4236, %v3841
    %4355 = vst.msk [vmem:[#allocation2 + $0x1d8] sm:$0xf] %vm4236, %v3842
    %4356 = vst.msk [vmem:[#allocation2 + $0x1dc] sm:$0xf] %vm4236, %v3843
    %4357 = vst.msk [vmem:[#allocation2 + $0x1e0] sm:$0xf] %vm4236, %v3844
    %4358 = vst.msk [vmem:[#allocation2 + $0x1e4] sm:$0xf] %vm4236, %v3845
    %4359 = vst.msk [vmem:[#allocation2 + $0x1e8] sm:$0xf] %vm4236, %v3846
    %4360 = vst.msk [vmem:[#allocation2 + $0x1ec] sm:$0xf] %vm4236, %v3847
    %4361 = vst.msk [vmem:[#allocation2 + $0x1f0] sm:$0xf] %vm4236, %v3848
    %4362 = vst.msk [vmem:[#allocation2 + $0x1f4] sm:$0xf] %vm4236, %v3849
    %4363 = vst.msk [vmem:[#allocation2 + $0x1f8] sm:$0xf] %vm4236, %v3850
    %4364 = vst.msk [vmem:[#allocation2 + $0x1fc] sm:$0xf] %vm4236, %v3851
    %4365 = vst.msk [vmem:[#allocation2 + $0x200] sm:$0xf] %vm4236, %v3852
    %4366 = vst.msk [vmem:[#allocation2 + $0x204] sm:$0xf] %vm4236, %v3853
    %4367 = vst.msk [vmem:[#allocation2 + $0x208] sm:$0xf] %vm4236, %v3854
    %4368 = vst.msk [vmem:[#allocation2 + $0x20c] sm:$0xf] %vm4236, %v3855
    %4369 = vst.msk [vmem:[#allocation2 + $0x210] sm:$0xf] %vm4236, %v3856
    %4370 = vst.msk [vmem:[#allocation2 + $0x214] sm:$0xf] %vm4236, %v3857
    %4371 = vst.msk [vmem:[#allocation2 + $0x218] sm:$0xf] %vm4236, %v3858
    %4372 = vst.msk [vmem:[#allocation2 + $0x21c] sm:$0xf] %vm4236, %v3859
    %4373 = vst.msk [vmem:[#allocation2 + $0x220] sm:$0xf] %vm4236, %v3860
    %4374 = vst.msk [vmem:[#allocation2 + $0x224] sm:$0xf] %vm4236, %v3861
    %4375 = vst.msk [vmem:[#allocation2 + $0x228] sm:$0xf] %vm4236, %v3862
    %4376 = vst.msk [vmem:[#allocation2 + $0x22c] sm:$0xf] %vm4236, %v3863
    %4377 = vst.msk [vmem:[#allocation2 + $0x230] sm:$0xf] %vm4236, %v3864
    %4378 = vst.msk [vmem:[#allocation2 + $0x234] sm:$0xf] %vm4236, %v3865
    %4379 = vst.msk [vmem:[#allocation2 + $0x238] sm:$0xf] %vm4236, %v3866
    %4380 = vst.msk [vmem:[#allocation2 + $0x23c] sm:$0xf] %vm4236, %v3867
    %4381 = vst.msk [vmem:[#allocation2 + $0x240] sm:$0xf] %vm4236, %v3868
    %4382 = vst.msk [vmem:[#allocation2 + $0x244] sm:$0xf] %vm4236, %v3869
    %4383 = vst.msk [vmem:[#allocation2 + $0x248] sm:$0xf] %vm4236, %v3870
    %4384 = vst.msk [vmem:[#allocation2 + $0x24c] sm:$0xf] %vm4236, %v3871
    %4385 = vst.msk [vmem:[#allocation2 + $0x250] sm:$0xf] %vm4236, %v3872
    %4386 = vst.msk [vmem:[#allocation2 + $0x254] sm:$0xf] %vm4236, %v3873
    %4387 = vst.msk [vmem:[#allocation2 + $0x258] sm:$0xf] %vm4236, %v3874
    %4388 = vst.msk [vmem:[#allocation2 + $0x25c] sm:$0xf] %vm4236, %v3875
    %4389 = vst.msk [vmem:[#allocation2 + $0x260] sm:$0xf] %vm4236, %v3876
    %4390 = vst.msk [vmem:[#allocation2 + $0x264] sm:$0xf] %vm4236, %v3877
    %4391 = vst.msk [vmem:[#allocation2 + $0x268] sm:$0xf] %vm4236, %v3878
    %4392 = vst.msk [vmem:[#allocation2 + $0x26c] sm:$0xf] %vm4236, %v3879
    %4393 = vst.msk [vmem:[#allocation2 + $0x270] sm:$0xf] %vm4236, %v3880
    %4394 = vst.msk [vmem:[#allocation2 + $0x274] sm:$0xf] %vm4236, %v3881
    %4395 = vst.msk [vmem:[#allocation2 + $0x278] sm:$0xf] %vm4236, %v3882
    %4396 = vst.msk [vmem:[#allocation2 + $0x27c] sm:$0xf] %vm4236, %v3883
    %4397 = vst.msk [vmem:[#allocation2 + $0x280] sm:$0xf] %vm4236, %v3884
    %4398 = vst.msk [vmem:[#allocation2 + $0x284] sm:$0xf] %vm4236, %v3885
    %4399 = vst.msk [vmem:[#allocation2 + $0x288] sm:$0xf] %vm4236, %v3886
    %4400 = vst.msk [vmem:[#allocation2 + $0x28c] sm:$0xf] %vm4236, %v3887
    %4401 = vst.msk [vmem:[#allocation2 + $0x290] sm:$0xf] %vm4236, %v3888
    %4402 = vst.msk [vmem:[#allocation2 + $0x294] sm:$0xf] %vm4236, %v3889
    %4403 = vst.msk [vmem:[#allocation2 + $0x298] sm:$0xf] %vm4236, %v3890
    %4404 = vst.msk [vmem:[#allocation2 + $0x29c] sm:$0xf] %vm4236, %v3891
    %4405 = vst.msk [vmem:[#allocation2 + $0x2a0] sm:$0xf] %vm4236, %v3892
    %4406 = vst.msk [vmem:[#allocation2 + $0x2a4] sm:$0xf] %vm4236, %v3893
    %4407 = vst.msk [vmem:[#allocation2 + $0x2a8] sm:$0xf] %vm4236, %v3894
    %4408 = vst.msk [vmem:[#allocation2 + $0x2ac] sm:$0xf] %vm4236, %v3895
    %4409 = vst.msk [vmem:[#allocation2 + $0x2b0] sm:$0xf] %vm4236, %v3896
    %4410 = vst.msk [vmem:[#allocation2 + $0x2b4] sm:$0xf] %vm4236, %v3897
    %4411 = vst.msk [vmem:[#allocation2 + $0x2b8] sm:$0xf] %vm4236, %v3898
    %4412 = vst.msk [vmem:[#allocation2 + $0x2bc] sm:$0xf] %vm4236, %v3899
    %4413 = vst.msk [vmem:[#allocation2 + $0x2c0] sm:$0xf] %vm4236, %v3900
    %4414 = vst.msk [vmem:[#allocation2 + $0x2c4] sm:$0xf] %vm4236, %v3901
    %4415 = vst.msk [vmem:[#allocation2 + $0x2c8] sm:$0xf] %vm4236, %v3902
    %4416 = vst.msk [vmem:[#allocation2 + $0x2cc] sm:$0xf] %vm4236, %v3903
    %4417 = vst.msk [vmem:[#allocation2 + $0x2d0] sm:$0xf] %vm4236, %v3904
    %4418 = vst.msk [vmem:[#allocation2 + $0x2d4] sm:$0xf] %vm4236, %v3905
    %4419 = vst.msk [vmem:[#allocation2 + $0x2d8] sm:$0xf] %vm4236, %v3906
    %4420 = vst.msk [vmem:[#allocation2 + $0x2dc] sm:$0xf] %vm4236, %v3907
    %4421 = vst.msk [vmem:[#allocation2 + $0x2e0] sm:$0xf] %vm4236, %v3908
    %4422 = vst.msk [vmem:[#allocation2 + $0x2e4] sm:$0xf] %vm4236, %v3909
    %4423 = vst.msk [vmem:[#allocation2 + $0x2e8] sm:$0xf] %vm4236, %v3910
    %4424 = vst.msk [vmem:[#allocation2 + $0x2ec] sm:$0xf] %vm4236, %v3911
    %4425 = vst.msk [vmem:[#allocation2 + $0x2f0] sm:$0xf] %vm4236, %v3912
    %4426 = vst.msk [vmem:[#allocation2 + $0x2f4] sm:$0xf] %vm4236, %v3913
    %4427 = vst.msk [vmem:[#allocation2 + $0x2f8] sm:$0xf] %vm4236, %v3914
    %4428 = vst.msk [vmem:[#allocation2 + $0x2fc] sm:$0xf] %vm4236, %v3915
    %4429 = vst.msk [vmem:[#allocation2 + $0x300] sm:$0xf] %vm4236, %v3916
    %4430 = vst.msk [vmem:[#allocation2 + $0x304] sm:$0xf] %vm4236, %v3917
    %4431 = vst.msk [vmem:[#allocation2 + $0x308] sm:$0xf] %vm4236, %v3918
    %4432 = vst.msk [vmem:[#allocation2 + $0x30c] sm:$0xf] %vm4236, %v3919
    %4433 = vst.msk [vmem:[#allocation2 + $0x310] sm:$0xf] %vm4236, %v3920
    %4434 = vst.msk [vmem:[#allocation2 + $0x314] sm:$0xf] %vm4236, %v3921
    %4435 = vst.msk [vmem:[#allocation2 + $0x318] sm:$0xf] %vm4236, %v3922
    %4436 = vst.msk [vmem:[#allocation2 + $0x31c] sm:$0xf] %vm4236, %v3923
    %4437 = vst.msk [vmem:[#allocation2 + $0x320] sm:$0xf] %vm4236, %v3924
    %4438 = vst.msk [vmem:[#allocation2 + $0x324] sm:$0xf] %vm4236, %v3925
    %4439 = vst.msk [vmem:[#allocation2 + $0x328] sm:$0xf] %vm4236, %v3926
    %4440 = vst.msk [vmem:[#allocation2 + $0x32c] sm:$0xf] %vm4236, %v3927
    %4441 = vst.msk [vmem:[#allocation2 + $0x330] sm:$0xf] %vm4236, %v3928
    %4442 = vst.msk [vmem:[#allocation2 + $0x334] sm:$0xf] %vm4236, %v3929
    %4443 = vst.msk [vmem:[#allocation2 + $0x338] sm:$0xf] %vm4236, %v3930
    %4444 = vst.msk [vmem:[#allocation2 + $0x33c] sm:$0xf] %vm4236, %v3931
    %4445 = vst.msk [vmem:[#allocation2 + $0x340] sm:$0xf] %vm4236, %v3932
    %4446 = vst.msk [vmem:[#allocation2 + $0x344] sm:$0xf] %vm4236, %v3933
    %4447 = vst.msk [vmem:[#allocation2 + $0x348] sm:$0xf] %vm4236, %v3934
    %4448 = vst.msk [vmem:[#allocation2 + $0x34c] sm:$0xf] %vm4236, %v3935
    %4449 = vst.msk [vmem:[#allocation2 + $0x350] sm:$0xf] %vm4236, %v3936
    %4450 = vst.msk [vmem:[#allocation2 + $0x354] sm:$0xf] %vm4236, %v3937
    %4451 = vst.msk [vmem:[#allocation2 + $0x358] sm:$0xf] %vm4236, %v3938
    %4452 = vst.msk [vmem:[#allocation2 + $0x35c] sm:$0xf] %vm4236, %v3939
    %4453 = vst.msk [vmem:[#allocation2 + $0x360] sm:$0xf] %vm4236, %v3940
    %4454 = vst.msk [vmem:[#allocation2 + $0x364] sm:$0xf] %vm4236, %v3941
    %4455 = vst.msk [vmem:[#allocation2 + $0x368] sm:$0xf] %vm4236, %v3942
    %4456 = vst.msk [vmem:[#allocation2 + $0x36c] sm:$0xf] %vm4236, %v3943
    %4457 = vst.msk [vmem:[#allocation2 + $0x370] sm:$0xf] %vm4236, %v3944
    %4458 = vst.msk [vmem:[#allocation2 + $0x374] sm:$0xf] %vm4236, %v3945
    %4459 = vst.msk [vmem:[#allocation2 + $0x378] sm:$0xf] %vm4236, %v3946
    %4460 = vst.msk [vmem:[#allocation2 + $0x37c] sm:$0xf] %vm4236, %v3947
    %4461 = vst.msk [vmem:[#allocation2 + $0x380] sm:$0xf] %vm4236, %v3948
    %4462 = vst.msk [vmem:[#allocation2 + $0x384] sm:$0xf] %vm4236, %v3949
    %4463 = vst.msk [vmem:[#allocation2 + $0x388] sm:$0xf] %vm4236, %v3950
    %4464 = vst.msk [vmem:[#allocation2 + $0x38c] sm:$0xf] %vm4236, %v3951
    %4465 = vst.msk [vmem:[#allocation2 + $0x390] sm:$0xf] %vm4236, %v3952
    %4466 = vst.msk [vmem:[#allocation2 + $0x394] sm:$0xf] %vm4236, %v3953
    %4467 = vst.msk [vmem:[#allocation2 + $0x398] sm:$0xf] %vm4236, %v3954
    %4468 = vst.msk [vmem:[#allocation2 + $0x39c] sm:$0xf] %vm4236, %v3955
    %4469 = vst.msk [vmem:[#allocation2 + $0x3a0] sm:$0xf] %vm4236, %v3956
    %4470 = vst.msk [vmem:[#allocation2 + $0x3a4] sm:$0xf] %vm4236, %v3957
    %4471 = vst.msk [vmem:[#allocation2 + $0x3a8] sm:$0xf] %vm4236, %v3958
    %4472 = vst.msk [vmem:[#allocation2 + $0x3ac] sm:$0xf] %vm4236, %v3959
    %4473 = vst.msk [vmem:[#allocation2 + $0x3b0] sm:$0xf] %vm4236, %v3960
    %4474 = vst.msk [vmem:[#allocation2 + $0x3b4] sm:$0xf] %vm4236, %v3961
    %4475 = vst.msk [vmem:[#allocation2 + $0x3b8] sm:$0xf] %vm4236, %v3962
    %4476 = vst.msk [vmem:[#allocation2 + $0x3bc] sm:$0xf] %vm4236, %v3963
    %4477 = vst.msk [vmem:[#allocation2 + $0x3c0] sm:$0xf] %vm4236, %v3964
    %4478 = vst.msk [vmem:[#allocation2 + $0x3c4] sm:$0xf] %vm4236, %v3965
    %4479 = vst.msk [vmem:[#allocation2 + $0x3c8] sm:$0xf] %vm4236, %v3966
    %4480 = vst.msk [vmem:[#allocation2 + $0x3cc] sm:$0xf] %vm4236, %v3967
    %4481 = vst.msk [vmem:[#allocation2 + $0x3d0] sm:$0xf] %vm4236, %v3968
    %4482 = vst.msk [vmem:[#allocation2 + $0x3d4] sm:$0xf] %vm4236, %v3969
    %4483 = vst.msk [vmem:[#allocation2 + $0x3d8] sm:$0xf] %vm4236, %v3970
    %4484 = vst.msk [vmem:[#allocation2 + $0x3dc] sm:$0xf] %vm4236, %v3971
    %4485 = vst.msk [vmem:[#allocation2 + $0x3e0] sm:$0xf] %vm4236, %v3972
    %4486 = vst.msk [vmem:[#allocation2 + $0x3e4] sm:$0xf] %vm4236, %v3973
    %4487 = vst.msk [vmem:[#allocation2 + $0x3e8] sm:$0xf] %vm4236, %v3974
    %4488 = vst.msk [vmem:[#allocation2 + $0x3ec] sm:$0xf] %vm4236, %v3975
    %4489 = vst.msk [vmem:[#allocation2 + $0x3f0] sm:$0xf] %vm4236, %v3976
    %4490 = vst.msk [vmem:[#allocation2 + $0x3f4] sm:$0xf] %vm4236, %v3977
    %4491 = vst.msk [vmem:[#allocation2 + $0x3f8] sm:$0xf] %vm4236, %v3978
    %4492 = vst.msk [vmem:[#allocation2 + $0x3fc] sm:$0xf] %vm4236, %v3979
    // Predicated region
    $region14: #{stem_conv7x7_s2_bn_relu.1} parent=1 // pred_check
      _
    $region15: #{stem_conv7x7_s2_bn_relu.1} parent=1 // pred_check_branch
      %4494 = sbr.rel (0) target = $region17
    $region16: #{stem_conv7x7_s2_bn_relu.1} parent=1 // pred_region
      %s4496 = ssub.s32 16384, 16384
      %4497 = vsyncadd [#allocation3], %s4496
      %s4498 = sshll.u32 [#allocation2], 4
      %s4499 = int_to_ptr.vmem [resolvable:$true] %s4498
      %4504 = dma.vmem_to_hbm [thread:$0]  %s4499, 16384, %s3, [#allocation3], 64, 64, 4
    $region17: #{stem_conv7x7_s2_bn_relu.1} parent=1 // pred_fallthru
      _
    // Predicated region
    $region18: #{stem_conv7x7_s2_bn_relu.1} parent=1 // pred_check
      _
    $region19: #{stem_conv7x7_s2_bn_relu.1} parent=1 // pred_check_branch
      %4506 = sbr.rel (0) target = $region21
    $region20: #{stem_conv7x7_s2_bn_relu.1} parent=1 // pred_region
      %4507 = dma.done [#allocation3], 16384
    $region21: #{stem_conv7x7_s2_bn_relu.1} parent=1 // pred_fallthru
      _
    %4508 = vsyncpa [#allocation3], 1

</llo_original>
